<compile_context>
chip_gen: v7x
topology: tpu7x:2x2x1
jax: 0.10.0
libtpu: 0.0.40
codegen_flags: <defaults>
</compile_context>

<pallas_src>
import jax
import jax.numpy as jnp
from jax import lax
from jax.experimental import pallas as pl
from jax.experimental.pallas import tpu as pltpu

D_MODEL = 768
HID = 64
NUM_CLASSES = 2
LN_EPS = 1e-5


# ----------------------------------------------------------------------------
# Pallas kernel factory: fused bidirectional 2-layer LSTM + mean pool + LN + FC
# ----------------------------------------------------------------------------
def _make_kernel(S, BT, TCH):
    H = HID
    G = 4 * H                 # 256 gate columns per direction, (i,f,o,g) order
    B2 = 2 * BT               # recurrence rows: [0,BT)=forward, [BT,2BT)=reverse
    n_chunks = S // TCH
    rows = TCH * BT

    def kernel(x_ref,                      # (S, BT, 768) bf16, time-major tile
               wi0_ref, wh0_ref, b0_ref,   # layer 0: (768,8H) bf16,(H,8H) bf16,(1,8H) f32
               wi1_ref, wh1_ref, b1_ref,   # layer 1: (2H,8H) bf16,(H,8H) bf16,(1,8H) f32
               ln_g_ref, ln_b_ref,         # LayerNorm(128): (1,2H) f32 each
               wc_ref, bc_ref,             # classifier: (2H,C) f32, (1,C) f32
               out_ref,                    # (BT, C) f32
               gin_ref,                    # scratch (S, BT, 2G) f32: gate inputs (shared L0/L1)
               l0_ref):                    # scratch (S, 2BT, H) f32: layer-0 outputs
        # ---- Phase 1: batched layer-0 input projection (off the recurrence).
        # gin[t, :, 0:G]   = x[t] @ Wih0_fwd + b0_fwd
        # gin[t, :, G:2G]  = x[t] @ Wih0_rev + b0_rev     (natural-time layout)
        wi0 = wi0_ref[...]
        b0 = b0_ref[...]                                   # hoisted invariant load

        def proj0(cidx, carry):
            t0 = pl.multiple_of(cidx * TCH, TCH)
            xb = x_ref[pl.ds(t0, TCH)].reshape(rows, D_MODEL)
            p = jnp.dot(xb, wi0, preferred_element_type=jnp.float32) + b0
            gin_ref[pl.ds(t0, TCH)] = p.reshape(TCH, BT, 2 * G)
            return carry
        lax.fori_loop(0, n_chunks, proj0, 0, unroll=True)

        # ---- Fused bidirectional recurrence, directions packed along sublanes.
        # Step i: forward processes time i, reverse processes time j = S-1-i.
        def run_bilstm(wh_ref, store_l0):
            wh = wh_ref[...]                               # (H, 2G) bf16
            z = jnp.zeros((B2, H), jnp.float32)

            def step(i, carry):
                h, c, acc = carry
                hh = jnp.dot(h.astype(jnp.bfloat16), wh,
                             preferred_element_type=jnp.float32)   # (2BT, 2G), 1 MXU issue
                j = S - 1 - i
                gates = jnp.concatenate(
                    [gin_ref[i, :, 0:G] + hh[0:BT, 0:G],
                     gin_ref[j, :, G:2 * G] + hh[BT:B2, G:2 * G]], axis=0)  # (2BT, G)
                # TODO(synk): on v6e/v7x cast `gates` to bf16 before the
                # nonlinearities (2x EUP throughput); kept f32 to preserve the
                # fp32 gate math of the PyTorch module (and the test tolerance).
                s = jax.nn.sigmoid(gates[:, 0:3 * H])      # contiguous i|f|o
                g = jnp.tanh(gates[:, 3 * H:4 * H])
                c = s[:, H:2 * H] * c + s[:, 0:H] * g
                h = s[:, 2 * H:3 * H] * jnp.tanh(c)
                if store_l0:
                    # Reverse rows stored at the time-reversed index so proj1
                    # can read l0 in natural time order (batched matmuls).
                    l0_ref[i, 0:BT, :] = h[0:BT, :]
                    l0_ref[j, BT:B2, :] = h[BT:B2, :]
                return (h, c, acc + h)

            _, _, acc = lax.fori_loop(0, S, step, (z, z, z), unroll=min(S, 8))
            return acc

        # ---- Phase 2: layer-0 recurrence (writes l0; its pooling acc unused).
        run_bilstm(wh0_ref, store_l0=True)

        # ---- Phase 3: batched layer-1 input projection into the SAME gin
        # scratch (layer-0 gate inputs are dead after Phase 2).
        wi1_f = wi1_ref[0:H, :]            # rows multiplying h0_forward features
        wi1_r = wi1_ref[H:2 * H, :]        # rows multiplying h0_reverse features
        b1 = b1_ref[...]

        def proj1(cidx, carry):
            t0 = pl.multiple_of(cidx * TCH, TCH)
            hf = l0_ref[pl.ds(t0, TCH), 0:BT, :].reshape(rows, H).astype(jnp.bfloat16)
            hr = l0_ref[pl.ds(t0, TCH), BT:B2, :].reshape(rows, H).astype(jnp.bfloat16)
            q = (jnp.dot(hf, wi1_f, preferred_element_type=jnp.float32)
                 + jnp.dot(hr, wi1_r, preferred_element_type=jnp.float32)
                 + b1)                                     # (rows, 2G)
            gin_ref[pl.ds(t0, TCH)] = q.reshape(TCH, BT, 2 * G)
            return carry
        lax.fori_loop(0, n_chunks, proj1, 0, unroll=True)

        # ---- Phase 4: layer-1 recurrence + running sum for mean pooling.
        acc = run_bilstm(wh1_ref, store_l0=False)          # (2BT, H)
        pooled = jnp.concatenate([acc[0:BT, :], acc[BT:B2, :]], axis=1) * (1.0 / S)

        # ---- Phase 5: LayerNorm(128) -> Dropout(identity, eval) -> Linear(128, C).
        mu = jnp.mean(pooled, axis=-1, keepdims=True)
        var = jnp.mean(jnp.square(pooled - mu), axis=-1, keepdims=True)
        normed = (pooled - mu) * lax.rsqrt(var + LN_EPS)
        normed = normed * ln_g_ref[...] + ln_b_ref[...]
        out_ref[...] = (jnp.dot(normed, wc_ref[...],
                                preferred_element_type=jnp.float32) + bc_ref[...])

    return kernel


# ----------------------------------------------------------------------------
# Wrapper
# ----------------------------------------------------------------------------
def _pick_bt(B):
    """Batch-tile rows: multiple of 8, >=2 tiles when B allows (v7x megacore)."""
    if B <= 8:
        return 8
    bt = ((B // 2) + 7) // 8 * 8
    return int(max(8, min(64, bt)))


def _pick_chunk(S, BT):
    """Time-chunk for batched input projections: ~512 matmul rows, divides S."""
    tch = max(1, min(S, 512 // BT))
    while S % tch:
        tch -= 1
    return tch


def _vmem_limit_bytes(S, BT, TCH):
    x_blk = S * BT * D_MODEL * 2                                   # bf16 tile
    gin = S * BT * 8 * HID * 4
    l0 = S * BT * 2 * HID * 4
    w = (D_MODEL * 8 * HID + HID * 8 * HID
         + 2 * HID * 8 * HID + HID * 8 * HID) * 2                  # bf16 weights
    tmp = TCH * BT * (D_MODEL * 2 + 8 * HID * 4) * 2               # proj temporaries
    need = 2 * x_blk + gin + l0 + 2 * w + tmp + (4 << 20)
    return int(min(max(need, 32 << 20), 64 << 20))


def bart_lstm_classifier_head(sequence, p):
    """sequence: (B, S, 768) BART last_hidden_state stand-in. Returns (B, C)."""
    B, S, d = sequence.shape
    assert d == D_MODEL
    BT = _pick_bt(B)
    Bp = pl.cdiv(B, BT) * BT
    TCH = _pick_chunk(S, BT)

    x = jnp.transpose(sequence, (1, 0, 2))                 # time-major (S, B, 768)
    if Bp != B:
        x = jnp.pad(x, ((0, 0), (0, Bp - B), (0, 0)))
    x = x.astype(jnp.bfloat16)

    # TODO(synk): for realistic BART shapes (S >= 512, large B) either keep x in
    # HBM (memory_space=pl.ANY) and double-buffer time-chunks with
    # pltpu.make_async_copy, or pre-compute the layer-0 input projection in the
    # wrapper as a plain XLA matmul and feed (S, B, 512) bf16 gate inputs
    # (removes whole-x VMEM residency and reduces HBM traffic).

    def rep(shape):
        return pl.BlockSpec(shape, lambda b, _n=len(shape): (0,) * _n)

    in_specs = [
        pl.BlockSpec((S, BT, D_MODEL), lambda b: (0, b, 0)),               # x (batch-tiled)
        rep((D_MODEL, 8 * HID)), rep((HID, 8 * HID)), rep((1, 8 * HID)),   # layer 0
        rep((2 * HID, 8 * HID)), rep((HID, 8 * HID)), rep((1, 8 * HID)),   # layer 1
        rep((1, 2 * HID)), rep((1, 2 * HID)),                              # LayerNorm
        rep((2 * HID, NUM_CLASSES)), rep((1, NUM_CLASSES)),                # classifier
    ]

    out = pl.pallas_call(
        _make_kernel(S, BT, TCH),
        out_shape=jax.ShapeDtypeStruct((Bp, NUM_CLASSES), jnp.float32),
        grid=(Bp // BT,),
        in_specs=in_specs,
        out_specs=pl.BlockSpec((BT, NUM_CLASSES), lambda b: (b, 0)),
        scratch_shapes=[
            pltpu.VMEM((S, BT, 8 * HID), jnp.float32),     # gate inputs (shared L0/L1)
            pltpu.VMEM((S, 2 * BT, HID), jnp.float32),     # layer-0 outputs
        ],
        compiler_params=pltpu.CompilerParams(
            dimension_semantics=("parallel",),
            vmem_limit_bytes=_vmem_limit_bytes(S, BT, TCH)),
    )(x, p["wi0"], p["wh0"], p["b0"], p["wi1"], p["wh1"], p["b1"],
      p["ln_g"], p["ln_b"], p["wc"], p["bc"])
    return out[:B]


# ----------------------------------------------------------------------------
# Parameters: raw (PyTorch layout) + packed (kernel layout)
# ----------------------------------------------------------------------------
def init_params(key):
    ks = list(jax.random.split(key, 24))
    it = iter(ks)

    def uni(shape, bound):
        return jax.random.uniform(next(it), shape, jnp.float32, -bound, bound)

    raw = {}
    bound = 1.0 / (HID ** 0.5)
    in_dims = {"l0": D_MODEL, "l1": 2 * HID}
    for layer, in_dim in in_dims.items():
        for d in ("f", "r"):
            raw[f"{layer}_{d}"] = {
                "wih": uni((4 * HID, in_dim), bound),   # PyTorch (i,f,g,o) row blocks
                "whh": uni((4 * HID, HID), bound),
                "bih": uni((4 * HID,), bound),
                "bhh": uni((4 * HID,), bound),
            }
    raw["ln_g"] = jnp.ones((2 * HID,), jnp.float32)
    raw["ln_b"] = jnp.zeros((2 * HID,), jnp.float32)
    cb = 1.0 / ((2 * HID) ** 0.5)
    raw["wc"] = uni((NUM_CLASSES, 2 * HID), cb)
    raw["bc"] = uni((NUM_CLASSES,), cb)
    return raw


def _reorder_gates(w):
    """Reorder gate blocks along axis 0: (i, f, g, o) -> (i, f, o, g)."""
    return jnp.concatenate(
        [w[0:HID], w[HID:2 * HID], w[3 * HID:4 * HID], w[2 * HID:3 * HID]], axis=0)


def prepare_params(raw):
    packed = {}
    for layer in ("l0", "l1"):
        wi, wh, bb = [], [], []
        for d in ("f", "r"):
            q = raw[f"{layer}_{d}"]
            wi.append(jnp.transpose(_reorder_gates(q["wih"])))        # (in, 4H)
            wh.append(jnp.transpose(_reorder_gates(q["whh"])))        # (H, 4H)
            bb.append(_reorder_gates(q["bih"] + q["bhh"]))            # (4H,)
        idx = layer[1]
        packed[f"wi{idx}"] = jnp.concatenate(wi, axis=1).astype(jnp.bfloat16)  # (in, 8H)
        packed[f"wh{idx}"] = jnp.concatenate(wh, axis=1).astype(jnp.bfloat16)  # (H, 8H)
        packed[f"b{idx}"] = jnp.concatenate(bb, axis=0).reshape(1, 8 * HID).astype(jnp.float32)
    packed["ln_g"] = raw["ln_g"].reshape(1, 2 * HID)
    packed["ln_b"] = raw["ln_b"].reshape(1, 2 * HID)
    packed["wc"] = jnp.transpose(raw["wc"]).astype(jnp.float32)       # (2H, C)
    packed["bc"] = raw["bc"].reshape(1, NUM_CLASSES)
    return packed


# ----------------------------------------------------------------------------
# Pure-JAX reference (mirrors the kernel's bf16 matmul operands, f32 state)
# ----------------------------------------------------------------------------
def _lstm_dir_ref(xs_bf16, q, reverse):
    S, B, _ = xs_bf16.shape
    wih_t = jnp.transpose(q["wih"]).astype(jnp.bfloat16)
    whh_t = jnp.transpose(q["whh"]).astype(jnp.bfloat16)
    b = (q["bih"] + q["bhh"]).astype(jnp.float32)[None, :]
    h = jnp.zeros((B, HID), jnp.float32)
    c = jnp.zeros((B, HID), jnp.float32)
    outs = [None] * S
    order = range(S - 1, -1, -1) if reverse else range(S)
    for t in order:
        gates = (jnp.dot(xs_bf16[t], wih_t, preferred_element_type=jnp.float32)
                 + jnp.dot(h.astype(jnp.bfloat16), whh_t, preferred_element_type=jnp.float32)
                 + b)
        i = jax.nn.sigmoid(gates[:, 0:HID])
        f = jax.nn.sigmoid(gates[:, HID:2 * HID])
        g = jnp.tanh(gates[:, 2 * HID:3 * HID])
        o = jax.nn.sigmoid(gates[:, 3 * HID:4 * HID])
        c = f * c + i * g
        h = o * jnp.tanh(c)
        outs[t] = h
    return jnp.stack(outs, 0)


def reference_head(sequence, raw):
    xs = jnp.transpose(sequence, (1, 0, 2)).astype(jnp.bfloat16)
    l0 = jnp.concatenate([_lstm_dir_ref(xs, raw["l0_f"], False),
                          _lstm_dir_ref(xs, raw["l0_r"], True)], axis=-1)
    l0b = l0.astype(jnp.bfloat16)
    l1 = jnp.concatenate([_lstm_dir_ref(l0b, raw["l1_f"], False),
                          _lstm_dir_ref(l0b, raw["l1_r"], True)], axis=-1)
    pooled = jnp.mean(l1, axis=0)
    mu = jnp.mean(pooled, axis=-1, keepdims=True)
    var = jnp.mean((pooled - mu) ** 2, axis=-1, keepdims=True)
    normed = (pooled - mu) / jnp.sqrt(var + LN_EPS)
    normed = normed * raw["ln_g"][None, :] + raw["ln_b"][None, :]
    return normed @ jnp.transpose(raw["wc"]) + raw["bc"][None, :]


# ----------------------------------------------------------------------------
if __name__ == "__main__":
    key = jax.random.PRNGKey(0)
    B, S, VOCAB = 2, 8, 1000
    k_emb, k_pos, k_ids, k_param = jax.random.split(key, 4)

    input_ids = jax.random.randint(k_ids, (B, S), 0, VOCAB)
    attention_mask = jnp.ones((B, S), jnp.int32)

    # TODO(synk): pretrained facebook/bart-base encoder-decoder is not
    # reproduced; this deterministic token+position embedding stands in for
    # outputs.last_hidden_state (attention_mask unused by the stand-in, and the
    # module's mean-pool also ignores it).
    emb_table = 0.02 * jax.random.normal(k_emb, (VOCAB, D_MODEL), jnp.float32)
    pos_table = 0.02 * jax.random.normal(k_pos, (S, D_MODEL), jnp.float32)
    sequence = emb_table[input_ids] + pos_table[None, :, :]        # (B, S, 768)

    raw_params = init_params(k_param)
    packed_params = prepare_params(raw_params)

    logits = bart_lstm_classifier_head(sequence, packed_params)
    jax.block_until_ready(logits)

    ref = reference_head(sequence, raw_params)
    assert logits.shape == (B, NUM_CLASSES)
    max_err = jnp.max(jnp.abs(logits - ref))
    assert jnp.allclose(logits, ref, atol=5e-3, rtol=5e-3), f"mismatch vs reference: {max_err}"

    print("KERNEL_OK")
</pallas_src>

<mosaic_0001>
module attributes {stable_mosaic.version = 11 : i64} {
  func.func @kernel(%arg0: i32, %arg1: memref<8x8x768xbf16, #tpu.memory_space<vmem>>, %arg2: memref<768x512xbf16, #tpu.memory_space<vmem>>, %arg3: memref<64x512xbf16, #tpu.memory_space<vmem>>, %arg4: memref<1x512xf32, #tpu.memory_space<vmem>>, %arg5: memref<128x512xbf16, #tpu.memory_space<vmem>>, %arg6: memref<64x512xbf16, #tpu.memory_space<vmem>>, %arg7: memref<1x512xf32, #tpu.memory_space<vmem>>, %arg8: memref<1x128xf32, #tpu.memory_space<vmem>>, %arg9: memref<1x128xf32, #tpu.memory_space<vmem>>, %arg10: memref<128x2xf32, #tpu.memory_space<vmem>>, %arg11: memref<1x2xf32, #tpu.memory_space<vmem>>, %arg12: memref<8x2xf32, #tpu.memory_space<vmem>>, %arg13: memref<8x8x512xf32, #tpu.memory_space<vmem>>, %arg14: memref<8x16x64xf32, #tpu.memory_space<vmem>>) attributes {dimension_semantics = [#tpu.dimension_semantics<parallel>], iteration_bounds = array<i64: 1>, scalar_prefetch = 0 : i64, scratch_operands = 2 : i64, tpu.core_type = #tpu.core_type<tc>, window_params = [{transform_indices = @transform_0, window_bounds = array<i64: 8, 8, 768>}, {pipeline_mode = #tpu.pipeline_mode<synchronous>, transform_indices = @transform_1, window_bounds = array<i64: 768, 512>}, {pipeline_mode = #tpu.pipeline_mode<synchronous>, transform_indices = @transform_2, window_bounds = array<i64: 64, 512>}, {pipeline_mode = #tpu.pipeline_mode<synchronous>, transform_indices = @transform_3, window_bounds = array<i64: 1, 512>}, {pipeline_mode = #tpu.pipeline_mode<synchronous>, transform_indices = @transform_4, window_bounds = array<i64: 128, 512>}, {pipeline_mode = #tpu.pipeline_mode<synchronous>, transform_indices = @transform_5, window_bounds = array<i64: 64, 512>}, {pipeline_mode = #tpu.pipeline_mode<synchronous>, transform_indices = @transform_6, window_bounds = array<i64: 1, 512>}, {pipeline_mode = #tpu.pipeline_mode<synchronous>, transform_indices = @transform_7, window_bounds = array<i64: 1, 128>}, {pipeline_mode = #tpu.pipeline_mode<synchronous>, transform_indices = @transform_8, window_bounds = array<i64: 1, 128>}, {pipeline_mode = #tpu.pipeline_mode<synchronous>, transform_indices = @transform_9, window_bounds = array<i64: 128, 2>}, {pipeline_mode = #tpu.pipeline_mode<synchronous>, transform_indices = @transform_10, window_bounds = array<i64: 1, 2>}, {transform_indices = @transform_11, window_bounds = array<i64: 8, 2>}]} {
    %c0 = arith.constant 0 : index
    %c0_0 = arith.constant 0 : index
    %0 = vector.load %arg2[%c0, %c0_0] : memref<768x512xbf16, #tpu.memory_space<vmem>>, vector<768x512xbf16>
    %c0_1 = arith.constant 0 : index
    %c0_2 = arith.constant 0 : index
    %1 = vector.load %arg4[%c0_1, %c0_2] : memref<1x512xf32, #tpu.memory_space<vmem>>, vector<1x512xf32>
    %c0_i32 = arith.constant 0 : i32
    %c8_i32 = arith.constant 8 : i32
    %2 = arith.muli %c0_i32, %c8_i32 : i32
    %3 = tpu.assume_multiple %2, 8 : i32
    %4 = arith.index_cast %3 : i32 to index
    %c0_3 = arith.constant 0 : index
    %c0_4 = arith.constant 0 : index
    %5 = vector.load %arg1[%4, %c0_3, %c0_4] : memref<8x8x768xbf16, #tpu.memory_space<vmem>>, vector<8x8x768xbf16>
    %6 = vector.shape_cast %5 : vector<8x8x768xbf16> to vector<64x768xbf16>
    %cst = arith.constant dense<0.000000e+00> : vector<64x512xf32>
    %7 = tpu.matmul %6, %0, %cst {dimension_numbers = #tpu.dot_dimension_numbers<[1], [0], [0], [1], [0, 0, 1, 1], [], []>} : vector<64x768xbf16>, vector<768x512xbf16>, vector<64x512xf32> -> vector<64x512xf32>
    %8 = vector.broadcast %1 : vector<1x512xf32> to vector<64x512xf32>
    %9 = arith.addf %7, %8 : vector<64x512xf32>
    %10 = vector.shape_cast %9 : vector<64x512xf32> to vector<8x8x512xf32>
    %11 = arith.index_cast %3 : i32 to index
    %c0_5 = arith.constant 0 : index
    %c0_6 = arith.constant 0 : index
    %12 = vector.load %arg13[%11, %c0_5, %c0_6] : memref<8x8x512xf32, #tpu.memory_space<vmem>>, vector<8x8x512xf32>
    tpu.vector_store %arg13[%11, %c0_5, %c0_6], %10 {strides = array<i32>} : memref<8x8x512xf32, #tpu.memory_space<vmem>>, vector<8x8x512xf32>,
    %c1_i32 = arith.constant 1 : i32
    %c0_7 = arith.constant 0 : index
    %c0_8 = arith.constant 0 : index
    %13 = vector.load %arg3[%c0_7, %c0_8] : memref<64x512xbf16, #tpu.memory_space<vmem>>, vector<64x512xbf16>
    %cst_9 = arith.constant 0.000000e+00 : f32
    %14 = vector.broadcast %cst_9 : f32 to vector<16x64xf32>
    %c0_i32_10 = arith.constant 0 : i32
    %15 = arith.truncf %14 : vector<16x64xf32> to vector<16x64xbf16>
    %cst_11 = arith.constant dense<0.000000e+00> : vector<16x512xf32>
    %16 = tpu.matmul %15, %13, %cst_11 {dimension_numbers = #tpu.dot_dimension_numbers<[1], [0], [0], [1], [0, 0, 1, 1], [], []>} : vector<16x64xbf16>, vector<64x512xbf16>, vector<16x512xf32> -> vector<16x512xf32>
    %c7_i32 = arith.constant 7 : i32
    %17 = arith.subi %c7_i32, %c0_i32_10 : i32
    %18 = arith.index_cast %c0_i32_10 : i32 to index
    %c0_12 = arith.constant 0 : index
    %c0_13 = arith.constant 0 : index
    %19 = vector.load %arg13[%18, %c0_12, %c0_13] : memref<8x8x512xf32, #tpu.memory_space<vmem>>, vector<1x8x256xf32>
    %20 = vector.shape_cast %19 : vector<1x8x256xf32> to vector<8x256xf32>
    %21 = vector.extract_strided_slice %16 {offsets = [0, 0], sizes = [8, 256], strides = [1, 1]} : vector<16x512xf32> to vector<8x256xf32>
    %22 = arith.addf %20, %21 : vector<8x256xf32>
    %23 = arith.index_cast %17 : i32 to index
    %c0_14 = arith.constant 0 : index
    %c256 = arith.constant 256 : index
    %24 = vector.load %arg13[%23, %c0_14, %c256] : memref<8x8x512xf32, #tpu.memory_space<vmem>>, vector<1x8x256xf32>
    %25 = vector.shape_cast %24 : vector<1x8x256xf32> to vector<8x256xf32>
    %26 = vector.extract_strided_slice %16 {offsets = [8, 256], sizes = [8, 256], strides = [1, 1]} : vector<16x512xf32> to vector<8x256xf32>
    %27 = arith.addf %25, %26 : vector<8x256xf32>
    %28 = tpu.concatenate %22, %27 in 0 : vector<8x256xf32>, vector<8x256xf32> -> vector<16x256xf32>
    %29 = vector.extract_strided_slice %28 {offsets = [0, 0], sizes = [16, 192], strides = [1, 1]} : vector<16x256xf32> to vector<16x192xf32>
    %30 = arith.negf %29 : vector<16x192xf32>
    %31 = math.exp %30 : vector<16x192xf32>
    %cst_15 = arith.constant 1.000000e+00 : f32
    %32 = vector.broadcast %cst_15 : f32 to vector<16x192xf32>
    %33 = arith.addf %32, %31 : vector<16x192xf32>
    %34 = arith.divf %32, %33 : vector<16x192xf32>
    %35 = vector.extract_strided_slice %28 {offsets = [0, 192], sizes = [16, 64], strides = [1, 1]} : vector<16x256xf32> to vector<16x64xf32>
    %36 = math.tanh %35 : vector<16x64xf32>
    %37 = vector.extract_strided_slice %34 {offsets = [0, 64], sizes = [16, 64], strides = [1, 1]} : vector<16x192xf32> to vector<16x64xf32>
    %38 = arith.mulf %37, %14 : vector<16x64xf32>
    %39 = vector.extract_strided_slice %34 {offsets = [0, 0], sizes = [16, 64], strides = [1, 1]} : vector<16x192xf32> to vector<16x64xf32>
    %40 = arith.mulf %39, %36 : vector<16x64xf32>
    %41 = arith.addf %38, %40 : vector<16x64xf32>
    %42 = vector.extract_strided_slice %34 {offsets = [0, 128], sizes = [16, 64], strides = [1, 1]} : vector<16x192xf32> to vector<16x64xf32>
    %43 = math.tanh %41 : vector<16x64xf32>
    %44 = arith.mulf %42, %43 : vector<16x64xf32>
    %45 = vector.extract_strided_slice %44 {offsets = [0, 0], sizes = [8, 64], strides = [1, 1]} : vector<16x64xf32> to vector<8x64xf32>
    %46 = arith.index_cast %c0_i32_10 : i32 to index
    %c0_16 = arith.constant 0 : index
    %c0_17 = arith.constant 0 : index
    %47 = vector.load %arg14[%46, %c0_16, %c0_17] : memref<8x16x64xf32, #tpu.memory_space<vmem>>, vector<1x8x64xf32>
    %48 = vector.shape_cast %47 : vector<1x8x64xf32> to vector<8x64xf32>
    %49 = vector.shape_cast %45 : vector<8x64xf32> to vector<1x8x64xf32>
    tpu.vector_store %arg14[%46, %c0_16, %c0_17], %49 {strides = array<i32>} : memref<8x16x64xf32, #tpu.memory_space<vmem>>, vector<1x8x64xf32>,
    %50 = vector.extract_strided_slice %44 {offsets = [8, 0], sizes = [8, 64], strides = [1, 1]} : vector<16x64xf32> to vector<8x64xf32>
    %51 = arith.index_cast %17 : i32 to index
    %c8 = arith.constant 8 : index
    %c0_18 = arith.constant 0 : index
    %52 = vector.load %arg14[%51, %c8, %c0_18] : memref<8x16x64xf32, #tpu.memory_space<vmem>>, vector<1x8x64xf32>
    %53 = vector.shape_cast %52 : vector<1x8x64xf32> to vector<8x64xf32>
    %54 = vector.shape_cast %50 : vector<8x64xf32> to vector<1x8x64xf32>
    tpu.vector_store %arg14[%51, %c8, %c0_18], %54 {strides = array<i32>} : memref<8x16x64xf32, #tpu.memory_space<vmem>>, vector<1x8x64xf32>,
    %c1_i32_19 = arith.constant 1 : i32
    %55 = arith.truncf %44 : vector<16x64xf32> to vector<16x64xbf16>
    %cst_20 = arith.constant dense<0.000000e+00> : vector<16x512xf32>
    %56 = tpu.matmul %55, %13, %cst_20 {dimension_numbers = #tpu.dot_dimension_numbers<[1], [0], [0], [1], [0, 0, 1, 1], [], []>} : vector<16x64xbf16>, vector<64x512xbf16>, vector<16x512xf32> -> vector<16x512xf32>
    %c7_i32_21 = arith.constant 7 : i32
    %57 = arith.subi %c7_i32_21, %c1_i32_19 : i32
    %58 = arith.index_cast %c1_i32_19 : i32 to index
    %c0_22 = arith.constant 0 : index
    %c0_23 = arith.constant 0 : index
    %59 = vector.load %arg13[%58, %c0_22, %c0_23] : memref<8x8x512xf32, #tpu.memory_space<vmem>>, vector<1x8x256xf32>
    %60 = vector.shape_cast %59 : vector<1x8x256xf32> to vector<8x256xf32>
    %61 = vector.extract_strided_slice %56 {offsets = [0, 0], sizes = [8, 256], strides = [1, 1]} : vector<16x512xf32> to vector<8x256xf32>
    %62 = arith.addf %60, %61 : vector<8x256xf32>
    %63 = arith.index_cast %57 : i32 to index
    %c0_24 = arith.constant 0 : index
    %c256_25 = arith.constant 256 : index
    %64 = vector.load %arg13[%63, %c0_24, %c256_25] : memref<8x8x512xf32, #tpu.memory_space<vmem>>, vector<1x8x256xf32>
    %65 = vector.shape_cast %64 : vector<1x8x256xf32> to vector<8x256xf32>
    %66 = vector.extract_strided_slice %56 {offsets = [8, 256], sizes = [8, 256], strides = [1, 1]} : vector<16x512xf32> to vector<8x256xf32>
    %67 = arith.addf %65, %66 : vector<8x256xf32>
    %68 = tpu.concatenate %62, %67 in 0 : vector<8x256xf32>, vector<8x256xf32> -> vector<16x256xf32>
    %69 = vector.extract_strided_slice %68 {offsets = [0, 0], sizes = [16, 192], strides = [1, 1]} : vector<16x256xf32> to vector<16x192xf32>
    %70 = arith.negf %69 : vector<16x192xf32>
    %71 = math.exp %70 : vector<16x192xf32>
    %cst_26 = arith.constant 1.000000e+00 : f32
    %72 = vector.broadcast %cst_26 : f32 to vector<16x192xf32>
    %73 = arith.addf %72, %71 : vector<16x192xf32>
    %74 = arith.divf %72, %73 : vector<16x192xf32>
    %75 = vector.extract_strided_slice %68 {offsets = [0, 192], sizes = [16, 64], strides = [1, 1]} : vector<16x256xf32> to vector<16x64xf32>
    %76 = math.tanh %75 : vector<16x64xf32>
    %77 = vector.extract_strided_slice %74 {offsets = [0, 64], sizes = [16, 64], strides = [1, 1]} : vector<16x192xf32> to vector<16x64xf32>
    %78 = arith.mulf %77, %41 : vector<16x64xf32>
    %79 = vector.extract_strided_slice %74 {offsets = [0, 0], sizes = [16, 64], strides = [1, 1]} : vector<16x192xf32> to vector<16x64xf32>
    %80 = arith.mulf %79, %76 : vector<16x64xf32>
    %81 = arith.addf %78, %80 : vector<16x64xf32>
    %82 = vector.extract_strided_slice %74 {offsets = [0, 128], sizes = [16, 64], strides = [1, 1]} : vector<16x192xf32> to vector<16x64xf32>
    %83 = math.tanh %81 : vector<16x64xf32>
    %84 = arith.mulf %82, %83 : vector<16x64xf32>
    %85 = vector.extract_strided_slice %84 {offsets = [0, 0], sizes = [8, 64], strides = [1, 1]} : vector<16x64xf32> to vector<8x64xf32>
    %86 = arith.index_cast %c1_i32_19 : i32 to index
    %c0_27 = arith.constant 0 : index
    %c0_28 = arith.constant 0 : index
    %87 = vector.load %arg14[%86, %c0_27, %c0_28] : memref<8x16x64xf32, #tpu.memory_space<vmem>>, vector<1x8x64xf32>
    %88 = vector.shape_cast %87 : vector<1x8x64xf32> to vector<8x64xf32>
    %89 = vector.shape_cast %85 : vector<8x64xf32> to vector<1x8x64xf32>
    tpu.vector_store %arg14[%86, %c0_27, %c0_28], %89 {strides = array<i32>} : memref<8x16x64xf32, #tpu.memory_space<vmem>>, vector<1x8x64xf32>,
    %90 = vector.extract_strided_slice %84 {offsets = [8, 0], sizes = [8, 64], strides = [1, 1]} : vector<16x64xf32> to vector<8x64xf32>
    %91 = arith.index_cast %57 : i32 to index
    %c8_29 = arith.constant 8 : index
    %c0_30 = arith.constant 0 : index
    %92 = vector.load %arg14[%91, %c8_29, %c0_30] : memref<8x16x64xf32, #tpu.memory_space<vmem>>, vector<1x8x64xf32>
    %93 = vector.shape_cast %92 : vector<1x8x64xf32> to vector<8x64xf32>
    %94 = vector.shape_cast %90 : vector<8x64xf32> to vector<1x8x64xf32>
    tpu.vector_store %arg14[%91, %c8_29, %c0_30], %94 {strides = array<i32>} : memref<8x16x64xf32, #tpu.memory_space<vmem>>, vector<1x8x64xf32>,
    %c2_i32 = arith.constant 2 : i32
    %95 = arith.truncf %84 : vector<16x64xf32> to vector<16x64xbf16>
    %cst_31 = arith.constant dense<0.000000e+00> : vector<16x512xf32>
    %96 = tpu.matmul %95, %13, %cst_31 {dimension_numbers = #tpu.dot_dimension_numbers<[1], [0], [0], [1], [0, 0, 1, 1], [], []>} : vector<16x64xbf16>, vector<64x512xbf16>, vector<16x512xf32> -> vector<16x512xf32>
    %c7_i32_32 = arith.constant 7 : i32
    %97 = arith.subi %c7_i32_32, %c2_i32 : i32
    %98 = arith.index_cast %c2_i32 : i32 to index
    %c0_33 = arith.constant 0 : index
    %c0_34 = arith.constant 0 : index
    %99 = vector.load %arg13[%98, %c0_33, %c0_34] : memref<8x8x512xf32, #tpu.memory_space<vmem>>, vector<1x8x256xf32>
    %100 = vector.shape_cast %99 : vector<1x8x256xf32> to vector<8x256xf32>
    %101 = vector.extract_strided_slice %96 {offsets = [0, 0], sizes = [8, 256], strides = [1, 1]} : vector<16x512xf32> to vector<8x256xf32>
    %102 = arith.addf %100, %101 : vector<8x256xf32>
    %103 = arith.index_cast %97 : i32 to index
    %c0_35 = arith.constant 0 : index
    %c256_36 = arith.constant 256 : index
    %104 = vector.load %arg13[%103, %c0_35, %c256_36] : memref<8x8x512xf32, #tpu.memory_space<vmem>>, vector<1x8x256xf32>
    %105 = vector.shape_cast %104 : vector<1x8x256xf32> to vector<8x256xf32>
    %106 = vector.extract_strided_slice %96 {offsets = [8, 256], sizes = [8, 256], strides = [1, 1]} : vector<16x512xf32> to vector<8x256xf32>
    %107 = arith.addf %105, %106 : vector<8x256xf32>
    %108 = tpu.concatenate %102, %107 in 0 : vector<8x256xf32>, vector<8x256xf32> -> vector<16x256xf32>
    %109 = vector.extract_strided_slice %108 {offsets = [0, 0], sizes = [16, 192], strides = [1, 1]} : vector<16x256xf32> to vector<16x192xf32>
    %110 = arith.negf %109 : vector<16x192xf32>
    %111 = math.exp %110 : vector<16x192xf32>
    %cst_37 = arith.constant 1.000000e+00 : f32
    %112 = vector.broadcast %cst_37 : f32 to vector<16x192xf32>
    %113 = arith.addf %112, %111 : vector<16x192xf32>
    %114 = arith.divf %112, %113 : vector<16x192xf32>
    %115 = vector.extract_strided_slice %108 {offsets = [0, 192], sizes = [16, 64], strides = [1, 1]} : vector<16x256xf32> to vector<16x64xf32>
    %116 = math.tanh %115 : vector<16x64xf32>
    %117 = vector.extract_strided_slice %114 {offsets = [0, 64], sizes = [16, 64], strides = [1, 1]} : vector<16x192xf32> to vector<16x64xf32>
    %118 = arith.mulf %117, %81 : vector<16x64xf32>
    %119 = vector.extract_strided_slice %114 {offsets = [0, 0], sizes = [16, 64], strides = [1, 1]} : vector<16x192xf32> to vector<16x64xf32>
    %120 = arith.mulf %119, %116 : vector<16x64xf32>
    %121 = arith.addf %118, %120 : vector<16x64xf32>
    %122 = vector.extract_strided_slice %114 {offsets = [0, 128], sizes = [16, 64], strides = [1, 1]} : vector<16x192xf32> to vector<16x64xf32>
    %123 = math.tanh %121 : vector<16x64xf32>
    %124 = arith.mulf %122, %123 : vector<16x64xf32>
    %125 = vector.extract_strided_slice %124 {offsets = [0, 0], sizes = [8, 64], strides = [1, 1]} : vector<16x64xf32> to vector<8x64xf32>
    %126 = arith.index_cast %c2_i32 : i32 to index
    %c0_38 = arith.constant 0 : index
    %c0_39 = arith.constant 0 : index
    %127 = vector.load %arg14[%126, %c0_38, %c0_39] : memref<8x16x64xf32, #tpu.memory_space<vmem>>, vector<1x8x64xf32>
    %128 = vector.shape_cast %127 : vector<1x8x64xf32> to vector<8x64xf32>
    %129 = vector.shape_cast %125 : vector<8x64xf32> to vector<1x8x64xf32>
    tpu.vector_store %arg14[%126, %c0_38, %c0_39], %129 {strides = array<i32>} : memref<8x16x64xf32, #tpu.memory_space<vmem>>, vector<1x8x64xf32>,
    %130 = vector.extract_strided_slice %124 {offsets = [8, 0], sizes = [8, 64], strides = [1, 1]} : vector<16x64xf32> to vector<8x64xf32>
    %131 = arith.index_cast %97 : i32 to index
    %c8_40 = arith.constant 8 : index
    %c0_41 = arith.constant 0 : index
    %132 = vector.load %arg14[%131, %c8_40, %c0_41] : memref<8x16x64xf32, #tpu.memory_space<vmem>>, vector<1x8x64xf32>
    %133 = vector.shape_cast %132 : vector<1x8x64xf32> to vector<8x64xf32>
    %134 = vector.shape_cast %130 : vector<8x64xf32> to vector<1x8x64xf32>
    tpu.vector_store %arg14[%131, %c8_40, %c0_41], %134 {strides = array<i32>} : memref<8x16x64xf32, #tpu.memory_space<vmem>>, vector<1x8x64xf32>,
    %c3_i32 = arith.constant 3 : i32
    %135 = arith.truncf %124 : vector<16x64xf32> to vector<16x64xbf16>
    %cst_42 = arith.constant dense<0.000000e+00> : vector<16x512xf32>
    %136 = tpu.matmul %135, %13, %cst_42 {dimension_numbers = #tpu.dot_dimension_numbers<[1], [0], [0], [1], [0, 0, 1, 1], [], []>} : vector<16x64xbf16>, vector<64x512xbf16>, vector<16x512xf32> -> vector<16x512xf32>
    %c7_i32_43 = arith.constant 7 : i32
    %137 = arith.subi %c7_i32_43, %c3_i32 : i32
    %138 = arith.index_cast %c3_i32 : i32 to index
    %c0_44 = arith.constant 0 : index
    %c0_45 = arith.constant 0 : index
    %139 = vector.load %arg13[%138, %c0_44, %c0_45] : memref<8x8x512xf32, #tpu.memory_space<vmem>>, vector<1x8x256xf32>
    %140 = vector.shape_cast %139 : vector<1x8x256xf32> to vector<8x256xf32>
    %141 = vector.extract_strided_slice %136 {offsets = [0, 0], sizes = [8, 256], strides = [1, 1]} : vector<16x512xf32> to vector<8x256xf32>
    %142 = arith.addf %140, %141 : vector<8x256xf32>
    %143 = arith.index_cast %137 : i32 to index
    %c0_46 = arith.constant 0 : index
    %c256_47 = arith.constant 256 : index
    %144 = vector.load %arg13[%143, %c0_46, %c256_47] : memref<8x8x512xf32, #tpu.memory_space<vmem>>, vector<1x8x256xf32>
    %145 = vector.shape_cast %144 : vector<1x8x256xf32> to vector<8x256xf32>
    %146 = vector.extract_strided_slice %136 {offsets = [8, 256], sizes = [8, 256], strides = [1, 1]} : vector<16x512xf32> to vector<8x256xf32>
    %147 = arith.addf %145, %146 : vector<8x256xf32>
    %148 = tpu.concatenate %142, %147 in 0 : vector<8x256xf32>, vector<8x256xf32> -> vector<16x256xf32>
    %149 = vector.extract_strided_slice %148 {offsets = [0, 0], sizes = [16, 192], strides = [1, 1]} : vector<16x256xf32> to vector<16x192xf32>
    %150 = arith.negf %149 : vector<16x192xf32>
    %151 = math.exp %150 : vector<16x192xf32>
    %cst_48 = arith.constant 1.000000e+00 : f32
    %152 = vector.broadcast %cst_48 : f32 to vector<16x192xf32>
    %153 = arith.addf %152, %151 : vector<16x192xf32>
    %154 = arith.divf %152, %153 : vector<16x192xf32>
    %155 = vector.extract_strided_slice %148 {offsets = [0, 192], sizes = [16, 64], strides = [1, 1]} : vector<16x256xf32> to vector<16x64xf32>
    %156 = math.tanh %155 : vector<16x64xf32>
    %157 = vector.extract_strided_slice %154 {offsets = [0, 64], sizes = [16, 64], strides = [1, 1]} : vector<16x192xf32> to vector<16x64xf32>
    %158 = arith.mulf %157, %121 : vector<16x64xf32>
    %159 = vector.extract_strided_slice %154 {offsets = [0, 0], sizes = [16, 64], strides = [1, 1]} : vector<16x192xf32> to vector<16x64xf32>
    %160 = arith.mulf %159, %156 : vector<16x64xf32>
    %161 = arith.addf %158, %160 : vector<16x64xf32>
    %162 = vector.extract_strided_slice %154 {offsets = [0, 128], sizes = [16, 64], strides = [1, 1]} : vector<16x192xf32> to vector<16x64xf32>
    %163 = math.tanh %161 : vector<16x64xf32>
    %164 = arith.mulf %162, %163 : vector<16x64xf32>
    %165 = vector.extract_strided_slice %164 {offsets = [0, 0], sizes = [8, 64], strides = [1, 1]} : vector<16x64xf32> to vector<8x64xf32>
    %166 = arith.index_cast %c3_i32 : i32 to index
    %c0_49 = arith.constant 0 : index
    %c0_50 = arith.constant 0 : index
    %167 = vector.load %arg14[%166, %c0_49, %c0_50] : memref<8x16x64xf32, #tpu.memory_space<vmem>>, vector<1x8x64xf32>
    %168 = vector.shape_cast %167 : vector<1x8x64xf32> to vector<8x64xf32>
    %169 = vector.shape_cast %165 : vector<8x64xf32> to vector<1x8x64xf32>
    tpu.vector_store %arg14[%166, %c0_49, %c0_50], %169 {strides = array<i32>} : memref<8x16x64xf32, #tpu.memory_space<vmem>>, vector<1x8x64xf32>,
    %170 = vector.extract_strided_slice %164 {offsets = [8, 0], sizes = [8, 64], strides = [1, 1]} : vector<16x64xf32> to vector<8x64xf32>
    %171 = arith.index_cast %137 : i32 to index
    %c8_51 = arith.constant 8 : index
    %c0_52 = arith.constant 0 : index
    %172 = vector.load %arg14[%171, %c8_51, %c0_52] : memref<8x16x64xf32, #tpu.memory_space<vmem>>, vector<1x8x64xf32>
    %173 = vector.shape_cast %172 : vector<1x8x64xf32> to vector<8x64xf32>
    %174 = vector.shape_cast %170 : vector<8x64xf32> to vector<1x8x64xf32>
    tpu.vector_store %arg14[%171, %c8_51, %c0_52], %174 {strides = array<i32>} : memref<8x16x64xf32, #tpu.memory_space<vmem>>, vector<1x8x64xf32>,
    %c4_i32 = arith.constant 4 : i32
    %175 = arith.truncf %164 : vector<16x64xf32> to vector<16x64xbf16>
    %cst_53 = arith.constant dense<0.000000e+00> : vector<16x512xf32>
    %176 = tpu.matmul %175, %13, %cst_53 {dimension_numbers = #tpu.dot_dimension_numbers<[1], [0], [0], [1], [0, 0, 1, 1], [], []>} : vector<16x64xbf16>, vector<64x512xbf16>, vector<16x512xf32> -> vector<16x512xf32>
    %c7_i32_54 = arith.constant 7 : i32
    %177 = arith.subi %c7_i32_54, %c4_i32 : i32
    %178 = arith.index_cast %c4_i32 : i32 to index
    %c0_55 = arith.constant 0 : index
    %c0_56 = arith.constant 0 : index
    %179 = vector.load %arg13[%178, %c0_55, %c0_56] : memref<8x8x512xf32, #tpu.memory_space<vmem>>, vector<1x8x256xf32>
    %180 = vector.shape_cast %179 : vector<1x8x256xf32> to vector<8x256xf32>
    %181 = vector.extract_strided_slice %176 {offsets = [0, 0], sizes = [8, 256], strides = [1, 1]} : vector<16x512xf32> to vector<8x256xf32>
    %182 = arith.addf %180, %181 : vector<8x256xf32>
    %183 = arith.index_cast %177 : i32 to index
    %c0_57 = arith.constant 0 : index
    %c256_58 = arith.constant 256 : index
    %184 = vector.load %arg13[%183, %c0_57, %c256_58] : memref<8x8x512xf32, #tpu.memory_space<vmem>>, vector<1x8x256xf32>
    %185 = vector.shape_cast %184 : vector<1x8x256xf32> to vector<8x256xf32>
    %186 = vector.extract_strided_slice %176 {offsets = [8, 256], sizes = [8, 256], strides = [1, 1]} : vector<16x512xf32> to vector<8x256xf32>
    %187 = arith.addf %185, %186 : vector<8x256xf32>
    %188 = tpu.concatenate %182, %187 in 0 : vector<8x256xf32>, vector<8x256xf32> -> vector<16x256xf32>
    %189 = vector.extract_strided_slice %188 {offsets = [0, 0], sizes = [16, 192], strides = [1, 1]} : vector<16x256xf32> to vector<16x192xf32>
    %190 = arith.negf %189 : vector<16x192xf32>
    %191 = math.exp %190 : vector<16x192xf32>
    %cst_59 = arith.constant 1.000000e+00 : f32
    %192 = vector.broadcast %cst_59 : f32 to vector<16x192xf32>
    %193 = arith.addf %192, %191 : vector<16x192xf32>
    %194 = arith.divf %192, %193 : vector<16x192xf32>
    %195 = vector.extract_strided_slice %188 {offsets = [0, 192], sizes = [16, 64], strides = [1, 1]} : vector<16x256xf32> to vector<16x64xf32>
    %196 = math.tanh %195 : vector<16x64xf32>
    %197 = vector.extract_strided_slice %194 {offsets = [0, 64], sizes = [16, 64], strides = [1, 1]} : vector<16x192xf32> to vector<16x64xf32>
    %198 = arith.mulf %197, %161 : vector<16x64xf32>
    %199 = vector.extract_strided_slice %194 {offsets = [0, 0], sizes = [16, 64], strides = [1, 1]} : vector<16x192xf32> to vector<16x64xf32>
    %200 = arith.mulf %199, %196 : vector<16x64xf32>
    %201 = arith.addf %198, %200 : vector<16x64xf32>
    %202 = vector.extract_strided_slice %194 {offsets = [0, 128], sizes = [16, 64], strides = [1, 1]} : vector<16x192xf32> to vector<16x64xf32>
    %203 = math.tanh %201 : vector<16x64xf32>
    %204 = arith.mulf %202, %203 : vector<16x64xf32>
    %205 = vector.extract_strided_slice %204 {offsets = [0, 0], sizes = [8, 64], strides = [1, 1]} : vector<16x64xf32> to vector<8x64xf32>
    %206 = arith.index_cast %c4_i32 : i32 to index
    %c0_60 = arith.constant 0 : index
    %c0_61 = arith.constant 0 : index
    %207 = vector.load %arg14[%206, %c0_60, %c0_61] : memref<8x16x64xf32, #tpu.memory_space<vmem>>, vector<1x8x64xf32>
    %208 = vector.shape_cast %207 : vector<1x8x64xf32> to vector<8x64xf32>
    %209 = vector.shape_cast %205 : vector<8x64xf32> to vector<1x8x64xf32>
    tpu.vector_store %arg14[%206, %c0_60, %c0_61], %209 {strides = array<i32>} : memref<8x16x64xf32, #tpu.memory_space<vmem>>, vector<1x8x64xf32>,
    %210 = vector.extract_strided_slice %204 {offsets = [8, 0], sizes = [8, 64], strides = [1, 1]} : vector<16x64xf32> to vector<8x64xf32>
    %211 = arith.index_cast %177 : i32 to index
    %c8_62 = arith.constant 8 : index
    %c0_63 = arith.constant 0 : index
    %212 = vector.load %arg14[%211, %c8_62, %c0_63] : memref<8x16x64xf32, #tpu.memory_space<vmem>>, vector<1x8x64xf32>
    %213 = vector.shape_cast %212 : vector<1x8x64xf32> to vector<8x64xf32>
    %214 = vector.shape_cast %210 : vector<8x64xf32> to vector<1x8x64xf32>
    tpu.vector_store %arg14[%211, %c8_62, %c0_63], %214 {strides = array<i32>} : memref<8x16x64xf32, #tpu.memory_space<vmem>>, vector<1x8x64xf32>,
    %c5_i32 = arith.constant 5 : i32
    %215 = arith.truncf %204 : vector<16x64xf32> to vector<16x64xbf16>
    %cst_64 = arith.constant dense<0.000000e+00> : vector<16x512xf32>
    %216 = tpu.matmul %215, %13, %cst_64 {dimension_numbers = #tpu.dot_dimension_numbers<[1], [0], [0], [1], [0, 0, 1, 1], [], []>} : vector<16x64xbf16>, vector<64x512xbf16>, vector<16x512xf32> -> vector<16x512xf32>
    %c7_i32_65 = arith.constant 7 : i32
    %217 = arith.subi %c7_i32_65, %c5_i32 : i32
    %218 = arith.index_cast %c5_i32 : i32 to index
    %c0_66 = arith.constant 0 : index
    %c0_67 = arith.constant 0 : index
    %219 = vector.load %arg13[%218, %c0_66, %c0_67] : memref<8x8x512xf32, #tpu.memory_space<vmem>>, vector<1x8x256xf32>
    %220 = vector.shape_cast %219 : vector<1x8x256xf32> to vector<8x256xf32>
    %221 = vector.extract_strided_slice %216 {offsets = [0, 0], sizes = [8, 256], strides = [1, 1]} : vector<16x512xf32> to vector<8x256xf32>
    %222 = arith.addf %220, %221 : vector<8x256xf32>
    %223 = arith.index_cast %217 : i32 to index
    %c0_68 = arith.constant 0 : index
    %c256_69 = arith.constant 256 : index
    %224 = vector.load %arg13[%223, %c0_68, %c256_69] : memref<8x8x512xf32, #tpu.memory_space<vmem>>, vector<1x8x256xf32>
    %225 = vector.shape_cast %224 : vector<1x8x256xf32> to vector<8x256xf32>
    %226 = vector.extract_strided_slice %216 {offsets = [8, 256], sizes = [8, 256], strides = [1, 1]} : vector<16x512xf32> to vector<8x256xf32>
    %227 = arith.addf %225, %226 : vector<8x256xf32>
    %228 = tpu.concatenate %222, %227 in 0 : vector<8x256xf32>, vector<8x256xf32> -> vector<16x256xf32>
    %229 = vector.extract_strided_slice %228 {offsets = [0, 0], sizes = [16, 192], strides = [1, 1]} : vector<16x256xf32> to vector<16x192xf32>
    %230 = arith.negf %229 : vector<16x192xf32>
    %231 = math.exp %230 : vector<16x192xf32>
    %cst_70 = arith.constant 1.000000e+00 : f32
    %232 = vector.broadcast %cst_70 : f32 to vector<16x192xf32>
    %233 = arith.addf %232, %231 : vector<16x192xf32>
    %234 = arith.divf %232, %233 : vector<16x192xf32>
    %235 = vector.extract_strided_slice %228 {offsets = [0, 192], sizes = [16, 64], strides = [1, 1]} : vector<16x256xf32> to vector<16x64xf32>
    %236 = math.tanh %235 : vector<16x64xf32>
    %237 = vector.extract_strided_slice %234 {offsets = [0, 64], sizes = [16, 64], strides = [1, 1]} : vector<16x192xf32> to vector<16x64xf32>
    %238 = arith.mulf %237, %201 : vector<16x64xf32>
    %239 = vector.extract_strided_slice %234 {offsets = [0, 0], sizes = [16, 64], strides = [1, 1]} : vector<16x192xf32> to vector<16x64xf32>
    %240 = arith.mulf %239, %236 : vector<16x64xf32>
    %241 = arith.addf %238, %240 : vector<16x64xf32>
    %242 = vector.extract_strided_slice %234 {offsets = [0, 128], sizes = [16, 64], strides = [1, 1]} : vector<16x192xf32> to vector<16x64xf32>
    %243 = math.tanh %241 : vector<16x64xf32>
    %244 = arith.mulf %242, %243 : vector<16x64xf32>
    %245 = vector.extract_strided_slice %244 {offsets = [0, 0], sizes = [8, 64], strides = [1, 1]} : vector<16x64xf32> to vector<8x64xf32>
    %246 = arith.index_cast %c5_i32 : i32 to index
    %c0_71 = arith.constant 0 : index
    %c0_72 = arith.constant 0 : index
    %247 = vector.load %arg14[%246, %c0_71, %c0_72] : memref<8x16x64xf32, #tpu.memory_space<vmem>>, vector<1x8x64xf32>
    %248 = vector.shape_cast %247 : vector<1x8x64xf32> to vector<8x64xf32>
    %249 = vector.shape_cast %245 : vector<8x64xf32> to vector<1x8x64xf32>
    tpu.vector_store %arg14[%246, %c0_71, %c0_72], %249 {strides = array<i32>} : memref<8x16x64xf32, #tpu.memory_space<vmem>>, vector<1x8x64xf32>,
    %250 = vector.extract_strided_slice %244 {offsets = [8, 0], sizes = [8, 64], strides = [1, 1]} : vector<16x64xf32> to vector<8x64xf32>
    %251 = arith.index_cast %217 : i32 to index
    %c8_73 = arith.constant 8 : index
    %c0_74 = arith.constant 0 : index
    %252 = vector.load %arg14[%251, %c8_73, %c0_74] : memref<8x16x64xf32, #tpu.memory_space<vmem>>, vector<1x8x64xf32>
    %253 = vector.shape_cast %252 : vector<1x8x64xf32> to vector<8x64xf32>
    %254 = vector.shape_cast %250 : vector<8x64xf32> to vector<1x8x64xf32>
    tpu.vector_store %arg14[%251, %c8_73, %c0_74], %254 {strides = array<i32>} : memref<8x16x64xf32, #tpu.memory_space<vmem>>, vector<1x8x64xf32>,
    %c6_i32 = arith.constant 6 : i32
    %255 = arith.truncf %244 : vector<16x64xf32> to vector<16x64xbf16>
    %cst_75 = arith.constant dense<0.000000e+00> : vector<16x512xf32>
    %256 = tpu.matmul %255, %13, %cst_75 {dimension_numbers = #tpu.dot_dimension_numbers<[1], [0], [0], [1], [0, 0, 1, 1], [], []>} : vector<16x64xbf16>, vector<64x512xbf16>, vector<16x512xf32> -> vector<16x512xf32>
    %c7_i32_76 = arith.constant 7 : i32
    %257 = arith.subi %c7_i32_76, %c6_i32 : i32
    %258 = arith.index_cast %c6_i32 : i32 to index
    %c0_77 = arith.constant 0 : index
    %c0_78 = arith.constant 0 : index
    %259 = vector.load %arg13[%258, %c0_77, %c0_78] : memref<8x8x512xf32, #tpu.memory_space<vmem>>, vector<1x8x256xf32>
    %260 = vector.shape_cast %259 : vector<1x8x256xf32> to vector<8x256xf32>
    %261 = vector.extract_strided_slice %256 {offsets = [0, 0], sizes = [8, 256], strides = [1, 1]} : vector<16x512xf32> to vector<8x256xf32>
    %262 = arith.addf %260, %261 : vector<8x256xf32>
    %263 = arith.index_cast %257 : i32 to index
    %c0_79 = arith.constant 0 : index
    %c256_80 = arith.constant 256 : index
    %264 = vector.load %arg13[%263, %c0_79, %c256_80] : memref<8x8x512xf32, #tpu.memory_space<vmem>>, vector<1x8x256xf32>
    %265 = vector.shape_cast %264 : vector<1x8x256xf32> to vector<8x256xf32>
    %266 = vector.extract_strided_slice %256 {offsets = [8, 256], sizes = [8, 256], strides = [1, 1]} : vector<16x512xf32> to vector<8x256xf32>
    %267 = arith.addf %265, %266 : vector<8x256xf32>
    %268 = tpu.concatenate %262, %267 in 0 : vector<8x256xf32>, vector<8x256xf32> -> vector<16x256xf32>
    %269 = vector.extract_strided_slice %268 {offsets = [0, 0], sizes = [16, 192], strides = [1, 1]} : vector<16x256xf32> to vector<16x192xf32>
    %270 = arith.negf %269 : vector<16x192xf32>
    %271 = math.exp %270 : vector<16x192xf32>
    %cst_81 = arith.constant 1.000000e+00 : f32
    %272 = vector.broadcast %cst_81 : f32 to vector<16x192xf32>
    %273 = arith.addf %272, %271 : vector<16x192xf32>
    %274 = arith.divf %272, %273 : vector<16x192xf32>
    %275 = vector.extract_strided_slice %268 {offsets = [0, 192], sizes = [16, 64], strides = [1, 1]} : vector<16x256xf32> to vector<16x64xf32>
    %276 = math.tanh %275 : vector<16x64xf32>
    %277 = vector.extract_strided_slice %274 {offsets = [0, 64], sizes = [16, 64], strides = [1, 1]} : vector<16x192xf32> to vector<16x64xf32>
    %278 = arith.mulf %277, %241 : vector<16x64xf32>
    %279 = vector.extract_strided_slice %274 {offsets = [0, 0], sizes = [16, 64], strides = [1, 1]} : vector<16x192xf32> to vector<16x64xf32>
    %280 = arith.mulf %279, %276 : vector<16x64xf32>
    %281 = arith.addf %278, %280 : vector<16x64xf32>
    %282 = vector.extract_strided_slice %274 {offsets = [0, 128], sizes = [16, 64], strides = [1, 1]} : vector<16x192xf32> to vector<16x64xf32>
    %283 = math.tanh %281 : vector<16x64xf32>
    %284 = arith.mulf %282, %283 : vector<16x64xf32>
    %285 = vector.extract_strided_slice %284 {offsets = [0, 0], sizes = [8, 64], strides = [1, 1]} : vector<16x64xf32> to vector<8x64xf32>
    %286 = arith.index_cast %c6_i32 : i32 to index
    %c0_82 = arith.constant 0 : index
    %c0_83 = arith.constant 0 : index
    %287 = vector.load %arg14[%286, %c0_82, %c0_83] : memref<8x16x64xf32, #tpu.memory_space<vmem>>, vector<1x8x64xf32>
    %288 = vector.shape_cast %287 : vector<1x8x64xf32> to vector<8x64xf32>
    %289 = vector.shape_cast %285 : vector<8x64xf32> to vector<1x8x64xf32>
    tpu.vector_store %arg14[%286, %c0_82, %c0_83], %289 {strides = array<i32>} : memref<8x16x64xf32, #tpu.memory_space<vmem>>, vector<1x8x64xf32>,
    %290 = vector.extract_strided_slice %284 {offsets = [8, 0], sizes = [8, 64], strides = [1, 1]} : vector<16x64xf32> to vector<8x64xf32>
    %291 = arith.index_cast %257 : i32 to index
    %c8_84 = arith.constant 8 : index
    %c0_85 = arith.constant 0 : index
    %292 = vector.load %arg14[%291, %c8_84, %c0_85] : memref<8x16x64xf32, #tpu.memory_space<vmem>>, vector<1x8x64xf32>
    %293 = vector.shape_cast %292 : vector<1x8x64xf32> to vector<8x64xf32>
    %294 = vector.shape_cast %290 : vector<8x64xf32> to vector<1x8x64xf32>
    tpu.vector_store %arg14[%291, %c8_84, %c0_85], %294 {strides = array<i32>} : memref<8x16x64xf32, #tpu.memory_space<vmem>>, vector<1x8x64xf32>,
    %c7_i32_86 = arith.constant 7 : i32
    %295 = arith.truncf %284 : vector<16x64xf32> to vector<16x64xbf16>
    %cst_87 = arith.constant dense<0.000000e+00> : vector<16x512xf32>
    %296 = tpu.matmul %295, %13, %cst_87 {dimension_numbers = #tpu.dot_dimension_numbers<[1], [0], [0], [1], [0, 0, 1, 1], [], []>} : vector<16x64xbf16>, vector<64x512xbf16>, vector<16x512xf32> -> vector<16x512xf32>
    %c7_i32_88 = arith.constant 7 : i32
    %297 = arith.subi %c7_i32_88, %c7_i32_86 : i32
    %298 = arith.index_cast %c7_i32_86 : i32 to index
    %c0_89 = arith.constant 0 : index
    %c0_90 = arith.constant 0 : index
    %299 = vector.load %arg13[%298, %c0_89, %c0_90] : memref<8x8x512xf32, #tpu.memory_space<vmem>>, vector<1x8x256xf32>
    %300 = vector.shape_cast %299 : vector<1x8x256xf32> to vector<8x256xf32>
    %301 = vector.extract_strided_slice %296 {offsets = [0, 0], sizes = [8, 256], strides = [1, 1]} : vector<16x512xf32> to vector<8x256xf32>
    %302 = arith.addf %300, %301 : vector<8x256xf32>
    %303 = arith.index_cast %297 : i32 to index
    %c0_91 = arith.constant 0 : index
    %c256_92 = arith.constant 256 : index
    %304 = vector.load %arg13[%303, %c0_91, %c256_92] : memref<8x8x512xf32, #tpu.memory_space<vmem>>, vector<1x8x256xf32>
    %305 = vector.shape_cast %304 : vector<1x8x256xf32> to vector<8x256xf32>
    %306 = vector.extract_strided_slice %296 {offsets = [8, 256], sizes = [8, 256], strides = [1, 1]} : vector<16x512xf32> to vector<8x256xf32>
    %307 = arith.addf %305, %306 : vector<8x256xf32>
    %308 = tpu.concatenate %302, %307 in 0 : vector<8x256xf32>, vector<8x256xf32> -> vector<16x256xf32>
    %309 = vector.extract_strided_slice %308 {offsets = [0, 0], sizes = [16, 192], strides = [1, 1]} : vector<16x256xf32> to vector<16x192xf32>
    %310 = arith.negf %309 : vector<16x192xf32>
    %311 = math.exp %310 : vector<16x192xf32>
    %cst_93 = arith.constant 1.000000e+00 : f32
    %312 = vector.broadcast %cst_93 : f32 to vector<16x192xf32>
    %313 = arith.addf %312, %311 : vector<16x192xf32>
    %314 = arith.divf %312, %313 : vector<16x192xf32>
    %315 = vector.extract_strided_slice %308 {offsets = [0, 192], sizes = [16, 64], strides = [1, 1]} : vector<16x256xf32> to vector<16x64xf32>
    %316 = math.tanh %315 : vector<16x64xf32>
    %317 = vector.extract_strided_slice %314 {offsets = [0, 64], sizes = [16, 64], strides = [1, 1]} : vector<16x192xf32> to vector<16x64xf32>
    %318 = arith.mulf %317, %281 : vector<16x64xf32>
    %319 = vector.extract_strided_slice %314 {offsets = [0, 0], sizes = [16, 64], strides = [1, 1]} : vector<16x192xf32> to vector<16x64xf32>
    %320 = arith.mulf %319, %316 : vector<16x64xf32>
    %321 = arith.addf %318, %320 : vector<16x64xf32>
    %322 = vector.extract_strided_slice %314 {offsets = [0, 128], sizes = [16, 64], strides = [1, 1]} : vector<16x192xf32> to vector<16x64xf32>
    %323 = math.tanh %321 : vector<16x64xf32>
    %324 = arith.mulf %322, %323 : vector<16x64xf32>
    %325 = vector.extract_strided_slice %324 {offsets = [0, 0], sizes = [8, 64], strides = [1, 1]} : vector<16x64xf32> to vector<8x64xf32>
    %326 = arith.index_cast %c7_i32_86 : i32 to index
    %c0_94 = arith.constant 0 : index
    %c0_95 = arith.constant 0 : index
    %327 = vector.load %arg14[%326, %c0_94, %c0_95] : memref<8x16x64xf32, #tpu.memory_space<vmem>>, vector<1x8x64xf32>
    %328 = vector.shape_cast %327 : vector<1x8x64xf32> to vector<8x64xf32>
    %329 = vector.shape_cast %325 : vector<8x64xf32> to vector<1x8x64xf32>
    tpu.vector_store %arg14[%326, %c0_94, %c0_95], %329 {strides = array<i32>} : memref<8x16x64xf32, #tpu.memory_space<vmem>>, vector<1x8x64xf32>,
    %330 = vector.extract_strided_slice %324 {offsets = [8, 0], sizes = [8, 64], strides = [1, 1]} : vector<16x64xf32> to vector<8x64xf32>
    %331 = arith.index_cast %297 : i32 to index
    %c8_96 = arith.constant 8 : index
    %c0_97 = arith.constant 0 : index
    %332 = vector.load %arg14[%331, %c8_96, %c0_97] : memref<8x16x64xf32, #tpu.memory_space<vmem>>, vector<1x8x64xf32>
    %333 = vector.shape_cast %332 : vector<1x8x64xf32> to vector<8x64xf32>
    %334 = vector.shape_cast %330 : vector<8x64xf32> to vector<1x8x64xf32>
    tpu.vector_store %arg14[%331, %c8_96, %c0_97], %334 {strides = array<i32>} : memref<8x16x64xf32, #tpu.memory_space<vmem>>, vector<1x8x64xf32>,
    %c8_i32_98 = arith.constant 8 : i32
    %c0_99 = arith.constant 0 : index
    %c0_100 = arith.constant 0 : index
    %335 = vector.load %arg5[%c0_99, %c0_100] : memref<128x512xbf16, #tpu.memory_space<vmem>>, vector<64x512xbf16>
    %c64 = arith.constant 64 : index
    %c0_101 = arith.constant 0 : index
    %336 = vector.load %arg5[%c64, %c0_101] : memref<128x512xbf16, #tpu.memory_space<vmem>>, vector<64x512xbf16>
    %c0_102 = arith.constant 0 : index
    %c0_103 = arith.constant 0 : index
    %337 = vector.load %arg7[%c0_102, %c0_103] : memref<1x512xf32, #tpu.memory_space<vmem>>, vector<1x512xf32>
    %c0_i32_104 = arith.constant 0 : i32
    %c8_i32_105 = arith.constant 8 : i32
    %338 = arith.muli %c0_i32_104, %c8_i32_105 : i32
    %339 = tpu.assume_multiple %338, 8 : i32
    %340 = arith.index_cast %339 : i32 to index
    %c0_106 = arith.constant 0 : index
    %c0_107 = arith.constant 0 : index
    %341 = vector.load %arg14[%340, %c0_106, %c0_107] : memref<8x16x64xf32, #tpu.memory_space<vmem>>, vector<8x8x64xf32>
    %342 = vector.shape_cast %341 : vector<8x8x64xf32> to vector<64x64xf32>
    %343 = arith.truncf %342 : vector<64x64xf32> to vector<64x64xbf16>
    %344 = arith.index_cast %339 : i32 to index
    %c8_108 = arith.constant 8 : index
    %c0_109 = arith.constant 0 : index
    %345 = vector.load %arg14[%344, %c8_108, %c0_109] : memref<8x16x64xf32, #tpu.memory_space<vmem>>, vector<8x8x64xf32>
    %346 = vector.shape_cast %345 : vector<8x8x64xf32> to vector<64x64xf32>
    %347 = arith.truncf %346 : vector<64x64xf32> to vector<64x64xbf16>
    %cst_110 = arith.constant dense<0.000000e+00> : vector<64x512xf32>
    %348 = tpu.matmul %343, %335, %cst_110 {dimension_numbers = #tpu.dot_dimension_numbers<[1], [0], [0], [1], [0, 0, 1, 1], [], []>} : vector<64x64xbf16>, vector<64x512xbf16>, vector<64x512xf32> -> vector<64x512xf32>
    %cst_111 = arith.constant dense<0.000000e+00> : vector<64x512xf32>
    %349 = tpu.matmul %347, %336, %cst_111 {dimension_numbers = #tpu.dot_dimension_numbers<[1], [0], [0], [1], [0, 0, 1, 1], [], []>} : vector<64x64xbf16>, vector<64x512xbf16>, vector<64x512xf32> -> vector<64x512xf32>
    %350 = arith.addf %348, %349 : vector<64x512xf32>
    %351 = vector.broadcast %337 : vector<1x512xf32> to vector<64x512xf32>
    %352 = arith.addf %350, %351 : vector<64x512xf32>
    %353 = vector.shape_cast %352 : vector<64x512xf32> to vector<8x8x512xf32>
    %354 = arith.index_cast %339 : i32 to index
    %c0_112 = arith.constant 0 : index
    %c0_113 = arith.constant 0 : index
    %355 = vector.load %arg13[%354, %c0_112, %c0_113] : memref<8x8x512xf32, #tpu.memory_space<vmem>>, vector<8x8x512xf32>
    tpu.vector_store %arg13[%354, %c0_112, %c0_113], %353 {strides = array<i32>} : memref<8x8x512xf32, #tpu.memory_space<vmem>>, vector<8x8x512xf32>,
    %c1_i32_114 = arith.constant 1 : i32
    %c0_115 = arith.constant 0 : index
    %c0_116 = arith.constant 0 : index
    %356 = vector.load %arg6[%c0_115, %c0_116] : memref<64x512xbf16, #tpu.memory_space<vmem>>, vector<64x512xbf16>
    %cst_117 = arith.constant 0.000000e+00 : f32
    %357 = vector.broadcast %cst_117 : f32 to vector<16x64xf32>
    %c0_i32_118 = arith.constant 0 : i32
    %358 = arith.truncf %357 : vector<16x64xf32> to vector<16x64xbf16>
    %cst_119 = arith.constant dense<0.000000e+00> : vector<16x512xf32>
    %359 = tpu.matmul %358, %356, %cst_119 {dimension_numbers = #tpu.dot_dimension_numbers<[1], [0], [0], [1], [0, 0, 1, 1], [], []>} : vector<16x64xbf16>, vector<64x512xbf16>, vector<16x512xf32> -> vector<16x512xf32>
    %c7_i32_120 = arith.constant 7 : i32
    %360 = arith.subi %c7_i32_120, %c0_i32_118 : i32
    %361 = arith.index_cast %c0_i32_118 : i32 to index
    %c0_121 = arith.constant 0 : index
    %c0_122 = arith.constant 0 : index
    %362 = vector.load %arg13[%361, %c0_121, %c0_122] : memref<8x8x512xf32, #tpu.memory_space<vmem>>, vector<1x8x256xf32>
    %363 = vector.shape_cast %362 : vector<1x8x256xf32> to vector<8x256xf32>
    %364 = vector.extract_strided_slice %359 {offsets = [0, 0], sizes = [8, 256], strides = [1, 1]} : vector<16x512xf32> to vector<8x256xf32>
    %365 = arith.addf %363, %364 : vector<8x256xf32>
    %366 = arith.index_cast %360 : i32 to index
    %c0_123 = arith.constant 0 : index
    %c256_124 = arith.constant 256 : index
    %367 = vector.load %arg13[%366, %c0_123, %c256_124] : memref<8x8x512xf32, #tpu.memory_space<vmem>>, vector<1x8x256xf32>
    %368 = vector.shape_cast %367 : vector<1x8x256xf32> to vector<8x256xf32>
    %369 = vector.extract_strided_slice %359 {offsets = [8, 256], sizes = [8, 256], strides = [1, 1]} : vector<16x512xf32> to vector<8x256xf32>
    %370 = arith.addf %368, %369 : vector<8x256xf32>
    %371 = tpu.concatenate %365, %370 in 0 : vector<8x256xf32>, vector<8x256xf32> -> vector<16x256xf32>
    %372 = vector.extract_strided_slice %371 {offsets = [0, 0], sizes = [16, 192], strides = [1, 1]} : vector<16x256xf32> to vector<16x192xf32>
    %373 = arith.negf %372 : vector<16x192xf32>
    %374 = math.exp %373 : vector<16x192xf32>
    %cst_125 = arith.constant 1.000000e+00 : f32
    %375 = vector.broadcast %cst_125 : f32 to vector<16x192xf32>
    %376 = arith.addf %375, %374 : vector<16x192xf32>
    %377 = arith.divf %375, %376 : vector<16x192xf32>
    %378 = vector.extract_strided_slice %371 {offsets = [0, 192], sizes = [16, 64], strides = [1, 1]} : vector<16x256xf32> to vector<16x64xf32>
    %379 = math.tanh %378 : vector<16x64xf32>
    %380 = vector.extract_strided_slice %377 {offsets = [0, 64], sizes = [16, 64], strides = [1, 1]} : vector<16x192xf32> to vector<16x64xf32>
    %381 = arith.mulf %380, %357 : vector<16x64xf32>
    %382 = vector.extract_strided_slice %377 {offsets = [0, 0], sizes = [16, 64], strides = [1, 1]} : vector<16x192xf32> to vector<16x64xf32>
    %383 = arith.mulf %382, %379 : vector<16x64xf32>
    %384 = arith.addf %381, %383 : vector<16x64xf32>
    %385 = vector.extract_strided_slice %377 {offsets = [0, 128], sizes = [16, 64], strides = [1, 1]} : vector<16x192xf32> to vector<16x64xf32>
    %386 = math.tanh %384 : vector<16x64xf32>
    %387 = arith.mulf %385, %386 : vector<16x64xf32>
    %388 = arith.addf %357, %387 : vector<16x64xf32>
    %c1_i32_126 = arith.constant 1 : i32
    %389 = arith.truncf %387 : vector<16x64xf32> to vector<16x64xbf16>
    %cst_127 = arith.constant dense<0.000000e+00> : vector<16x512xf32>
    %390 = tpu.matmul %389, %356, %cst_127 {dimension_numbers = #tpu.dot_dimension_numbers<[1], [0], [0], [1], [0, 0, 1, 1], [], []>} : vector<16x64xbf16>, vector<64x512xbf16>, vector<16x512xf32> -> vector<16x512xf32>
    %c7_i32_128 = arith.constant 7 : i32
    %391 = arith.subi %c7_i32_128, %c1_i32_126 : i32
    %392 = arith.index_cast %c1_i32_126 : i32 to index
    %c0_129 = arith.constant 0 : index
    %c0_130 = arith.constant 0 : index
    %393 = vector.load %arg13[%392, %c0_129, %c0_130] : memref<8x8x512xf32, #tpu.memory_space<vmem>>, vector<1x8x256xf32>
    %394 = vector.shape_cast %393 : vector<1x8x256xf32> to vector<8x256xf32>
    %395 = vector.extract_strided_slice %390 {offsets = [0, 0], sizes = [8, 256], strides = [1, 1]} : vector<16x512xf32> to vector<8x256xf32>
    %396 = arith.addf %394, %395 : vector<8x256xf32>
    %397 = arith.index_cast %391 : i32 to index
    %c0_131 = arith.constant 0 : index
    %c256_132 = arith.constant 256 : index
    %398 = vector.load %arg13[%397, %c0_131, %c256_132] : memref<8x8x512xf32, #tpu.memory_space<vmem>>, vector<1x8x256xf32>
    %399 = vector.shape_cast %398 : vector<1x8x256xf32> to vector<8x256xf32>
    %400 = vector.extract_strided_slice %390 {offsets = [8, 256], sizes = [8, 256], strides = [1, 1]} : vector<16x512xf32> to vector<8x256xf32>
    %401 = arith.addf %399, %400 : vector<8x256xf32>
    %402 = tpu.concatenate %396, %401 in 0 : vector<8x256xf32>, vector<8x256xf32> -> vector<16x256xf32>
    %403 = vector.extract_strided_slice %402 {offsets = [0, 0], sizes = [16, 192], strides = [1, 1]} : vector<16x256xf32> to vector<16x192xf32>
    %404 = arith.negf %403 : vector<16x192xf32>
    %405 = math.exp %404 : vector<16x192xf32>
    %cst_133 = arith.constant 1.000000e+00 : f32
    %406 = vector.broadcast %cst_133 : f32 to vector<16x192xf32>
    %407 = arith.addf %406, %405 : vector<16x192xf32>
    %408 = arith.divf %406, %407 : vector<16x192xf32>
    %409 = vector.extract_strided_slice %402 {offsets = [0, 192], sizes = [16, 64], strides = [1, 1]} : vector<16x256xf32> to vector<16x64xf32>
    %410 = math.tanh %409 : vector<16x64xf32>
    %411 = vector.extract_strided_slice %408 {offsets = [0, 64], sizes = [16, 64], strides = [1, 1]} : vector<16x192xf32> to vector<16x64xf32>
    %412 = arith.mulf %411, %384 : vector<16x64xf32>
    %413 = vector.extract_strided_slice %408 {offsets = [0, 0], sizes = [16, 64], strides = [1, 1]} : vector<16x192xf32> to vector<16x64xf32>
    %414 = arith.mulf %413, %410 : vector<16x64xf32>
    %415 = arith.addf %412, %414 : vector<16x64xf32>
    %416 = vector.extract_strided_slice %408 {offsets = [0, 128], sizes = [16, 64], strides = [1, 1]} : vector<16x192xf32> to vector<16x64xf32>
    %417 = math.tanh %415 : vector<16x64xf32>
    %418 = arith.mulf %416, %417 : vector<16x64xf32>
    %419 = arith.addf %388, %418 : vector<16x64xf32>
    %c2_i32_134 = arith.constant 2 : i32
    %420 = arith.truncf %418 : vector<16x64xf32> to vector<16x64xbf16>
    %cst_135 = arith.constant dense<0.000000e+00> : vector<16x512xf32>
    %421 = tpu.matmul %420, %356, %cst_135 {dimension_numbers = #tpu.dot_dimension_numbers<[1], [0], [0], [1], [0, 0, 1, 1], [], []>} : vector<16x64xbf16>, vector<64x512xbf16>, vector<16x512xf32> -> vector<16x512xf32>
    %c7_i32_136 = arith.constant 7 : i32
    %422 = arith.subi %c7_i32_136, %c2_i32_134 : i32
    %423 = arith.index_cast %c2_i32_134 : i32 to index
    %c0_137 = arith.constant 0 : index
    %c0_138 = arith.constant 0 : index
    %424 = vector.load %arg13[%423, %c0_137, %c0_138] : memref<8x8x512xf32, #tpu.memory_space<vmem>>, vector<1x8x256xf32>
    %425 = vector.shape_cast %424 : vector<1x8x256xf32> to vector<8x256xf32>
    %426 = vector.extract_strided_slice %421 {offsets = [0, 0], sizes = [8, 256], strides = [1, 1]} : vector<16x512xf32> to vector<8x256xf32>
    %427 = arith.addf %425, %426 : vector<8x256xf32>
    %428 = arith.index_cast %422 : i32 to index
    %c0_139 = arith.constant 0 : index
    %c256_140 = arith.constant 256 : index
    %429 = vector.load %arg13[%428, %c0_139, %c256_140] : memref<8x8x512xf32, #tpu.memory_space<vmem>>, vector<1x8x256xf32>
    %430 = vector.shape_cast %429 : vector<1x8x256xf32> to vector<8x256xf32>
    %431 = vector.extract_strided_slice %421 {offsets = [8, 256], sizes = [8, 256], strides = [1, 1]} : vector<16x512xf32> to vector<8x256xf32>
    %432 = arith.addf %430, %431 : vector<8x256xf32>
    %433 = tpu.concatenate %427, %432 in 0 : vector<8x256xf32>, vector<8x256xf32> -> vector<16x256xf32>
    %434 = vector.extract_strided_slice %433 {offsets = [0, 0], sizes = [16, 192], strides = [1, 1]} : vector<16x256xf32> to vector<16x192xf32>
    %435 = arith.negf %434 : vector<16x192xf32>
    %436 = math.exp %435 : vector<16x192xf32>
    %cst_141 = arith.constant 1.000000e+00 : f32
    %437 = vector.broadcast %cst_141 : f32 to vector<16x192xf32>
    %438 = arith.addf %437, %436 : vector<16x192xf32>
    %439 = arith.divf %437, %438 : vector<16x192xf32>
    %440 = vector.extract_strided_slice %433 {offsets = [0, 192], sizes = [16, 64], strides = [1, 1]} : vector<16x256xf32> to vector<16x64xf32>
    %441 = math.tanh %440 : vector<16x64xf32>
    %442 = vector.extract_strided_slice %439 {offsets = [0, 64], sizes = [16, 64], strides = [1, 1]} : vector<16x192xf32> to vector<16x64xf32>
    %443 = arith.mulf %442, %415 : vector<16x64xf32>
    %444 = vector.extract_strided_slice %439 {offsets = [0, 0], sizes = [16, 64], strides = [1, 1]} : vector<16x192xf32> to vector<16x64xf32>
    %445 = arith.mulf %444, %441 : vector<16x64xf32>
    %446 = arith.addf %443, %445 : vector<16x64xf32>
    %447 = vector.extract_strided_slice %439 {offsets = [0, 128], sizes = [16, 64], strides = [1, 1]} : vector<16x192xf32> to vector<16x64xf32>
    %448 = math.tanh %446 : vector<16x64xf32>
    %449 = arith.mulf %447, %448 : vector<16x64xf32>
    %450 = arith.addf %419, %449 : vector<16x64xf32>
    %c3_i32_142 = arith.constant 3 : i32
    %451 = arith.truncf %449 : vector<16x64xf32> to vector<16x64xbf16>
    %cst_143 = arith.constant dense<0.000000e+00> : vector<16x512xf32>
    %452 = tpu.matmul %451, %356, %cst_143 {dimension_numbers = #tpu.dot_dimension_numbers<[1], [0], [0], [1], [0, 0, 1, 1], [], []>} : vector<16x64xbf16>, vector<64x512xbf16>, vector<16x512xf32> -> vector<16x512xf32>
    %c7_i32_144 = arith.constant 7 : i32
    %453 = arith.subi %c7_i32_144, %c3_i32_142 : i32
    %454 = arith.index_cast %c3_i32_142 : i32 to index
    %c0_145 = arith.constant 0 : index
    %c0_146 = arith.constant 0 : index
    %455 = vector.load %arg13[%454, %c0_145, %c0_146] : memref<8x8x512xf32, #tpu.memory_space<vmem>>, vector<1x8x256xf32>
    %456 = vector.shape_cast %455 : vector<1x8x256xf32> to vector<8x256xf32>
    %457 = vector.extract_strided_slice %452 {offsets = [0, 0], sizes = [8, 256], strides = [1, 1]} : vector<16x512xf32> to vector<8x256xf32>
    %458 = arith.addf %456, %457 : vector<8x256xf32>
    %459 = arith.index_cast %453 : i32 to index
    %c0_147 = arith.constant 0 : index
    %c256_148 = arith.constant 256 : index
    %460 = vector.load %arg13[%459, %c0_147, %c256_148] : memref<8x8x512xf32, #tpu.memory_space<vmem>>, vector<1x8x256xf32>
    %461 = vector.shape_cast %460 : vector<1x8x256xf32> to vector<8x256xf32>
    %462 = vector.extract_strided_slice %452 {offsets = [8, 256], sizes = [8, 256], strides = [1, 1]} : vector<16x512xf32> to vector<8x256xf32>
    %463 = arith.addf %461, %462 : vector<8x256xf32>
    %464 = tpu.concatenate %458, %463 in 0 : vector<8x256xf32>, vector<8x256xf32> -> vector<16x256xf32>
    %465 = vector.extract_strided_slice %464 {offsets = [0, 0], sizes = [16, 192], strides = [1, 1]} : vector<16x256xf32> to vector<16x192xf32>
    %466 = arith.negf %465 : vector<16x192xf32>
    %467 = math.exp %466 : vector<16x192xf32>
    %cst_149 = arith.constant 1.000000e+00 : f32
    %468 = vector.broadcast %cst_149 : f32 to vector<16x192xf32>
    %469 = arith.addf %468, %467 : vector<16x192xf32>
    %470 = arith.divf %468, %469 : vector<16x192xf32>
    %471 = vector.extract_strided_slice %464 {offsets = [0, 192], sizes = [16, 64], strides = [1, 1]} : vector<16x256xf32> to vector<16x64xf32>
    %472 = math.tanh %471 : vector<16x64xf32>
    %473 = vector.extract_strided_slice %470 {offsets = [0, 64], sizes = [16, 64], strides = [1, 1]} : vector<16x192xf32> to vector<16x64xf32>
    %474 = arith.mulf %473, %446 : vector<16x64xf32>
    %475 = vector.extract_strided_slice %470 {offsets = [0, 0], sizes = [16, 64], strides = [1, 1]} : vector<16x192xf32> to vector<16x64xf32>
    %476 = arith.mulf %475, %472 : vector<16x64xf32>
    %477 = arith.addf %474, %476 : vector<16x64xf32>
    %478 = vector.extract_strided_slice %470 {offsets = [0, 128], sizes = [16, 64], strides = [1, 1]} : vector<16x192xf32> to vector<16x64xf32>
    %479 = math.tanh %477 : vector<16x64xf32>
    %480 = arith.mulf %478, %479 : vector<16x64xf32>
    %481 = arith.addf %450, %480 : vector<16x64xf32>
    %c4_i32_150 = arith.constant 4 : i32
    %482 = arith.truncf %480 : vector<16x64xf32> to vector<16x64xbf16>
    %cst_151 = arith.constant dense<0.000000e+00> : vector<16x512xf32>
    %483 = tpu.matmul %482, %356, %cst_151 {dimension_numbers = #tpu.dot_dimension_numbers<[1], [0], [0], [1], [0, 0, 1, 1], [], []>} : vector<16x64xbf16>, vector<64x512xbf16>, vector<16x512xf32> -> vector<16x512xf32>
    %c7_i32_152 = arith.constant 7 : i32
    %484 = arith.subi %c7_i32_152, %c4_i32_150 : i32
    %485 = arith.index_cast %c4_i32_150 : i32 to index
    %c0_153 = arith.constant 0 : index
    %c0_154 = arith.constant 0 : index
    %486 = vector.load %arg13[%485, %c0_153, %c0_154] : memref<8x8x512xf32, #tpu.memory_space<vmem>>, vector<1x8x256xf32>
    %487 = vector.shape_cast %486 : vector<1x8x256xf32> to vector<8x256xf32>
    %488 = vector.extract_strided_slice %483 {offsets = [0, 0], sizes = [8, 256], strides = [1, 1]} : vector<16x512xf32> to vector<8x256xf32>
    %489 = arith.addf %487, %488 : vector<8x256xf32>
    %490 = arith.index_cast %484 : i32 to index
    %c0_155 = arith.constant 0 : index
    %c256_156 = arith.constant 256 : index
    %491 = vector.load %arg13[%490, %c0_155, %c256_156] : memref<8x8x512xf32, #tpu.memory_space<vmem>>, vector<1x8x256xf32>
    %492 = vector.shape_cast %491 : vector<1x8x256xf32> to vector<8x256xf32>
    %493 = vector.extract_strided_slice %483 {offsets = [8, 256], sizes = [8, 256], strides = [1, 1]} : vector<16x512xf32> to vector<8x256xf32>
    %494 = arith.addf %492, %493 : vector<8x256xf32>
    %495 = tpu.concatenate %489, %494 in 0 : vector<8x256xf32>, vector<8x256xf32> -> vector<16x256xf32>
    %496 = vector.extract_strided_slice %495 {offsets = [0, 0], sizes = [16, 192], strides = [1, 1]} : vector<16x256xf32> to vector<16x192xf32>
    %497 = arith.negf %496 : vector<16x192xf32>
    %498 = math.exp %497 : vector<16x192xf32>
    %cst_157 = arith.constant 1.000000e+00 : f32
    %499 = vector.broadcast %cst_157 : f32 to vector<16x192xf32>
    %500 = arith.addf %499, %498 : vector<16x192xf32>
    %501 = arith.divf %499, %500 : vector<16x192xf32>
    %502 = vector.extract_strided_slice %495 {offsets = [0, 192], sizes = [16, 64], strides = [1, 1]} : vector<16x256xf32> to vector<16x64xf32>
    %503 = math.tanh %502 : vector<16x64xf32>
    %504 = vector.extract_strided_slice %501 {offsets = [0, 64], sizes = [16, 64], strides = [1, 1]} : vector<16x192xf32> to vector<16x64xf32>
    %505 = arith.mulf %504, %477 : vector<16x64xf32>
    %506 = vector.extract_strided_slice %501 {offsets = [0, 0], sizes = [16, 64], strides = [1, 1]} : vector<16x192xf32> to vector<16x64xf32>
    %507 = arith.mulf %506, %503 : vector<16x64xf32>
    %508 = arith.addf %505, %507 : vector<16x64xf32>
    %509 = vector.extract_strided_slice %501 {offsets = [0, 128], sizes = [16, 64], strides = [1, 1]} : vector<16x192xf32> to vector<16x64xf32>
    %510 = math.tanh %508 : vector<16x64xf32>
    %511 = arith.mulf %509, %510 : vector<16x64xf32>
    %512 = arith.addf %481, %511 : vector<16x64xf32>
    %c5_i32_158 = arith.constant 5 : i32
    %513 = arith.truncf %511 : vector<16x64xf32> to vector<16x64xbf16>
    %cst_159 = arith.constant dense<0.000000e+00> : vector<16x512xf32>
    %514 = tpu.matmul %513, %356, %cst_159 {dimension_numbers = #tpu.dot_dimension_numbers<[1], [0], [0], [1], [0, 0, 1, 1], [], []>} : vector<16x64xbf16>, vector<64x512xbf16>, vector<16x512xf32> -> vector<16x512xf32>
    %c7_i32_160 = arith.constant 7 : i32
    %515 = arith.subi %c7_i32_160, %c5_i32_158 : i32
    %516 = arith.index_cast %c5_i32_158 : i32 to index
    %c0_161 = arith.constant 0 : index
    %c0_162 = arith.constant 0 : index
    %517 = vector.load %arg13[%516, %c0_161, %c0_162] : memref<8x8x512xf32, #tpu.memory_space<vmem>>, vector<1x8x256xf32>
    %518 = vector.shape_cast %517 : vector<1x8x256xf32> to vector<8x256xf32>
    %519 = vector.extract_strided_slice %514 {offsets = [0, 0], sizes = [8, 256], strides = [1, 1]} : vector<16x512xf32> to vector<8x256xf32>
    %520 = arith.addf %518, %519 : vector<8x256xf32>
    %521 = arith.index_cast %515 : i32 to index
    %c0_163 = arith.constant 0 : index
    %c256_164 = arith.constant 256 : index
    %522 = vector.load %arg13[%521, %c0_163, %c256_164] : memref<8x8x512xf32, #tpu.memory_space<vmem>>, vector<1x8x256xf32>
    %523 = vector.shape_cast %522 : vector<1x8x256xf32> to vector<8x256xf32>
    %524 = vector.extract_strided_slice %514 {offsets = [8, 256], sizes = [8, 256], strides = [1, 1]} : vector<16x512xf32> to vector<8x256xf32>
    %525 = arith.addf %523, %524 : vector<8x256xf32>
    %526 = tpu.concatenate %520, %525 in 0 : vector<8x256xf32>, vector<8x256xf32> -> vector<16x256xf32>
    %527 = vector.extract_strided_slice %526 {offsets = [0, 0], sizes = [16, 192], strides = [1, 1]} : vector<16x256xf32> to vector<16x192xf32>
    %528 = arith.negf %527 : vector<16x192xf32>
    %529 = math.exp %528 : vector<16x192xf32>
    %cst_165 = arith.constant 1.000000e+00 : f32
    %530 = vector.broadcast %cst_165 : f32 to vector<16x192xf32>
    %531 = arith.addf %530, %529 : vector<16x192xf32>
    %532 = arith.divf %530, %531 : vector<16x192xf32>
    %533 = vector.extract_strided_slice %526 {offsets = [0, 192], sizes = [16, 64], strides = [1, 1]} : vector<16x256xf32> to vector<16x64xf32>
    %534 = math.tanh %533 : vector<16x64xf32>
    %535 = vector.extract_strided_slice %532 {offsets = [0, 64], sizes = [16, 64], strides = [1, 1]} : vector<16x192xf32> to vector<16x64xf32>
    %536 = arith.mulf %535, %508 : vector<16x64xf32>
    %537 = vector.extract_strided_slice %532 {offsets = [0, 0], sizes = [16, 64], strides = [1, 1]} : vector<16x192xf32> to vector<16x64xf32>
    %538 = arith.mulf %537, %534 : vector<16x64xf32>
    %539 = arith.addf %536, %538 : vector<16x64xf32>
    %540 = vector.extract_strided_slice %532 {offsets = [0, 128], sizes = [16, 64], strides = [1, 1]} : vector<16x192xf32> to vector<16x64xf32>
    %541 = math.tanh %539 : vector<16x64xf32>
    %542 = arith.mulf %540, %541 : vector<16x64xf32>
    %543 = arith.addf %512, %542 : vector<16x64xf32>
    %c6_i32_166 = arith.constant 6 : i32
    %544 = arith.truncf %542 : vector<16x64xf32> to vector<16x64xbf16>
    %cst_167 = arith.constant dense<0.000000e+00> : vector<16x512xf32>
    %545 = tpu.matmul %544, %356, %cst_167 {dimension_numbers = #tpu.dot_dimension_numbers<[1], [0], [0], [1], [0, 0, 1, 1], [], []>} : vector<16x64xbf16>, vector<64x512xbf16>, vector<16x512xf32> -> vector<16x512xf32>
    %c7_i32_168 = arith.constant 7 : i32
    %546 = arith.subi %c7_i32_168, %c6_i32_166 : i32
    %547 = arith.index_cast %c6_i32_166 : i32 to index
    %c0_169 = arith.constant 0 : index
    %c0_170 = arith.constant 0 : index
    %548 = vector.load %arg13[%547, %c0_169, %c0_170] : memref<8x8x512xf32, #tpu.memory_space<vmem>>, vector<1x8x256xf32>
    %549 = vector.shape_cast %548 : vector<1x8x256xf32> to vector<8x256xf32>
    %550 = vector.extract_strided_slice %545 {offsets = [0, 0], sizes = [8, 256], strides = [1, 1]} : vector<16x512xf32> to vector<8x256xf32>
    %551 = arith.addf %549, %550 : vector<8x256xf32>
    %552 = arith.index_cast %546 : i32 to index
    %c0_171 = arith.constant 0 : index
    %c256_172 = arith.constant 256 : index
    %553 = vector.load %arg13[%552, %c0_171, %c256_172] : memref<8x8x512xf32, #tpu.memory_space<vmem>>, vector<1x8x256xf32>
    %554 = vector.shape_cast %553 : vector<1x8x256xf32> to vector<8x256xf32>
    %555 = vector.extract_strided_slice %545 {offsets = [8, 256], sizes = [8, 256], strides = [1, 1]} : vector<16x512xf32> to vector<8x256xf32>
    %556 = arith.addf %554, %555 : vector<8x256xf32>
    %557 = tpu.concatenate %551, %556 in 0 : vector<8x256xf32>, vector<8x256xf32> -> vector<16x256xf32>
    %558 = vector.extract_strided_slice %557 {offsets = [0, 0], sizes = [16, 192], strides = [1, 1]} : vector<16x256xf32> to vector<16x192xf32>
    %559 = arith.negf %558 : vector<16x192xf32>
    %560 = math.exp %559 : vector<16x192xf32>
    %cst_173 = arith.constant 1.000000e+00 : f32
    %561 = vector.broadcast %cst_173 : f32 to vector<16x192xf32>
    %562 = arith.addf %561, %560 : vector<16x192xf32>
    %563 = arith.divf %561, %562 : vector<16x192xf32>
    %564 = vector.extract_strided_slice %557 {offsets = [0, 192], sizes = [16, 64], strides = [1, 1]} : vector<16x256xf32> to vector<16x64xf32>
    %565 = math.tanh %564 : vector<16x64xf32>
    %566 = vector.extract_strided_slice %563 {offsets = [0, 64], sizes = [16, 64], strides = [1, 1]} : vector<16x192xf32> to vector<16x64xf32>
    %567 = arith.mulf %566, %539 : vector<16x64xf32>
    %568 = vector.extract_strided_slice %563 {offsets = [0, 0], sizes = [16, 64], strides = [1, 1]} : vector<16x192xf32> to vector<16x64xf32>
    %569 = arith.mulf %568, %565 : vector<16x64xf32>
    %570 = arith.addf %567, %569 : vector<16x64xf32>
    %571 = vector.extract_strided_slice %563 {offsets = [0, 128], sizes = [16, 64], strides = [1, 1]} : vector<16x192xf32> to vector<16x64xf32>
    %572 = math.tanh %570 : vector<16x64xf32>
    %573 = arith.mulf %571, %572 : vector<16x64xf32>
    %574 = arith.addf %543, %573 : vector<16x64xf32>
    %c7_i32_174 = arith.constant 7 : i32
    %575 = arith.truncf %573 : vector<16x64xf32> to vector<16x64xbf16>
    %cst_175 = arith.constant dense<0.000000e+00> : vector<16x512xf32>
    %576 = tpu.matmul %575, %356, %cst_175 {dimension_numbers = #tpu.dot_dimension_numbers<[1], [0], [0], [1], [0, 0, 1, 1], [], []>} : vector<16x64xbf16>, vector<64x512xbf16>, vector<16x512xf32> -> vector<16x512xf32>
    %c7_i32_176 = arith.constant 7 : i32
    %577 = arith.subi %c7_i32_176, %c7_i32_174 : i32
    %578 = arith.index_cast %c7_i32_174 : i32 to index
    %c0_177 = arith.constant 0 : index
    %c0_178 = arith.constant 0 : index
    %579 = vector.load %arg13[%578, %c0_177, %c0_178] : memref<8x8x512xf32, #tpu.memory_space<vmem>>, vector<1x8x256xf32>
    %580 = vector.shape_cast %579 : vector<1x8x256xf32> to vector<8x256xf32>
    %581 = vector.extract_strided_slice %576 {offsets = [0, 0], sizes = [8, 256], strides = [1, 1]} : vector<16x512xf32> to vector<8x256xf32>
    %582 = arith.addf %580, %581 : vector<8x256xf32>
    %583 = arith.index_cast %577 : i32 to index
    %c0_179 = arith.constant 0 : index
    %c256_180 = arith.constant 256 : index
    %584 = vector.load %arg13[%583, %c0_179, %c256_180] : memref<8x8x512xf32, #tpu.memory_space<vmem>>, vector<1x8x256xf32>
    %585 = vector.shape_cast %584 : vector<1x8x256xf32> to vector<8x256xf32>
    %586 = vector.extract_strided_slice %576 {offsets = [8, 256], sizes = [8, 256], strides = [1, 1]} : vector<16x512xf32> to vector<8x256xf32>
    %587 = arith.addf %585, %586 : vector<8x256xf32>
    %588 = tpu.concatenate %582, %587 in 0 : vector<8x256xf32>, vector<8x256xf32> -> vector<16x256xf32>
    %589 = vector.extract_strided_slice %588 {offsets = [0, 0], sizes = [16, 192], strides = [1, 1]} : vector<16x256xf32> to vector<16x192xf32>
    %590 = arith.negf %589 : vector<16x192xf32>
    %591 = math.exp %590 : vector<16x192xf32>
    %cst_181 = arith.constant 1.000000e+00 : f32
    %592 = vector.broadcast %cst_181 : f32 to vector<16x192xf32>
    %593 = arith.addf %592, %591 : vector<16x192xf32>
    %594 = arith.divf %592, %593 : vector<16x192xf32>
    %595 = vector.extract_strided_slice %588 {offsets = [0, 192], sizes = [16, 64], strides = [1, 1]} : vector<16x256xf32> to vector<16x64xf32>
    %596 = math.tanh %595 : vector<16x64xf32>
    %597 = vector.extract_strided_slice %594 {offsets = [0, 64], sizes = [16, 64], strides = [1, 1]} : vector<16x192xf32> to vector<16x64xf32>
    %598 = arith.mulf %597, %570 : vector<16x64xf32>
    %599 = vector.extract_strided_slice %594 {offsets = [0, 0], sizes = [16, 64], strides = [1, 1]} : vector<16x192xf32> to vector<16x64xf32>
    %600 = arith.mulf %599, %596 : vector<16x64xf32>
    %601 = arith.addf %598, %600 : vector<16x64xf32>
    %602 = vector.extract_strided_slice %594 {offsets = [0, 128], sizes = [16, 64], strides = [1, 1]} : vector<16x192xf32> to vector<16x64xf32>
    %603 = math.tanh %601 : vector<16x64xf32>
    %604 = arith.mulf %602, %603 : vector<16x64xf32>
    %605 = arith.addf %574, %604 : vector<16x64xf32>
    %c8_i32_182 = arith.constant 8 : i32
    %606 = vector.extract_strided_slice %605 {offsets = [0, 0], sizes = [8, 64], strides = [1, 1]} : vector<16x64xf32> to vector<8x64xf32>
    %607 = vector.extract_strided_slice %605 {offsets = [8, 0], sizes = [8, 64], strides = [1, 1]} : vector<16x64xf32> to vector<8x64xf32>
    %608 = tpu.concatenate %606, %607 in 1 : vector<8x64xf32>, vector<8x64xf32> -> vector<8x128xf32>
    %cst_183 = arith.constant 1.250000e-01 : f32
    %609 = vector.broadcast %cst_183 : f32 to vector<8x128xf32>
    %610 = arith.mulf %608, %609 : vector<8x128xf32>
    %cst_184 = arith.constant dense<0.000000e+00> : vector<8xf32>
    %611 = vector.multi_reduction <add>, %610, %cst_184 [1] : vector<8x128xf32> to vector<8xf32>
    %612 = vector.shape_cast %611 : vector<8xf32> to vector<8x1xf32>
    %cst_185 = arith.constant 1.280000e+02 : f32
    %613 = vector.broadcast %cst_185 : f32 to vector<8x1xf32>
    %614 = arith.divf %612, %613 : vector<8x1xf32>
    %615 = vector.broadcast %614 : vector<8x1xf32> to vector<8x128xf32>
    %616 = arith.subf %610, %615 : vector<8x128xf32>
    %617 = arith.mulf %616, %616 : vector<8x128xf32>
    %cst_186 = arith.constant dense<0.000000e+00> : vector<8xf32>
    %618 = vector.multi_reduction <add>, %617, %cst_186 [1] : vector<8x128xf32> to vector<8xf32>
    %619 = vector.shape_cast %618 : vector<8xf32> to vector<8x1xf32>
    %cst_187 = arith.constant 1.280000e+02 : f32
    %620 = vector.broadcast %cst_187 : f32 to vector<8x1xf32>
    %621 = arith.divf %619, %620 : vector<8x1xf32>
    %622 = vector.broadcast %614 : vector<8x1xf32> to vector<8x128xf32>
    %623 = arith.subf %610, %622 : vector<8x128xf32>
    %cst_188 = arith.constant 9.99999974E-6 : f32
    %624 = vector.broadcast %cst_188 : f32 to vector<8x1xf32>
    %625 = arith.addf %621, %624 : vector<8x1xf32>
    %626 = math.rsqrt %625 : vector<8x1xf32>
    %627 = vector.broadcast %626 : vector<8x1xf32> to vector<8x128xf32>
    %628 = arith.mulf %623, %627 : vector<8x128xf32>
    %c0_189 = arith.constant 0 : index
    %c0_190 = arith.constant 0 : index
    %629 = vector.load %arg8[%c0_189, %c0_190] : memref<1x128xf32, #tpu.memory_space<vmem>>, vector<1x128xf32>
    %630 = vector.broadcast %629 : vector<1x128xf32> to vector<8x128xf32>
    %631 = arith.mulf %628, %630 : vector<8x128xf32>
    %c0_191 = arith.constant 0 : index
    %c0_192 = arith.constant 0 : index
    %632 = vector.load %arg9[%c0_191, %c0_192] : memref<1x128xf32, #tpu.memory_space<vmem>>, vector<1x128xf32>
    %633 = vector.broadcast %632 : vector<1x128xf32> to vector<8x128xf32>
    %634 = arith.addf %631, %633 : vector<8x128xf32>
    %c0_193 = arith.constant 0 : index
    %c0_194 = arith.constant 0 : index
    %635 = vector.load %arg10[%c0_193, %c0_194] : memref<128x2xf32, #tpu.memory_space<vmem>>, vector<128x2xf32>
    %cst_195 = arith.constant dense<0.000000e+00> : vector<8x2xf32>
    %636 = tpu.matmul %634, %635, %cst_195 {dimension_numbers = #tpu.dot_dimension_numbers<[1], [0], [0], [1], [0, 0, 1, 1], [], []>} : vector<8x128xf32>, vector<128x2xf32>, vector<8x2xf32> -> vector<8x2xf32>
    %c0_196 = arith.constant 0 : index
    %c0_197 = arith.constant 0 : index
    %637 = vector.load %arg11[%c0_196, %c0_197] : memref<1x2xf32, #tpu.memory_space<vmem>>, vector<1x2xf32>
    %638 = vector.broadcast %637 : vector<1x2xf32> to vector<8x2xf32>
    %639 = arith.addf %636, %638 : vector<8x2xf32>
    %c0_198 = arith.constant 0 : index
    %c0_199 = arith.constant 0 : index
    %640 = vector.load %arg12[%c0_198, %c0_199] : memref<8x2xf32, #tpu.memory_space<vmem>>, vector<8x2xf32>
    tpu.vector_store %arg12[%c0_198, %c0_199], %639 {strides = array<i32>} : memref<8x2xf32, #tpu.memory_space<vmem>>, vector<8x2xf32>,
    return
  }
  func.func @transform_0(%arg0: i32) -> (i32, i32, i32) {
    %c0_i32 = arith.constant 0 : i32
    %c0_i32_0 = arith.constant 0 : i32
    %c0_i32_1 = arith.constant 0 : i32
    return %c0_i32, %arg0, %c0_i32_0 : i32, i32, i32
  }
  func.func @transform_1(%arg0: i32) -> (i32, i32) {
    %c0_i32 = arith.constant 0 : i32
    %c0_i32_0 = arith.constant 0 : i32
    %c0_i32_1 = arith.constant 0 : i32
    return %c0_i32, %c0_i32_0 : i32, i32
  }
  func.func @transform_2(%arg0: i32) -> (i32, i32) {
    %c0_i32 = arith.constant 0 : i32
    %c0_i32_0 = arith.constant 0 : i32
    %c0_i32_1 = arith.constant 0 : i32
    return %c0_i32, %c0_i32_0 : i32, i32
  }
  func.func @transform_3(%arg0: i32) -> (i32, i32) {
    %c0_i32 = arith.constant 0 : i32
    %c0_i32_0 = arith.constant 0 : i32
    %c0_i32_1 = arith.constant 0 : i32
    return %c0_i32, %c0_i32_0 : i32, i32
  }
  func.func @transform_4(%arg0: i32) -> (i32, i32) {
    %c0_i32 = arith.constant 0 : i32
    %c0_i32_0 = arith.constant 0 : i32
    %c0_i32_1 = arith.constant 0 : i32
    return %c0_i32, %c0_i32_0 : i32, i32
  }
  func.func @transform_5(%arg0: i32) -> (i32, i32) {
    %c0_i32 = arith.constant 0 : i32
    %c0_i32_0 = arith.constant 0 : i32
    %c0_i32_1 = arith.constant 0 : i32
    return %c0_i32, %c0_i32_0 : i32, i32
  }
  func.func @transform_6(%arg0: i32) -> (i32, i32) {
    %c0_i32 = arith.constant 0 : i32
    %c0_i32_0 = arith.constant 0 : i32
    %c0_i32_1 = arith.constant 0 : i32
    return %c0_i32, %c0_i32_0 : i32, i32
  }
  func.func @transform_7(%arg0: i32) -> (i32, i32) {
    %c0_i32 = arith.constant 0 : i32
    %c0_i32_0 = arith.constant 0 : i32
    %c0_i32_1 = arith.constant 0 : i32
    return %c0_i32, %c0_i32_0 : i32, i32
  }
  func.func @transform_8(%arg0: i32) -> (i32, i32) {
    %c0_i32 = arith.constant 0 : i32
    %c0_i32_0 = arith.constant 0 : i32
    %c0_i32_1 = arith.constant 0 : i32
    return %c0_i32, %c0_i32_0 : i32, i32
  }
  func.func @transform_9(%arg0: i32) -> (i32, i32) {
    %c0_i32 = arith.constant 0 : i32
    %c0_i32_0 = arith.constant 0 : i32
    %c0_i32_1 = arith.constant 0 : i32
    return %c0_i32, %c0_i32_0 : i32, i32
  }
  func.func @transform_10(%arg0: i32) -> (i32, i32) {
    %c0_i32 = arith.constant 0 : i32
    %c0_i32_0 = arith.constant 0 : i32
    %c0_i32_1 = arith.constant 0 : i32
    return %c0_i32, %c0_i32_0 : i32, i32
  }
  func.func @transform_11(%arg0: i32) -> (i32, i32) {
    %c0_i32 = arith.constant 0 : i32
    %c0_i32_0 = arith.constant 0 : i32
    return %arg0, %c0_i32 : i32, i32
  }
}

</mosaic_0001>

<llo_original>
// kernel: tpu_custom_call.1
$region0: #{tpu_custom_call.1}
  #allocation0 [shape = 'u32[]', space=smem, size = 0x4, offset = 0x4, fixed_abs, tag = 'smem constant byte address 0x4 - core index']
  #allocation1 [shape = 'u32[144,128]{1,0:T(1,128)}', space=vmem, size = 0x12000, scoped, tag = 'internal scratch']
  #allocation2 [shape = 'f32[8,8,512]{2,1,0:T(8,128)}', space=vmem, size = 0x20000, scoped, tag = 'scratch operand']
  #allocation3 [shape = 'f32[8,16,64]{2,1,0:T(8,128)}', space=vmem, size = 0x10000, scoped, tag = 'scratch operand']
  %s0 = inlined_call_operand.hbm [shape: bf16[8,8,768], index: 0, kind: input, shape index: {}]
  %s1 = inlined_call_operand.hbm [shape: bf16[768,512], index: 1, kind: input, shape index: {}]
  %s2 = inlined_call_operand.vmem [shape: bf16[64,512], index: 2, kind: input, shape index: {}]
  %s3 = inlined_call_operand.vmem [shape: f32[1,512], index: 3, kind: input, shape index: {}]
  %s4 = inlined_call_operand.hbm [shape: bf16[128,512], index: 4, kind: input, shape index: {}]
  %s5 = inlined_call_operand.hbm [shape: bf16[64,512], index: 5, kind: input, shape index: {}]
  %s6 = inlined_call_operand.vmem [shape: f32[1,512], index: 6, kind: input, shape index: {}]
  %s7 = inlined_call_operand.vmem [shape: f32[1,128], index: 7, kind: input, shape index: {}]
  %s8 = inlined_call_operand.vmem [shape: f32[1,128], index: 8, kind: input, shape index: {}]
  %s9 = inlined_call_operand.vmem [shape: f32[128,2], index: 9, kind: input, shape index: {}]
  %s10 = inlined_call_operand.vmem [shape: f32[1,2], index: 10, kind: input, shape index: {}]
  %s11 = inlined_call_operand.vmem [shape: f32[8,2], index: 11, kind: output, shape index: {}]
  %s12 = sld [smem:[#allocation0]]
  $region70: #{tpu_custom_call.1} parent=0
    _
  %s14 = ssub.s32 1, %s12
  %s15 = scalar_select 0, %s14, %s12
  $region1: #{tpu_custom_call.1} parent=0
    #allocation4 [shape = 'u8[98304]{0}', space=vmem, size = 0x18000, scoped, tag = 'input window, operand 0, single buffered']
    #allocation5 [shape = 's32[1]{0}', space=sflag, size = 0x4, scoped, tag = 'scoped memory for tpu_custom_call.1']
    #allocation6 [shape = 'u8[786432]{0}', space=vmem, size = 0xc0000, scoped, tag = 'input window, operand 1, single buffered']
    #allocation7 [shape = 's32[1]{0}', space=sflag, size = 0x4, scoped, tag = 'scoped memory for tpu_custom_call.1']
    #allocation8 [shape = 'u8[131072]{0}', space=vmem, size = 0x20000, scoped, tag = 'input window, operand 4, single buffered']
    #allocation9 [shape = 'u8[65536]{0}', space=vmem, size = 0x10000, scoped, tag = 'input window, operand 5, single buffered']
    #allocation10 [shape = 's32[1]{0}', space=sflag, size = 0x4, scoped, tag = 'scoped memory for tpu_custom_call.1']
    %16 = vsyncpa [#allocation5], 0
    %17 = vsyncpa [#allocation7], 0
    %18 = vsyncpa [#allocation10], 0
    // Predicated region
    $region2: #{tpu_custom_call.1} parent=1 // pred_check
      _
    $region3: #{tpu_custom_call.1} parent=1 // pred_check_branch
      %20 = sbr.rel (0) target = $region5
    $region4: #{tpu_custom_call.1} parent=1 // pred_region
      %s22 = ssub.s32 3072, 3072
      %23 = vsyncadd [#allocation5], %s22
      %s24 = sshll.u32 [#allocation4], 4
      %s25 = int_to_ptr.vmem [resolvable:$true] %s24
      %30 = dma.hbm_to_vmem [thread:$0]  %s0, 3072, %s25, [#allocation5], 384, 384, 24
    $region5: #{tpu_custom_call.1} parent=1 // pred_fallthru
      _
    // Predicated region
    $region6: #{tpu_custom_call.1} parent=1 // pred_check
      _
    $region7: #{tpu_custom_call.1} parent=1 // pred_check_branch
      %32 = sbr.rel (0) target = $region9
    $region8: #{tpu_custom_call.1} parent=1 // pred_region
      %s34 = ssub.s32 24576, 24576
      %35 = vsyncadd [#allocation7], %s34
      %s36 = sshll.u32 [#allocation6], 4
      %s37 = int_to_ptr.vmem [resolvable:$true] %s36
      %42 = dma.hbm_to_vmem [thread:$0]  %s1, 24576, %s37, [#allocation7], 256, 256, 16
    $region9: #{tpu_custom_call.1} parent=1 // pred_fallthru
      _
    // Predicated region
    $region10: #{tpu_custom_call.1} parent=1 // pred_check
      _
    $region11: #{tpu_custom_call.1} parent=1 // pred_check_branch
      %44 = sbr.rel (0) target = $region13
    $region12: #{tpu_custom_call.1} parent=1 // pred_region
      _
    $region13: #{tpu_custom_call.1} parent=1 // pred_fallthru
      _
    // Predicated region
    $region14: #{tpu_custom_call.1} parent=1 // pred_check
      _
    $region15: #{tpu_custom_call.1} parent=1 // pred_check_branch
      %46 = sbr.rel (0) target = $region17
    $region16: #{tpu_custom_call.1} parent=1 // pred_region
      _
    $region17: #{tpu_custom_call.1} parent=1 // pred_fallthru
      _
    // Predicated region
    $region18: #{tpu_custom_call.1} parent=1 // pred_check
      _
    $region19: #{tpu_custom_call.1} parent=1 // pred_check_branch
      %48 = sbr.rel (0) target = $region21
    $region20: #{tpu_custom_call.1} parent=1 // pred_region
      %s50 = ssub.s32 4096, 4096
      %51 = vsyncadd [#allocation7], %s50
      %s52 = sshll.u32 [#allocation8], 4
      %s53 = int_to_ptr.vmem [resolvable:$true] %s52
      %58 = dma.hbm_to_vmem [thread:$0]  %s4, 4096, %s53, [#allocation7], 256, 256, 16
    $region21: #{tpu_custom_call.1} parent=1 // pred_fallthru
      _
    // Predicated region
    $region22: #{tpu_custom_call.1} parent=1 // pred_check
      _
    $region23: #{tpu_custom_call.1} parent=1 // pred_check_branch
      %60 = sbr.rel (0) target = $region25
    $region24: #{tpu_custom_call.1} parent=1 // pred_region
      %s62 = ssub.s32 2048, 2048
      %63 = vsyncadd [#allocation10], %s62
      %s64 = sshll.u32 [#allocation9], 4
      %s65 = int_to_ptr.vmem [resolvable:$true] %s64
      %70 = dma.hbm_to_vmem [thread:$0]  %s5, 2048, %s65, [#allocation10], 256, 256, 16
    $region25: #{tpu_custom_call.1} parent=1 // pred_fallthru
      _
    // Predicated region
    $region26: #{tpu_custom_call.1} parent=1 // pred_check
      _
    $region27: #{tpu_custom_call.1} parent=1 // pred_check_branch
      %72 = sbr.rel (0) target = $region29
    $region28: #{tpu_custom_call.1} parent=1 // pred_region
      _
    $region29: #{tpu_custom_call.1} parent=1 // pred_fallthru
      _
    // Predicated region
    $region30: #{tpu_custom_call.1} parent=1 // pred_check
      _
    $region31: #{tpu_custom_call.1} parent=1 // pred_check_branch
      %74 = sbr.rel (0) target = $region33
    $region32: #{tpu_custom_call.1} parent=1 // pred_region
      _
    $region33: #{tpu_custom_call.1} parent=1 // pred_fallthru
      _
    // Predicated region
    $region34: #{tpu_custom_call.1} parent=1 // pred_check
      _
    $region35: #{tpu_custom_call.1} parent=1 // pred_check_branch
      %76 = sbr.rel (0) target = $region37
    $region36: #{tpu_custom_call.1} parent=1 // pred_region
      _
    $region37: #{tpu_custom_call.1} parent=1 // pred_fallthru
      _
    // Predicated region
    $region38: #{tpu_custom_call.1} parent=1 // pred_check
      _
    $region39: #{tpu_custom_call.1} parent=1 // pred_check_branch
      %78 = sbr.rel (0) target = $region41
    $region40: #{tpu_custom_call.1} parent=1 // pred_region
      _
    $region41: #{tpu_custom_call.1} parent=1 // pred_fallthru
      _
    // Predicated region
    $region42: #{tpu_custom_call.1} parent=1 // pred_check
      _
    $region43: #{tpu_custom_call.1} parent=1 // pred_check_branch
      %80 = sbr.rel (0) target = $region45
    $region44: #{tpu_custom_call.1} parent=1 // pred_region
      _
    $region45: #{tpu_custom_call.1} parent=1 // pred_fallthru
      _
    // Predicated region
    $region46: #{tpu_custom_call.1} parent=1 // pred_check
      _
    $region47: #{tpu_custom_call.1} parent=1 // pred_check_branch
      %82 = sbr.rel (0) target = $region49
    $region48: #{tpu_custom_call.1} parent=1 // pred_region
      %83 = dma.done [#allocation5], 3072
    $region49: #{tpu_custom_call.1} parent=1 // pred_fallthru
      _
    // Predicated region
    $region50: #{tpu_custom_call.1} parent=1 // pred_check
      _
    $region51: #{tpu_custom_call.1} parent=1 // pred_check_branch
      %85 = sbr.rel (0) target = $region53
    $region52: #{tpu_custom_call.1} parent=1 // pred_region
      %86 = dma.done [#allocation7], 24576
    $region53: #{tpu_custom_call.1} parent=1 // pred_fallthru
      _
    // Predicated region
    $region54: #{tpu_custom_call.1} parent=1 // pred_check
      _
    $region55: #{tpu_custom_call.1} parent=1 // pred_check_branch
      %88 = sbr.rel (0) target = $region57
    $region56: #{tpu_custom_call.1} parent=1 // pred_region
      %89 = dma.done [#allocation7], 4096
    $region57: #{tpu_custom_call.1} parent=1 // pred_fallthru
      _
    // Predicated region
    $region58: #{tpu_custom_call.1} parent=1 // pred_check
      _
    $region59: #{tpu_custom_call.1} parent=1 // pred_check_branch
      %91 = sbr.rel (0) target = $region61
    $region60: #{tpu_custom_call.1} parent=1 // pred_region
      %92 = dma.done [#allocation10], 2048
    $region61: #{tpu_custom_call.1} parent=1 // pred_fallthru
      _
    %v94 = vld [vmem:[#allocation6] sm:$0xff]
    %v95 = vld [vmem:[#allocation6 + $0x8] sm:$0xff]
    %v96 = vld [vmem:[#allocation6 + $0x10] sm:$0xff]
    %v97 = vld [vmem:[#allocation6 + $0x18] sm:$0xff]
    %v98 = vld [vmem:[#allocation6 + $0x20] sm:$0xff]
    %v99 = vld [vmem:[#allocation6 + $0x28] sm:$0xff]
    %v100 = vld [vmem:[#allocation6 + $0x30] sm:$0xff]
    %v101 = vld [vmem:[#allocation6 + $0x38] sm:$0xff]
    %v102 = vld [vmem:[#allocation6 + $0x40] sm:$0xff]
    %v103 = vld [vmem:[#allocation6 + $0x48] sm:$0xff]
    %v104 = vld [vmem:[#allocation6 + $0x50] sm:$0xff]
    %v105 = vld [vmem:[#allocation6 + $0x58] sm:$0xff]
    %v106 = vld [vmem:[#allocation6 + $0x60] sm:$0xff]
    %v107 = vld [vmem:[#allocation6 + $0x68] sm:$0xff]
    %v108 = vld [vmem:[#allocation6 + $0x70] sm:$0xff]
    %v109 = vld [vmem:[#allocation6 + $0x78] sm:$0xff]
    %v110 = vld [vmem:[#allocation6 + $0x80] sm:$0xff]
    %v111 = vld [vmem:[#allocation6 + $0x88] sm:$0xff]
    %v112 = vld [vmem:[#allocation6 + $0x90] sm:$0xff]
    %v113 = vld [vmem:[#allocation6 + $0x98] sm:$0xff]
    %v114 = vld [vmem:[#allocation6 + $0xa0] sm:$0xff]
    %v115 = vld [vmem:[#allocation6 + $0xa8] sm:$0xff]
    %v116 = vld [vmem:[#allocation6 + $0xb0] sm:$0xff]
    %v117 = vld [vmem:[#allocation6 + $0xb8] sm:$0xff]
    %v118 = vld [vmem:[#allocation6 + $0xc0] sm:$0xff]
    %v119 = vld [vmem:[#allocation6 + $0xc8] sm:$0xff]
    %v120 = vld [vmem:[#allocation6 + $0xd0] sm:$0xff]
    %v121 = vld [vmem:[#allocation6 + $0xd8] sm:$0xff]
    %v122 = vld [vmem:[#allocation6 + $0xe0] sm:$0xff]
    %v123 = vld [vmem:[#allocation6 + $0xe8] sm:$0xff]
    %v124 = vld [vmem:[#allocation6 + $0xf0] sm:$0xff]
    %v125 = vld [vmem:[#allocation6 + $0xf8] sm:$0xff]
    %v126 = vld [vmem:[#allocation6 + $0x100] sm:$0xff]
    %v127 = vld [vmem:[#allocation6 + $0x108] sm:$0xff]
    %v128 = vld [vmem:[#allocation6 + $0x110] sm:$0xff]
    %v129 = vld [vmem:[#allocation6 + $0x118] sm:$0xff]
    %v130 = vld [vmem:[#allocation6 + $0x120] sm:$0xff]
    %v131 = vld [vmem:[#allocation6 + $0x128] sm:$0xff]
    %v132 = vld [vmem:[#allocation6 + $0x130] sm:$0xff]
    %v133 = vld [vmem:[#allocation6 + $0x138] sm:$0xff]
    %v134 = vld [vmem:[#allocation6 + $0x140] sm:$0xff]
    %v135 = vld [vmem:[#allocation6 + $0x148] sm:$0xff]
    %v136 = vld [vmem:[#allocation6 + $0x150] sm:$0xff]
    %v137 = vld [vmem:[#allocation6 + $0x158] sm:$0xff]
    %v138 = vld [vmem:[#allocation6 + $0x160] sm:$0xff]
    %v139 = vld [vmem:[#allocation6 + $0x168] sm:$0xff]
    %v140 = vld [vmem:[#allocation6 + $0x170] sm:$0xff]
    %v141 = vld [vmem:[#allocation6 + $0x178] sm:$0xff]
    %v142 = vld [vmem:[#allocation6 + $0x180] sm:$0xff]
    %v143 = vld [vmem:[#allocation6 + $0x188] sm:$0xff]
    %v144 = vld [vmem:[#allocation6 + $0x190] sm:$0xff]
    %v145 = vld [vmem:[#allocation6 + $0x198] sm:$0xff]
    %v146 = vld [vmem:[#allocation6 + $0x1a0] sm:$0xff]
    %v147 = vld [vmem:[#allocation6 + $0x1a8] sm:$0xff]
    %v148 = vld [vmem:[#allocation6 + $0x1b0] sm:$0xff]
    %v149 = vld [vmem:[#allocation6 + $0x1b8] sm:$0xff]
    %v150 = vld [vmem:[#allocation6 + $0x1c0] sm:$0xff]
    %v151 = vld [vmem:[#allocation6 + $0x1c8] sm:$0xff]
    %v152 = vld [vmem:[#allocation6 + $0x1d0] sm:$0xff]
    %v153 = vld [vmem:[#allocation6 + $0x1d8] sm:$0xff]
    %v154 = vld [vmem:[#allocation6 + $0x1e0] sm:$0xff]
    %v155 = vld [vmem:[#allocation6 + $0x1e8] sm:$0xff]
    %v156 = vld [vmem:[#allocation6 + $0x1f0] sm:$0xff]
    %v157 = vld [vmem:[#allocation6 + $0x1f8] sm:$0xff]
    %v158 = vld [vmem:[#allocation6 + $0x200] sm:$0xff]
    %v159 = vld [vmem:[#allocation6 + $0x208] sm:$0xff]
    %v160 = vld [vmem:[#allocation6 + $0x210] sm:$0xff]
    %v161 = vld [vmem:[#allocation6 + $0x218] sm:$0xff]
    %v162 = vld [vmem:[#allocation6 + $0x220] sm:$0xff]
    %v163 = vld [vmem:[#allocation6 + $0x228] sm:$0xff]
    %v164 = vld [vmem:[#allocation6 + $0x230] sm:$0xff]
    %v165 = vld [vmem:[#allocation6 + $0x238] sm:$0xff]
    %v166 = vld [vmem:[#allocation6 + $0x240] sm:$0xff]
    %v167 = vld [vmem:[#allocation6 + $0x248] sm:$0xff]
    %v168 = vld [vmem:[#allocation6 + $0x250] sm:$0xff]
    %v169 = vld [vmem:[#allocation6 + $0x258] sm:$0xff]
    %v170 = vld [vmem:[#allocation6 + $0x260] sm:$0xff]
    %v171 = vld [vmem:[#allocation6 + $0x268] sm:$0xff]
    %v172 = vld [vmem:[#allocation6 + $0x270] sm:$0xff]
    %v173 = vld [vmem:[#allocation6 + $0x278] sm:$0xff]
    %v174 = vld [vmem:[#allocation6 + $0x280] sm:$0xff]
    %v175 = vld [vmem:[#allocation6 + $0x288] sm:$0xff]
    %v176 = vld [vmem:[#allocation6 + $0x290] sm:$0xff]
    %v177 = vld [vmem:[#allocation6 + $0x298] sm:$0xff]
    %v178 = vld [vmem:[#allocation6 + $0x2a0] sm:$0xff]
    %v179 = vld [vmem:[#allocation6 + $0x2a8] sm:$0xff]
    %v180 = vld [vmem:[#allocation6 + $0x2b0] sm:$0xff]
    %v181 = vld [vmem:[#allocation6 + $0x2b8] sm:$0xff]
    %v182 = vld [vmem:[#allocation6 + $0x2c0] sm:$0xff]
    %v183 = vld [vmem:[#allocation6 + $0x2c8] sm:$0xff]
    %v184 = vld [vmem:[#allocation6 + $0x2d0] sm:$0xff]
    %v185 = vld [vmem:[#allocation6 + $0x2d8] sm:$0xff]
    %v186 = vld [vmem:[#allocation6 + $0x2e0] sm:$0xff]
    %v187 = vld [vmem:[#allocation6 + $0x2e8] sm:$0xff]
    %v188 = vld [vmem:[#allocation6 + $0x2f0] sm:$0xff]
    %v189 = vld [vmem:[#allocation6 + $0x2f8] sm:$0xff]
    %v190 = vld [vmem:[#allocation6 + $0x300] sm:$0xff]
    %v191 = vld [vmem:[#allocation6 + $0x308] sm:$0xff]
    %v192 = vld [vmem:[#allocation6 + $0x310] sm:$0xff]
    %v193 = vld [vmem:[#allocation6 + $0x318] sm:$0xff]
    %v194 = vld [vmem:[#allocation6 + $0x320] sm:$0xff]
    %v195 = vld [vmem:[#allocation6 + $0x328] sm:$0xff]
    %v196 = vld [vmem:[#allocation6 + $0x330] sm:$0xff]
    %v197 = vld [vmem:[#allocation6 + $0x338] sm:$0xff]
    %v198 = vld [vmem:[#allocation6 + $0x340] sm:$0xff]
    %v199 = vld [vmem:[#allocation6 + $0x348] sm:$0xff]
    %v200 = vld [vmem:[#allocation6 + $0x350] sm:$0xff]
    %v201 = vld [vmem:[#allocation6 + $0x358] sm:$0xff]
    %v202 = vld [vmem:[#allocation6 + $0x360] sm:$0xff]
    %v203 = vld [vmem:[#allocation6 + $0x368] sm:$0xff]
    %v204 = vld [vmem:[#allocation6 + $0x370] sm:$0xff]
    %v205 = vld [vmem:[#allocation6 + $0x378] sm:$0xff]
    %v206 = vld [vmem:[#allocation6 + $0x380] sm:$0xff]
    %v207 = vld [vmem:[#allocation6 + $0x388] sm:$0xff]
    %v208 = vld [vmem:[#allocation6 + $0x390] sm:$0xff]
    %v209 = vld [vmem:[#allocation6 + $0x398] sm:$0xff]
    %v210 = vld [vmem:[#allocation6 + $0x3a0] sm:$0xff]
    %v211 = vld [vmem:[#allocation6 + $0x3a8] sm:$0xff]
    %v212 = vld [vmem:[#allocation6 + $0x3b0] sm:$0xff]
    %v213 = vld [vmem:[#allocation6 + $0x3b8] sm:$0xff]
    %v214 = vld [vmem:[#allocation6 + $0x3c0] sm:$0xff]
    %v215 = vld [vmem:[#allocation6 + $0x3c8] sm:$0xff]
    %v216 = vld [vmem:[#allocation6 + $0x3d0] sm:$0xff]
    %v217 = vld [vmem:[#allocation6 + $0x3d8] sm:$0xff]
    %v218 = vld [vmem:[#allocation6 + $0x3e0] sm:$0xff]
    %v219 = vld [vmem:[#allocation6 + $0x3e8] sm:$0xff]
    %v220 = vld [vmem:[#allocation6 + $0x3f0] sm:$0xff]
    %v221 = vld [vmem:[#allocation6 + $0x3f8] sm:$0xff]
    %v222 = vld [vmem:[#allocation6 + $0x400] sm:$0xff]
    %v223 = vld [vmem:[#allocation6 + $0x408] sm:$0xff]
    %v224 = vld [vmem:[#allocation6 + $0x410] sm:$0xff]
    %v225 = vld [vmem:[#allocation6 + $0x418] sm:$0xff]
    %v226 = vld [vmem:[#allocation6 + $0x420] sm:$0xff]
    %v227 = vld [vmem:[#allocation6 + $0x428] sm:$0xff]
    %v228 = vld [vmem:[#allocation6 + $0x430] sm:$0xff]
    %v229 = vld [vmem:[#allocation6 + $0x438] sm:$0xff]
    %v230 = vld [vmem:[#allocation6 + $0x440] sm:$0xff]
    %v231 = vld [vmem:[#allocation6 + $0x448] sm:$0xff]
    %v232 = vld [vmem:[#allocation6 + $0x450] sm:$0xff]
    %v233 = vld [vmem:[#allocation6 + $0x458] sm:$0xff]
    %v234 = vld [vmem:[#allocation6 + $0x460] sm:$0xff]
    %v235 = vld [vmem:[#allocation6 + $0x468] sm:$0xff]
    %v236 = vld [vmem:[#allocation6 + $0x470] sm:$0xff]
    %v237 = vld [vmem:[#allocation6 + $0x478] sm:$0xff]
    %v238 = vld [vmem:[#allocation6 + $0x480] sm:$0xff]
    %v239 = vld [vmem:[#allocation6 + $0x488] sm:$0xff]
    %v240 = vld [vmem:[#allocation6 + $0x490] sm:$0xff]
    %v241 = vld [vmem:[#allocation6 + $0x498] sm:$0xff]
    %v242 = vld [vmem:[#allocation6 + $0x4a0] sm:$0xff]
    %v243 = vld [vmem:[#allocation6 + $0x4a8] sm:$0xff]
    %v244 = vld [vmem:[#allocation6 + $0x4b0] sm:$0xff]
    %v245 = vld [vmem:[#allocation6 + $0x4b8] sm:$0xff]
    %v246 = vld [vmem:[#allocation6 + $0x4c0] sm:$0xff]
    %v247 = vld [vmem:[#allocation6 + $0x4c8] sm:$0xff]
    %v248 = vld [vmem:[#allocation6 + $0x4d0] sm:$0xff]
    %v249 = vld [vmem:[#allocation6 + $0x4d8] sm:$0xff]
    %v250 = vld [vmem:[#allocation6 + $0x4e0] sm:$0xff]
    %v251 = vld [vmem:[#allocation6 + $0x4e8] sm:$0xff]
    %v252 = vld [vmem:[#allocation6 + $0x4f0] sm:$0xff]
    %v253 = vld [vmem:[#allocation6 + $0x4f8] sm:$0xff]
    %v254 = vld [vmem:[#allocation6 + $0x500] sm:$0xff]
    %v255 = vld [vmem:[#allocation6 + $0x508] sm:$0xff]
    %v256 = vld [vmem:[#allocation6 + $0x510] sm:$0xff]
    %v257 = vld [vmem:[#allocation6 + $0x518] sm:$0xff]
    %v258 = vld [vmem:[#allocation6 + $0x520] sm:$0xff]
    %v259 = vld [vmem:[#allocation6 + $0x528] sm:$0xff]
    %v260 = vld [vmem:[#allocation6 + $0x530] sm:$0xff]
    %v261 = vld [vmem:[#allocation6 + $0x538] sm:$0xff]
    %v262 = vld [vmem:[#allocation6 + $0x540] sm:$0xff]
    %v263 = vld [vmem:[#allocation6 + $0x548] sm:$0xff]
    %v264 = vld [vmem:[#allocation6 + $0x550] sm:$0xff]
    %v265 = vld [vmem:[#allocation6 + $0x558] sm:$0xff]
    %v266 = vld [vmem:[#allocation6 + $0x560] sm:$0xff]
    %v267 = vld [vmem:[#allocation6 + $0x568] sm:$0xff]
    %v268 = vld [vmem:[#allocation6 + $0x570] sm:$0xff]
    %v269 = vld [vmem:[#allocation6 + $0x578] sm:$0xff]
    %v270 = vld [vmem:[#allocation6 + $0x580] sm:$0xff]
    %v271 = vld [vmem:[#allocation6 + $0x588] sm:$0xff]
    %v272 = vld [vmem:[#allocation6 + $0x590] sm:$0xff]
    %v273 = vld [vmem:[#allocation6 + $0x598] sm:$0xff]
    %v274 = vld [vmem:[#allocation6 + $0x5a0] sm:$0xff]
    %v275 = vld [vmem:[#allocation6 + $0x5a8] sm:$0xff]
    %v276 = vld [vmem:[#allocation6 + $0x5b0] sm:$0xff]
    %v277 = vld [vmem:[#allocation6 + $0x5b8] sm:$0xff]
    %v278 = vld [vmem:[#allocation6 + $0x5c0] sm:$0xff]
    %v279 = vld [vmem:[#allocation6 + $0x5c8] sm:$0xff]
    %v280 = vld [vmem:[#allocation6 + $0x5d0] sm:$0xff]
    %v281 = vld [vmem:[#allocation6 + $0x5d8] sm:$0xff]
    %v282 = vld [vmem:[#allocation6 + $0x5e0] sm:$0xff]
    %v283 = vld [vmem:[#allocation6 + $0x5e8] sm:$0xff]
    %v284 = vld [vmem:[#allocation6 + $0x5f0] sm:$0xff]
    %v285 = vld [vmem:[#allocation6 + $0x5f8] sm:$0xff]
    %v286 = vld [vmem:[%s3] sm:$0xf]
    %s287 = smul.u32 0, 6
    %s288 = smul.addr %s287, 4
    %s289 = scalar_lea.vmem [#allocation4], %s288
    %v290 = vld [vmem:[%s289] sm:$0xff]
    %v291 = vld [vmem:[%s289 + $0x8] sm:$0xff]
    %v292 = vld [vmem:[%s289 + $0x10] sm:$0xff]
    %v293 = vld [vmem:[%s289 + $0x18] sm:$0xff]
    %v294 = vld [vmem:[%s289 + $0x20] sm:$0xff]
    %v295 = vld [vmem:[%s289 + $0x28] sm:$0xff]
    %v296 = vld [vmem:[%s289 + $0x30] sm:$0xff]
    %v297 = vld [vmem:[%s289 + $0x38] sm:$0xff]
    %v298 = vld [vmem:[%s289 + $0x40] sm:$0xff]
    %v299 = vld [vmem:[%s289 + $0x48] sm:$0xff]
    %v300 = vld [vmem:[%s289 + $0x50] sm:$0xff]
    %v301 = vld [vmem:[%s289 + $0x58] sm:$0xff]
    %v302 = vld [vmem:[%s289 + $0x60] sm:$0xff]
    %v303 = vld [vmem:[%s289 + $0x68] sm:$0xff]
    %v304 = vld [vmem:[%s289 + $0x70] sm:$0xff]
    %v305 = vld [vmem:[%s289 + $0x78] sm:$0xff]
    %v306 = vld [vmem:[%s289 + $0x80] sm:$0xff]
    %v307 = vld [vmem:[%s289 + $0x88] sm:$0xff]
    %v308 = vld [vmem:[%s289 + $0x90] sm:$0xff]
    %v309 = vld [vmem:[%s289 + $0x98] sm:$0xff]
    %v310 = vld [vmem:[%s289 + $0xa0] sm:$0xff]
    %v311 = vld [vmem:[%s289 + $0xa8] sm:$0xff]
    %v312 = vld [vmem:[%s289 + $0xb0] sm:$0xff]
    %v313 = vld [vmem:[%s289 + $0xb8] sm:$0xff]
    %v315 = vlaneseq
    %v316 = vshrl.u32 %v315, 7
    %v317 = vsub.s32 0, %v316
    %v318 = vrot.slane %v286, %v317
    %v319 = vlaneseq
    %v320 = vshrl.u32 %v319, 7
    %v321 = vsub.s32 1, %v320
    %v322 = vrot.slane %v286, %v321
    %v323 = vlaneseq
    %v324 = vshrl.u32 %v323, 7
    %v325 = vsub.s32 2, %v324
    %v326 = vrot.slane %v286, %v325
    %v327 = vlaneseq
    %v328 = vshrl.u32 %v327, 7
    %v329 = vsub.s32 3, %v328
    %v330 = vrot.slane %v286, %v329
    %v359 = vunpack.c.l.b16 %v290
    %v360 = vunpack.c.h.b16 %v290
    %v361 = vunpack.c.l.b16 %v291
    %v362 = vunpack.c.h.b16 %v291
    %v363 = vunpack.c.l.b16 %v292
    %v364 = vunpack.c.h.b16 %v292
    %v365 = vunpack.c.l.b16 %v293
    %v366 = vunpack.c.h.b16 %v293
    %v367 = vunpack.c.l.b16 %v294
    %v368 = vunpack.c.h.b16 %v294
    %v369 = vunpack.c.l.b16 %v295
    %v370 = vunpack.c.h.b16 %v295
    %v371 = vunpack.c.l.b16 %v296
    %v372 = vunpack.c.h.b16 %v296
    %v373 = vunpack.c.l.b16 %v297
    %v374 = vunpack.c.h.b16 %v297
    %v375 = vunpack.c.l.b16 %v298
    %v376 = vunpack.c.h.b16 %v298
    %v377 = vunpack.c.l.b16 %v299
    %v378 = vunpack.c.h.b16 %v299
    %v379 = vunpack.c.l.b16 %v300
    %v380 = vunpack.c.h.b16 %v300
    %v381 = vunpack.c.l.b16 %v301
    %v382 = vunpack.c.h.b16 %v301
    %v383 = vunpack.c.l.b16 %v302
    %v384 = vunpack.c.h.b16 %v302
    %v385 = vunpack.c.l.b16 %v303
    %v386 = vunpack.c.h.b16 %v303
    %v387 = vunpack.c.l.b16 %v304
    %v388 = vunpack.c.h.b16 %v304
    %v389 = vunpack.c.l.b16 %v305
    %v390 = vunpack.c.h.b16 %v305
    %v391 = vunpack.c.l.b16 %v306
    %v392 = vunpack.c.h.b16 %v306
    %v393 = vunpack.c.l.b16 %v307
    %v394 = vunpack.c.h.b16 %v307
    %v395 = vunpack.c.l.b16 %v308
    %v396 = vunpack.c.h.b16 %v308
    %v397 = vunpack.c.l.b16 %v309
    %v398 = vunpack.c.h.b16 %v309
    %v399 = vunpack.c.l.b16 %v310
    %v400 = vunpack.c.h.b16 %v310
    %v401 = vunpack.c.l.b16 %v311
    %v402 = vunpack.c.h.b16 %v311
    %v403 = vunpack.c.l.b16 %v312
    %v404 = vunpack.c.h.b16 %v312
    %v405 = vunpack.c.l.b16 %v313
    %v406 = vunpack.c.h.b16 %v313
    %v407 = vpack.c.b16 %v365, %v359
    %v408 = vpack.c.b16 %v366, %v360
    %v409 = vpack.c.b16 %v367, %v361
    %v410 = vpack.c.b16 %v368, %v362
    %v411 = vpack.c.b16 %v369, %v363
    %v412 = vpack.c.b16 %v370, %v364
    %v413 = vpack.c.b16 %v377, %v371
    %v414 = vpack.c.b16 %v378, %v372
    %v415 = vpack.c.b16 %v379, %v373
    %v416 = vpack.c.b16 %v380, %v374
    %v417 = vpack.c.b16 %v381, %v375
    %v418 = vpack.c.b16 %v382, %v376
    %v419 = vpack.c.b16 %v389, %v383
    %v420 = vpack.c.b16 %v390, %v384
    %v421 = vpack.c.b16 %v391, %v385
    %v422 = vpack.c.b16 %v392, %v386
    %v423 = vpack.c.b16 %v393, %v387
    %v424 = vpack.c.b16 %v394, %v388
    %v425 = vpack.c.b16 %v401, %v395
    %v426 = vpack.c.b16 %v402, %v396
    %v427 = vpack.c.b16 %v403, %v397
    %v428 = vpack.c.b16 %v404, %v398
    %v429 = vpack.c.b16 %v405, %v399
    %v430 = vpack.c.b16 %v406, %v400
    %v647 = vunpack.c.l.b16 %v94
    %v648 = vunpack.c.h.b16 %v94
    %v649 = vunpack.c.l.b16 %v95
    %v650 = vunpack.c.h.b16 %v95
    %v651 = vunpack.c.l.b16 %v96
    %v652 = vunpack.c.h.b16 %v96
    %v653 = vunpack.c.l.b16 %v97
    %v654 = vunpack.c.h.b16 %v97
    %v655 = vunpack.c.l.b16 %v98
    %v656 = vunpack.c.h.b16 %v98
    %v657 = vunpack.c.l.b16 %v99
    %v658 = vunpack.c.h.b16 %v99
    %v659 = vunpack.c.l.b16 %v100
    %v660 = vunpack.c.h.b16 %v100
    %v661 = vunpack.c.l.b16 %v101
    %v662 = vunpack.c.h.b16 %v101
    %v663 = vunpack.c.l.b16 %v102
    %v664 = vunpack.c.h.b16 %v102
    %v665 = vunpack.c.l.b16 %v103
    %v666 = vunpack.c.h.b16 %v103
    %v667 = vunpack.c.l.b16 %v104
    %v668 = vunpack.c.h.b16 %v104
    %v669 = vunpack.c.l.b16 %v105
    %v670 = vunpack.c.h.b16 %v105
    %v671 = vunpack.c.l.b16 %v106
    %v672 = vunpack.c.h.b16 %v106
    %v673 = vunpack.c.l.b16 %v107
    %v674 = vunpack.c.h.b16 %v107
    %v675 = vunpack.c.l.b16 %v108
    %v676 = vunpack.c.h.b16 %v108
    %v677 = vunpack.c.l.b16 %v109
    %v678 = vunpack.c.h.b16 %v109
    %v679 = vunpack.c.l.b16 %v110
    %v680 = vunpack.c.h.b16 %v110
    %v681 = vunpack.c.l.b16 %v111
    %v682 = vunpack.c.h.b16 %v111
    %v683 = vunpack.c.l.b16 %v112
    %v684 = vunpack.c.h.b16 %v112
    %v685 = vunpack.c.l.b16 %v113
    %v686 = vunpack.c.h.b16 %v113
    %v687 = vunpack.c.l.b16 %v114
    %v688 = vunpack.c.h.b16 %v114
    %v689 = vunpack.c.l.b16 %v115
    %v690 = vunpack.c.h.b16 %v115
    %v691 = vunpack.c.l.b16 %v116
    %v692 = vunpack.c.h.b16 %v116
    %v693 = vunpack.c.l.b16 %v117
    %v694 = vunpack.c.h.b16 %v117
    %v695 = vunpack.c.l.b16 %v118
    %v696 = vunpack.c.h.b16 %v118
    %v697 = vunpack.c.l.b16 %v119
    %v698 = vunpack.c.h.b16 %v119
    %v699 = vunpack.c.l.b16 %v120
    %v700 = vunpack.c.h.b16 %v120
    %v701 = vunpack.c.l.b16 %v121
    %v702 = vunpack.c.h.b16 %v121
    %v703 = vunpack.c.l.b16 %v122
    %v704 = vunpack.c.h.b16 %v122
    %v705 = vunpack.c.l.b16 %v123
    %v706 = vunpack.c.h.b16 %v123
    %v707 = vunpack.c.l.b16 %v124
    %v708 = vunpack.c.h.b16 %v124
    %v709 = vunpack.c.l.b16 %v125
    %v710 = vunpack.c.h.b16 %v125
    %v711 = vunpack.c.l.b16 %v126
    %v712 = vunpack.c.h.b16 %v126
    %v713 = vunpack.c.l.b16 %v127
    %v714 = vunpack.c.h.b16 %v127
    %v715 = vunpack.c.l.b16 %v128
    %v716 = vunpack.c.h.b16 %v128
    %v717 = vunpack.c.l.b16 %v129
    %v718 = vunpack.c.h.b16 %v129
    %v719 = vunpack.c.l.b16 %v130
    %v720 = vunpack.c.h.b16 %v130
    %v721 = vunpack.c.l.b16 %v131
    %v722 = vunpack.c.h.b16 %v131
    %v723 = vunpack.c.l.b16 %v132
    %v724 = vunpack.c.h.b16 %v132
    %v725 = vunpack.c.l.b16 %v133
    %v726 = vunpack.c.h.b16 %v133
    %v727 = vunpack.c.l.b16 %v134
    %v728 = vunpack.c.h.b16 %v134
    %v729 = vunpack.c.l.b16 %v135
    %v730 = vunpack.c.h.b16 %v135
    %v731 = vunpack.c.l.b16 %v136
    %v732 = vunpack.c.h.b16 %v136
    %v733 = vunpack.c.l.b16 %v137
    %v734 = vunpack.c.h.b16 %v137
    %v735 = vunpack.c.l.b16 %v138
    %v736 = vunpack.c.h.b16 %v138
    %v737 = vunpack.c.l.b16 %v139
    %v738 = vunpack.c.h.b16 %v139
    %v739 = vunpack.c.l.b16 %v140
    %v740 = vunpack.c.h.b16 %v140
    %v741 = vunpack.c.l.b16 %v141
    %v742 = vunpack.c.h.b16 %v141
    %v743 = vunpack.c.l.b16 %v142
    %v744 = vunpack.c.h.b16 %v142
    %v745 = vunpack.c.l.b16 %v143
    %v746 = vunpack.c.h.b16 %v143
    %v747 = vunpack.c.l.b16 %v144
    %v748 = vunpack.c.h.b16 %v144
    %v749 = vunpack.c.l.b16 %v145
    %v750 = vunpack.c.h.b16 %v145
    %v751 = vunpack.c.l.b16 %v146
    %v752 = vunpack.c.h.b16 %v146
    %v753 = vunpack.c.l.b16 %v147
    %v754 = vunpack.c.h.b16 %v147
    %v755 = vunpack.c.l.b16 %v148
    %v756 = vunpack.c.h.b16 %v148
    %v757 = vunpack.c.l.b16 %v149
    %v758 = vunpack.c.h.b16 %v149
    %v759 = vunpack.c.l.b16 %v150
    %v760 = vunpack.c.h.b16 %v150
    %v761 = vunpack.c.l.b16 %v151
    %v762 = vunpack.c.h.b16 %v151
    %v763 = vunpack.c.l.b16 %v152
    %v764 = vunpack.c.h.b16 %v152
    %v765 = vunpack.c.l.b16 %v153
    %v766 = vunpack.c.h.b16 %v153
    %v767 = vunpack.c.l.b16 %v154
    %v768 = vunpack.c.h.b16 %v154
    %v769 = vunpack.c.l.b16 %v155
    %v770 = vunpack.c.h.b16 %v155
    %v771 = vunpack.c.l.b16 %v156
    %v772 = vunpack.c.h.b16 %v156
    %v773 = vunpack.c.l.b16 %v157
    %v774 = vunpack.c.h.b16 %v157
    %v775 = vunpack.c.l.b16 %v158
    %v776 = vunpack.c.h.b16 %v158
    %v777 = vunpack.c.l.b16 %v159
    %v778 = vunpack.c.h.b16 %v159
    %v779 = vunpack.c.l.b16 %v160
    %v780 = vunpack.c.h.b16 %v160
    %v781 = vunpack.c.l.b16 %v161
    %v782 = vunpack.c.h.b16 %v161
    %v783 = vunpack.c.l.b16 %v162
    %v784 = vunpack.c.h.b16 %v162
    %v785 = vunpack.c.l.b16 %v163
    %v786 = vunpack.c.h.b16 %v163
    %v787 = vunpack.c.l.b16 %v164
    %v788 = vunpack.c.h.b16 %v164
    %v789 = vunpack.c.l.b16 %v165
    %v790 = vunpack.c.h.b16 %v165
    %v791 = vunpack.c.l.b16 %v166
    %v792 = vunpack.c.h.b16 %v166
    %v793 = vunpack.c.l.b16 %v167
    %v794 = vunpack.c.h.b16 %v167
    %v795 = vunpack.c.l.b16 %v168
    %v796 = vunpack.c.h.b16 %v168
    %v797 = vunpack.c.l.b16 %v169
    %v798 = vunpack.c.h.b16 %v169
    %v799 = vunpack.c.l.b16 %v170
    %v800 = vunpack.c.h.b16 %v170
    %v801 = vunpack.c.l.b16 %v171
    %v802 = vunpack.c.h.b16 %v171
    %v803 = vunpack.c.l.b16 %v172
    %v804 = vunpack.c.h.b16 %v172
    %v805 = vunpack.c.l.b16 %v173
    %v806 = vunpack.c.h.b16 %v173
    %v807 = vunpack.c.l.b16 %v174
    %v808 = vunpack.c.h.b16 %v174
    %v809 = vunpack.c.l.b16 %v175
    %v810 = vunpack.c.h.b16 %v175
    %v811 = vunpack.c.l.b16 %v176
    %v812 = vunpack.c.h.b16 %v176
    %v813 = vunpack.c.l.b16 %v177
    %v814 = vunpack.c.h.b16 %v177
    %v815 = vunpack.c.l.b16 %v178
    %v816 = vunpack.c.h.b16 %v178
    %v817 = vunpack.c.l.b16 %v179
    %v818 = vunpack.c.h.b16 %v179
    %v819 = vunpack.c.l.b16 %v180
    %v820 = vunpack.c.h.b16 %v180
    %v821 = vunpack.c.l.b16 %v181
    %v822 = vunpack.c.h.b16 %v181
    %v823 = vunpack.c.l.b16 %v182
    %v824 = vunpack.c.h.b16 %v182
    %v825 = vunpack.c.l.b16 %v183
    %v826 = vunpack.c.h.b16 %v183
    %v827 = vunpack.c.l.b16 %v184
    %v828 = vunpack.c.h.b16 %v184
    %v829 = vunpack.c.l.b16 %v185
    %v830 = vunpack.c.h.b16 %v185
    %v831 = vunpack.c.l.b16 %v186
    %v832 = vunpack.c.h.b16 %v186
    %v833 = vunpack.c.l.b16 %v187
    %v834 = vunpack.c.h.b16 %v187
    %v835 = vunpack.c.l.b16 %v188
    %v836 = vunpack.c.h.b16 %v188
    %v837 = vunpack.c.l.b16 %v189
    %v838 = vunpack.c.h.b16 %v189
    %v839 = vunpack.c.l.b16 %v190
    %v840 = vunpack.c.h.b16 %v190
    %v841 = vunpack.c.l.b16 %v191
    %v842 = vunpack.c.h.b16 %v191
    %v843 = vunpack.c.l.b16 %v192
    %v844 = vunpack.c.h.b16 %v192
    %v845 = vunpack.c.l.b16 %v193
    %v846 = vunpack.c.h.b16 %v193
    %v847 = vunpack.c.l.b16 %v194
    %v848 = vunpack.c.h.b16 %v194
    %v849 = vunpack.c.l.b16 %v195
    %v850 = vunpack.c.h.b16 %v195
    %v851 = vunpack.c.l.b16 %v196
    %v852 = vunpack.c.h.b16 %v196
    %v853 = vunpack.c.l.b16 %v197
    %v854 = vunpack.c.h.b16 %v197
    %v855 = vunpack.c.l.b16 %v198
    %v856 = vunpack.c.h.b16 %v198
    %v857 = vunpack.c.l.b16 %v199
    %v858 = vunpack.c.h.b16 %v199
    %v859 = vunpack.c.l.b16 %v200
    %v860 = vunpack.c.h.b16 %v200
    %v861 = vunpack.c.l.b16 %v201
    %v862 = vunpack.c.h.b16 %v201
    %v863 = vunpack.c.l.b16 %v202
    %v864 = vunpack.c.h.b16 %v202
    %v865 = vunpack.c.l.b16 %v203
    %v866 = vunpack.c.h.b16 %v203
    %v867 = vunpack.c.l.b16 %v204
    %v868 = vunpack.c.h.b16 %v204
    %v869 = vunpack.c.l.b16 %v205
    %v870 = vunpack.c.h.b16 %v205
    %v871 = vunpack.c.l.b16 %v206
    %v872 = vunpack.c.h.b16 %v206
    %v873 = vunpack.c.l.b16 %v207
    %v874 = vunpack.c.h.b16 %v207
    %v875 = vunpack.c.l.b16 %v208
    %v876 = vunpack.c.h.b16 %v208
    %v877 = vunpack.c.l.b16 %v209
    %v878 = vunpack.c.h.b16 %v209
    %v879 = vunpack.c.l.b16 %v210
    %v880 = vunpack.c.h.b16 %v210
    %v881 = vunpack.c.l.b16 %v211
    %v882 = vunpack.c.h.b16 %v211
    %v883 = vunpack.c.l.b16 %v212
    %v884 = vunpack.c.h.b16 %v212
    %v885 = vunpack.c.l.b16 %v213
    %v886 = vunpack.c.h.b16 %v213
    %v887 = vunpack.c.l.b16 %v214
    %v888 = vunpack.c.h.b16 %v214
    %v889 = vunpack.c.l.b16 %v215
    %v890 = vunpack.c.h.b16 %v215
    %v891 = vunpack.c.l.b16 %v216
    %v892 = vunpack.c.h.b16 %v216
    %v893 = vunpack.c.l.b16 %v217
    %v894 = vunpack.c.h.b16 %v217
    %v895 = vunpack.c.l.b16 %v218
    %v896 = vunpack.c.h.b16 %v218
    %v897 = vunpack.c.l.b16 %v219
    %v898 = vunpack.c.h.b16 %v219
    %v899 = vunpack.c.l.b16 %v220
    %v900 = vunpack.c.h.b16 %v220
    %v901 = vunpack.c.l.b16 %v221
    %v902 = vunpack.c.h.b16 %v221
    %v903 = vunpack.c.l.b16 %v222
    %v904 = vunpack.c.h.b16 %v222
    %v905 = vunpack.c.l.b16 %v223
    %v906 = vunpack.c.h.b16 %v223
    %v907 = vunpack.c.l.b16 %v224
    %v908 = vunpack.c.h.b16 %v224
    %v909 = vunpack.c.l.b16 %v225
    %v910 = vunpack.c.h.b16 %v225
    %v911 = vunpack.c.l.b16 %v226
    %v912 = vunpack.c.h.b16 %v226
    %v913 = vunpack.c.l.b16 %v227
    %v914 = vunpack.c.h.b16 %v227
    %v915 = vunpack.c.l.b16 %v228
    %v916 = vunpack.c.h.b16 %v228
    %v917 = vunpack.c.l.b16 %v229
    %v918 = vunpack.c.h.b16 %v229
    %v919 = vunpack.c.l.b16 %v230
    %v920 = vunpack.c.h.b16 %v230
    %v921 = vunpack.c.l.b16 %v231
    %v922 = vunpack.c.h.b16 %v231
    %v923 = vunpack.c.l.b16 %v232
    %v924 = vunpack.c.h.b16 %v232
    %v925 = vunpack.c.l.b16 %v233
    %v926 = vunpack.c.h.b16 %v233
    %v927 = vunpack.c.l.b16 %v234
    %v928 = vunpack.c.h.b16 %v234
    %v929 = vunpack.c.l.b16 %v235
    %v930 = vunpack.c.h.b16 %v235
    %v931 = vunpack.c.l.b16 %v236
    %v932 = vunpack.c.h.b16 %v236
    %v933 = vunpack.c.l.b16 %v237
    %v934 = vunpack.c.h.b16 %v237
    %v935 = vunpack.c.l.b16 %v238
    %v936 = vunpack.c.h.b16 %v238
    %v937 = vunpack.c.l.b16 %v239
    %v938 = vunpack.c.h.b16 %v239
    %v939 = vunpack.c.l.b16 %v240
    %v940 = vunpack.c.h.b16 %v240
    %v941 = vunpack.c.l.b16 %v241
    %v942 = vunpack.c.h.b16 %v241
    %v943 = vunpack.c.l.b16 %v242
    %v944 = vunpack.c.h.b16 %v242
    %v945 = vunpack.c.l.b16 %v243
    %v946 = vunpack.c.h.b16 %v243
    %v947 = vunpack.c.l.b16 %v244
    %v948 = vunpack.c.h.b16 %v244
    %v949 = vunpack.c.l.b16 %v245
    %v950 = vunpack.c.h.b16 %v245
    %v951 = vunpack.c.l.b16 %v246
    %v952 = vunpack.c.h.b16 %v246
    %v953 = vunpack.c.l.b16 %v247
    %v954 = vunpack.c.h.b16 %v247
    %v955 = vunpack.c.l.b16 %v248
    %v956 = vunpack.c.h.b16 %v248
    %v957 = vunpack.c.l.b16 %v249
    %v958 = vunpack.c.h.b16 %v249
    %v959 = vunpack.c.l.b16 %v250
    %v960 = vunpack.c.h.b16 %v250
    %v961 = vunpack.c.l.b16 %v251
    %v962 = vunpack.c.h.b16 %v251
    %v963 = vunpack.c.l.b16 %v252
    %v964 = vunpack.c.h.b16 %v252
    %v965 = vunpack.c.l.b16 %v253
    %v966 = vunpack.c.h.b16 %v253
    %v967 = vunpack.c.l.b16 %v254
    %v968 = vunpack.c.h.b16 %v254
    %v969 = vunpack.c.l.b16 %v255
    %v970 = vunpack.c.h.b16 %v255
    %v971 = vunpack.c.l.b16 %v256
    %v972 = vunpack.c.h.b16 %v256
    %v973 = vunpack.c.l.b16 %v257
    %v974 = vunpack.c.h.b16 %v257
    %v975 = vunpack.c.l.b16 %v258
    %v976 = vunpack.c.h.b16 %v258
    %v977 = vunpack.c.l.b16 %v259
    %v978 = vunpack.c.h.b16 %v259
    %v979 = vunpack.c.l.b16 %v260
    %v980 = vunpack.c.h.b16 %v260
    %v981 = vunpack.c.l.b16 %v261
    %v982 = vunpack.c.h.b16 %v261
    %v983 = vunpack.c.l.b16 %v262
    %v984 = vunpack.c.h.b16 %v262
    %v985 = vunpack.c.l.b16 %v263
    %v986 = vunpack.c.h.b16 %v263
    %v987 = vunpack.c.l.b16 %v264
    %v988 = vunpack.c.h.b16 %v264
    %v989 = vunpack.c.l.b16 %v265
    %v990 = vunpack.c.h.b16 %v265
    %v991 = vunpack.c.l.b16 %v266
    %v992 = vunpack.c.h.b16 %v266
    %v993 = vunpack.c.l.b16 %v267
    %v994 = vunpack.c.h.b16 %v267
    %v995 = vunpack.c.l.b16 %v268
    %v996 = vunpack.c.h.b16 %v268
    %v997 = vunpack.c.l.b16 %v269
    %v998 = vunpack.c.h.b16 %v269
    %v999 = vunpack.c.l.b16 %v270
    %v1000 = vunpack.c.h.b16 %v270
    %v1001 = vunpack.c.l.b16 %v271
    %v1002 = vunpack.c.h.b16 %v271
    %v1003 = vunpack.c.l.b16 %v272
    %v1004 = vunpack.c.h.b16 %v272
    %v1005 = vunpack.c.l.b16 %v273
    %v1006 = vunpack.c.h.b16 %v273
    %v1007 = vunpack.c.l.b16 %v274
    %v1008 = vunpack.c.h.b16 %v274
    %v1009 = vunpack.c.l.b16 %v275
    %v1010 = vunpack.c.h.b16 %v275
    %v1011 = vunpack.c.l.b16 %v276
    %v1012 = vunpack.c.h.b16 %v276
    %v1013 = vunpack.c.l.b16 %v277
    %v1014 = vunpack.c.h.b16 %v277
    %v1015 = vunpack.c.l.b16 %v278
    %v1016 = vunpack.c.h.b16 %v278
    %v1017 = vunpack.c.l.b16 %v279
    %v1018 = vunpack.c.h.b16 %v279
    %v1019 = vunpack.c.l.b16 %v280
    %v1020 = vunpack.c.h.b16 %v280
    %v1021 = vunpack.c.l.b16 %v281
    %v1022 = vunpack.c.h.b16 %v281
    %v1023 = vunpack.c.l.b16 %v282
    %v1024 = vunpack.c.h.b16 %v282
    %v1025 = vunpack.c.l.b16 %v283
    %v1026 = vunpack.c.h.b16 %v283
    %v1027 = vunpack.c.l.b16 %v284
    %v1028 = vunpack.c.h.b16 %v284
    %v1029 = vunpack.c.l.b16 %v285
    %v1030 = vunpack.c.h.b16 %v285
    %v1031 = vpack.c.b16 %v651, %v647
    %v1032 = vpack.c.b16 %v652, %v648
    %v1033 = vpack.c.b16 %v653, %v649
    %v1034 = vpack.c.b16 %v654, %v650
    %v1035 = vpack.c.b16 %v659, %v655
    %v1036 = vpack.c.b16 %v660, %v656
    %v1037 = vpack.c.b16 %v661, %v657
    %v1038 = vpack.c.b16 %v662, %v658
    %v1039 = vpack.c.b16 %v667, %v663
    %v1040 = vpack.c.b16 %v668, %v664
    %v1041 = vpack.c.b16 %v669, %v665
    %v1042 = vpack.c.b16 %v670, %v666
    %v1043 = vpack.c.b16 %v675, %v671
    %v1044 = vpack.c.b16 %v676, %v672
    %v1045 = vpack.c.b16 %v677, %v673
    %v1046 = vpack.c.b16 %v678, %v674
    %v1047 = vpack.c.b16 %v683, %v679
    %v1048 = vpack.c.b16 %v684, %v680
    %v1049 = vpack.c.b16 %v685, %v681
    %v1050 = vpack.c.b16 %v686, %v682
    %v1051 = vpack.c.b16 %v691, %v687
    %v1052 = vpack.c.b16 %v692, %v688
    %v1053 = vpack.c.b16 %v693, %v689
    %v1054 = vpack.c.b16 %v694, %v690
    %v1055 = vpack.c.b16 %v699, %v695
    %v1056 = vpack.c.b16 %v700, %v696
    %v1057 = vpack.c.b16 %v701, %v697
    %v1058 = vpack.c.b16 %v702, %v698
    %v1059 = vpack.c.b16 %v707, %v703
    %v1060 = vpack.c.b16 %v708, %v704
    %v1061 = vpack.c.b16 %v709, %v705
    %v1062 = vpack.c.b16 %v710, %v706
    %v1063 = vpack.c.b16 %v715, %v711
    %v1064 = vpack.c.b16 %v716, %v712
    %v1065 = vpack.c.b16 %v717, %v713
    %v1066 = vpack.c.b16 %v718, %v714
    %v1067 = vpack.c.b16 %v723, %v719
    %v1068 = vpack.c.b16 %v724, %v720
    %v1069 = vpack.c.b16 %v725, %v721
    %v1070 = vpack.c.b16 %v726, %v722
    %v1071 = vpack.c.b16 %v731, %v727
    %v1072 = vpack.c.b16 %v732, %v728
    %v1073 = vpack.c.b16 %v733, %v729
    %v1074 = vpack.c.b16 %v734, %v730
    %v1075 = vpack.c.b16 %v739, %v735
    %v1076 = vpack.c.b16 %v740, %v736
    %v1077 = vpack.c.b16 %v741, %v737
    %v1078 = vpack.c.b16 %v742, %v738
    %v1079 = vpack.c.b16 %v747, %v743
    %v1080 = vpack.c.b16 %v748, %v744
    %v1081 = vpack.c.b16 %v749, %v745
    %v1082 = vpack.c.b16 %v750, %v746
    %v1083 = vpack.c.b16 %v755, %v751
    %v1084 = vpack.c.b16 %v756, %v752
    %v1085 = vpack.c.b16 %v757, %v753
    %v1086 = vpack.c.b16 %v758, %v754
    %v1087 = vpack.c.b16 %v763, %v759
    %v1088 = vpack.c.b16 %v764, %v760
    %v1089 = vpack.c.b16 %v765, %v761
    %v1090 = vpack.c.b16 %v766, %v762
    %v1091 = vpack.c.b16 %v771, %v767
    %v1092 = vpack.c.b16 %v772, %v768
    %v1093 = vpack.c.b16 %v773, %v769
    %v1094 = vpack.c.b16 %v774, %v770
    %v1095 = vpack.c.b16 %v779, %v775
    %v1096 = vpack.c.b16 %v780, %v776
    %v1097 = vpack.c.b16 %v781, %v777
    %v1098 = vpack.c.b16 %v782, %v778
    %v1099 = vpack.c.b16 %v787, %v783
    %v1100 = vpack.c.b16 %v788, %v784
    %v1101 = vpack.c.b16 %v789, %v785
    %v1102 = vpack.c.b16 %v790, %v786
    %v1103 = vpack.c.b16 %v795, %v791
    %v1104 = vpack.c.b16 %v796, %v792
    %v1105 = vpack.c.b16 %v797, %v793
    %v1106 = vpack.c.b16 %v798, %v794
    %v1107 = vpack.c.b16 %v803, %v799
    %v1108 = vpack.c.b16 %v804, %v800
    %v1109 = vpack.c.b16 %v805, %v801
    %v1110 = vpack.c.b16 %v806, %v802
    %v1111 = vpack.c.b16 %v811, %v807
    %v1112 = vpack.c.b16 %v812, %v808
    %v1113 = vpack.c.b16 %v813, %v809
    %v1114 = vpack.c.b16 %v814, %v810
    %v1115 = vpack.c.b16 %v819, %v815
    %v1116 = vpack.c.b16 %v820, %v816
    %v1117 = vpack.c.b16 %v821, %v817
    %v1118 = vpack.c.b16 %v822, %v818
    %v1119 = vpack.c.b16 %v827, %v823
    %v1120 = vpack.c.b16 %v828, %v824
    %v1121 = vpack.c.b16 %v829, %v825
    %v1122 = vpack.c.b16 %v830, %v826
    %v1123 = vpack.c.b16 %v835, %v831
    %v1124 = vpack.c.b16 %v836, %v832
    %v1125 = vpack.c.b16 %v837, %v833
    %v1126 = vpack.c.b16 %v838, %v834
    %v1127 = vpack.c.b16 %v843, %v839
    %v1128 = vpack.c.b16 %v844, %v840
    %v1129 = vpack.c.b16 %v845, %v841
    %v1130 = vpack.c.b16 %v846, %v842
    %v1131 = vpack.c.b16 %v851, %v847
    %v1132 = vpack.c.b16 %v852, %v848
    %v1133 = vpack.c.b16 %v853, %v849
    %v1134 = vpack.c.b16 %v854, %v850
    %v1135 = vpack.c.b16 %v859, %v855
    %v1136 = vpack.c.b16 %v860, %v856
    %v1137 = vpack.c.b16 %v861, %v857
    %v1138 = vpack.c.b16 %v862, %v858
    %v1139 = vpack.c.b16 %v867, %v863
    %v1140 = vpack.c.b16 %v868, %v864
    %v1141 = vpack.c.b16 %v869, %v865
    %v1142 = vpack.c.b16 %v870, %v866
    %v1143 = vpack.c.b16 %v875, %v871
    %v1144 = vpack.c.b16 %v876, %v872
    %v1145 = vpack.c.b16 %v877, %v873
    %v1146 = vpack.c.b16 %v878, %v874
    %v1147 = vpack.c.b16 %v883, %v879
    %v1148 = vpack.c.b16 %v884, %v880
    %v1149 = vpack.c.b16 %v885, %v881
    %v1150 = vpack.c.b16 %v886, %v882
    %v1151 = vpack.c.b16 %v891, %v887
    %v1152 = vpack.c.b16 %v892, %v888
    %v1153 = vpack.c.b16 %v893, %v889
    %v1154 = vpack.c.b16 %v894, %v890
    %v1155 = vpack.c.b16 %v899, %v895
    %v1156 = vpack.c.b16 %v900, %v896
    %v1157 = vpack.c.b16 %v901, %v897
    %v1158 = vpack.c.b16 %v902, %v898
    %v1159 = vpack.c.b16 %v907, %v903
    %v1160 = vpack.c.b16 %v908, %v904
    %v1161 = vpack.c.b16 %v909, %v905
    %v1162 = vpack.c.b16 %v910, %v906
    %v1163 = vpack.c.b16 %v915, %v911
    %v1164 = vpack.c.b16 %v916, %v912
    %v1165 = vpack.c.b16 %v917, %v913
    %v1166 = vpack.c.b16 %v918, %v914
    %v1167 = vpack.c.b16 %v923, %v919
    %v1168 = vpack.c.b16 %v924, %v920
    %v1169 = vpack.c.b16 %v925, %v921
    %v1170 = vpack.c.b16 %v926, %v922
    %v1171 = vpack.c.b16 %v931, %v927
    %v1172 = vpack.c.b16 %v932, %v928
    %v1173 = vpack.c.b16 %v933, %v929
    %v1174 = vpack.c.b16 %v934, %v930
    %v1175 = vpack.c.b16 %v939, %v935
    %v1176 = vpack.c.b16 %v940, %v936
    %v1177 = vpack.c.b16 %v941, %v937
    %v1178 = vpack.c.b16 %v942, %v938
    %v1179 = vpack.c.b16 %v947, %v943
    %v1180 = vpack.c.b16 %v948, %v944
    %v1181 = vpack.c.b16 %v949, %v945
    %v1182 = vpack.c.b16 %v950, %v946
    %v1183 = vpack.c.b16 %v955, %v951
    %v1184 = vpack.c.b16 %v956, %v952
    %v1185 = vpack.c.b16 %v957, %v953
    %v1186 = vpack.c.b16 %v958, %v954
    %v1187 = vpack.c.b16 %v963, %v959
    %v1188 = vpack.c.b16 %v964, %v960
    %v1189 = vpack.c.b16 %v965, %v961
    %v1190 = vpack.c.b16 %v966, %v962
    %v1191 = vpack.c.b16 %v971, %v967
    %v1192 = vpack.c.b16 %v972, %v968
    %v1193 = vpack.c.b16 %v973, %v969
    %v1194 = vpack.c.b16 %v974, %v970
    %v1195 = vpack.c.b16 %v979, %v975
    %v1196 = vpack.c.b16 %v980, %v976
    %v1197 = vpack.c.b16 %v981, %v977
    %v1198 = vpack.c.b16 %v982, %v978
    %v1199 = vpack.c.b16 %v987, %v983
    %v1200 = vpack.c.b16 %v988, %v984
    %v1201 = vpack.c.b16 %v989, %v985
    %v1202 = vpack.c.b16 %v990, %v986
    %v1203 = vpack.c.b16 %v995, %v991
    %v1204 = vpack.c.b16 %v996, %v992
    %v1205 = vpack.c.b16 %v997, %v993
    %v1206 = vpack.c.b16 %v998, %v994
    %v1207 = vpack.c.b16 %v1003, %v999
    %v1208 = vpack.c.b16 %v1004, %v1000
    %v1209 = vpack.c.b16 %v1005, %v1001
    %v1210 = vpack.c.b16 %v1006, %v1002
    %v1211 = vpack.c.b16 %v1011, %v1007
    %v1212 = vpack.c.b16 %v1012, %v1008
    %v1213 = vpack.c.b16 %v1013, %v1009
    %v1214 = vpack.c.b16 %v1014, %v1010
    %v1215 = vpack.c.b16 %v1019, %v1015
    %v1216 = vpack.c.b16 %v1020, %v1016
    %v1217 = vpack.c.b16 %v1021, %v1017
    %v1218 = vpack.c.b16 %v1022, %v1018
    %v1219 = vpack.c.b16 %v1027, %v1023
    %v1220 = vpack.c.b16 %v1028, %v1024
    %v1221 = vpack.c.b16 %v1029, %v1025
    %v1222 = vpack.c.b16 %v1030, %v1026
    %1415 = vmatprep.subr.bf16.mxu0 %v1032
    %1416 = vmatpush1.bf16.msra.mxu0 %v1031
    %1417 = vmatprep.subr.bf16.mxu0 %v1036
    %1418 = vmatpush1.bf16.msra.mxu0 %v1035
    %1419 = vmatprep.subr.bf16.mxu0 %v1040
    %1420 = vmatpush1.bf16.msra.mxu0 %v1039
    %1421 = vmatprep.subr.bf16.mxu0 %v1044
    %1422 = vmatpush1.bf16.msra.mxu0 %v1043
    %1423 = vmatprep.subr.bf16.mxu0 %v1048
    %1424 = vmatpush1.bf16.msra.mxu0 %v1047
    %1425 = vmatprep.subr.bf16.mxu0 %v1052
    %1426 = vmatpush1.bf16.msra.mxu0 %v1051
    %1427 = vmatprep.subr.bf16.mxu0 %v1056
    %1428 = vmatpush1.bf16.msra.mxu0 %v1055
    %1429 = vmatprep.subr.bf16.mxu0 %v1060
    %1430 = vmatpush1.bf16.msra.mxu0 %v1059
    %1431 = vmatprep.subr.bf16.mxu0 %v1064
    %1432 = vmatpush1.bf16.msra.mxu0 %v1063
    %1433 = vmatprep.subr.bf16.mxu0 %v1068
    %1434 = vmatpush1.bf16.msra.mxu0 %v1067
    %1435 = vmatprep.subr.bf16.mxu0 %v1072
    %1436 = vmatpush1.bf16.msra.mxu0 %v1071
    %1437 = vmatprep.subr.bf16.mxu0 %v1076
    %1438 = vmatpush1.bf16.msra.mxu0 %v1075
    %1439 = vmatprep.subr.bf16.mxu0 %v1080
    %1440 = vmatpush1.bf16.msra.mxu0 %v1079
    %1441 = vmatprep.subr.bf16.mxu0 %v1084
    %1442 = vmatpush1.bf16.msra.mxu0 %v1083
    %1443 = vmatprep.subr.bf16.mxu0 %v1088
    %1444 = vmatpush1.bf16.msra.mxu0 %v1087
    %1445 = vmatprep.subr.bf16.mxu0 %v1092
    %1446 = vmatpush1.bf16.msra.mxu0 %v1091
    %1447 = vmatprep.mubr.bf16.mxu0 %v408
    %1448 = vmatmul.mubr.bf16.gmra.mrb[0].mxu0 %v407
    %v1449 = vpop.f32.mrb[0].mxu0
    %v1450 = vadd.f32 %v318, %v1449
    %v1451 = vpop.f32.mrb[0].mxu0
    %v1452 = vadd.f32 %v322, %v1451
    %v1453 = vpop.f32.mrb[0].mxu0
    %v1454 = vadd.f32 %v318, %v1453
    %v1455 = vpop.f32.mrb[0].mxu0
    %v1456 = vadd.f32 %v322, %v1455
    %1457 = vmatprep.mubr.bf16.mxu0 %v414
    %1458 = vmatmul.mubr.bf16.gmra.mrb[0].mxu0 %v413
    %v1459 = vpop.f32.mrb[0].mxu0
    %v1460 = vadd.f32 %v318, %v1459
    %v1461 = vpop.f32.mrb[0].mxu0
    %v1462 = vadd.f32 %v322, %v1461
    %v1463 = vpop.f32.mrb[0].mxu0
    %v1464 = vadd.f32 %v318, %v1463
    %v1465 = vpop.f32.mrb[0].mxu0
    %v1466 = vadd.f32 %v322, %v1465
    %1467 = vmatprep.mubr.bf16.mxu0 %v420
    %1468 = vmatmul.mubr.bf16.gmra.mrb[0].mxu0 %v419
    %v1469 = vpop.f32.mrb[0].mxu0
    %v1470 = vadd.f32 %v318, %v1469
    %v1471 = vpop.f32.mrb[0].mxu0
    %v1472 = vadd.f32 %v322, %v1471
    %v1473 = vpop.f32.mrb[0].mxu0
    %v1474 = vadd.f32 %v318, %v1473
    %v1475 = vpop.f32.mrb[0].mxu0
    %v1476 = vadd.f32 %v322, %v1475
    %1477 = vmatprep.mubr.bf16.mxu0 %v426
    %1478 = vmatmul.mubr.bf16.gmra.mrb[0].mxu0 %v425
    %v1479 = vpop.f32.mrb[0].mxu0
    %v1480 = vadd.f32 %v318, %v1479
    %v1481 = vpop.f32.mrb[0].mxu0
    %v1482 = vadd.f32 %v322, %v1481
    %v1483 = vpop.f32.mrb[0].mxu0
    %v1484 = vadd.f32 %v318, %v1483
    %v1485 = vpop.f32.mrb[0].mxu0
    %v1486 = vadd.f32 %v322, %v1485
    %1487 = vdwg.mxu0
    %1488 = vmatprep.subr.bf16.mxu0 %v1096
    %1489 = vmatpush1.bf16.msra.mxu0 %v1095
    %1490 = vmatprep.subr.bf16.mxu0 %v1100
    %1491 = vmatpush1.bf16.msra.mxu0 %v1099
    %1492 = vmatprep.subr.bf16.mxu0 %v1104
    %1493 = vmatpush1.bf16.msra.mxu0 %v1103
    %1494 = vmatprep.subr.bf16.mxu0 %v1108
    %1495 = vmatpush1.bf16.msra.mxu0 %v1107
    %1496 = vmatprep.subr.bf16.mxu0 %v1112
    %1497 = vmatpush1.bf16.msra.mxu0 %v1111
    %1498 = vmatprep.subr.bf16.mxu0 %v1116
    %1499 = vmatpush1.bf16.msra.mxu0 %v1115
    %1500 = vmatprep.subr.bf16.mxu0 %v1120
    %1501 = vmatpush1.bf16.msra.mxu0 %v1119
    %1502 = vmatprep.subr.bf16.mxu0 %v1124
    %1503 = vmatpush1.bf16.msra.mxu0 %v1123
    %1504 = vmatprep.subr.bf16.mxu0 %v1128
    %1505 = vmatpush1.bf16.msra.mxu0 %v1127
    %1506 = vmatprep.subr.bf16.mxu0 %v1132
    %1507 = vmatpush1.bf16.msra.mxu0 %v1131
    %1508 = vmatprep.subr.bf16.mxu0 %v1136
    %1509 = vmatpush1.bf16.msra.mxu0 %v1135
    %1510 = vmatprep.subr.bf16.mxu0 %v1140
    %1511 = vmatpush1.bf16.msra.mxu0 %v1139
    %1512 = vmatprep.subr.bf16.mxu0 %v1144
    %1513 = vmatpush1.bf16.msra.mxu0 %v1143
    %1514 = vmatprep.subr.bf16.mxu0 %v1148
    %1515 = vmatpush1.bf16.msra.mxu0 %v1147
    %1516 = vmatprep.subr.bf16.mxu0 %v1152
    %1517 = vmatpush1.bf16.msra.mxu0 %v1151
    %1518 = vmatprep.subr.bf16.mxu0 %v1156
    %1519 = vmatpush1.bf16.msra.mxu0 %v1155
    %1520 = vmatprep.mubr.bf16.mxu0 %v410
    %1521 = vmatmul.mubr.bf16.gmra.mrb[0].mxu0 %v409
    %v1522 = vpop.f32.mrb[0].mxu0
    %v1523 = vadd.f32 %v1450, %v1522
    %v1524 = vpop.f32.mrb[0].mxu0
    %v1525 = vadd.f32 %v1452, %v1524
    %v1526 = vpop.f32.mrb[0].mxu0
    %v1527 = vadd.f32 %v1454, %v1526
    %v1528 = vpop.f32.mrb[0].mxu0
    %v1529 = vadd.f32 %v1456, %v1528
    %1530 = vmatprep.mubr.bf16.mxu0 %v416
    %1531 = vmatmul.mubr.bf16.gmra.mrb[0].mxu0 %v415
    %v1532 = vpop.f32.mrb[0].mxu0
    %v1533 = vadd.f32 %v1460, %v1532
    %v1534 = vpop.f32.mrb[0].mxu0
    %v1535 = vadd.f32 %v1462, %v1534
    %v1536 = vpop.f32.mrb[0].mxu0
    %v1537 = vadd.f32 %v1464, %v1536
    %v1538 = vpop.f32.mrb[0].mxu0
    %v1539 = vadd.f32 %v1466, %v1538
    %1540 = vmatprep.mubr.bf16.mxu0 %v422
    %1541 = vmatmul.mubr.bf16.gmra.mrb[0].mxu0 %v421
    %v1542 = vpop.f32.mrb[0].mxu0
    %v1543 = vadd.f32 %v1470, %v1542
    %v1544 = vpop.f32.mrb[0].mxu0
    %v1545 = vadd.f32 %v1472, %v1544
    %v1546 = vpop.f32.mrb[0].mxu0
    %v1547 = vadd.f32 %v1474, %v1546
    %v1548 = vpop.f32.mrb[0].mxu0
    %v1549 = vadd.f32 %v1476, %v1548
    %1550 = vmatprep.mubr.bf16.mxu0 %v428
    %1551 = vmatmul.mubr.bf16.gmra.mrb[0].mxu0 %v427
    %v1552 = vpop.f32.mrb[0].mxu0
    %v1553 = vadd.f32 %v1480, %v1552
    %v1554 = vpop.f32.mrb[0].mxu0
    %v1555 = vadd.f32 %v1482, %v1554
    %v1556 = vpop.f32.mrb[0].mxu0
    %v1557 = vadd.f32 %v1484, %v1556
    %v1558 = vpop.f32.mrb[0].mxu0
    %v1559 = vadd.f32 %v1486, %v1558
    %1560 = vdwg.mxu0
    %1561 = vmatprep.subr.bf16.mxu0 %v1160
    %1562 = vmatpush1.bf16.msra.mxu0 %v1159
    %1563 = vmatprep.subr.bf16.mxu0 %v1164
    %1564 = vmatpush1.bf16.msra.mxu0 %v1163
    %1565 = vmatprep.subr.bf16.mxu0 %v1168
    %1566 = vmatpush1.bf16.msra.mxu0 %v1167
    %1567 = vmatprep.subr.bf16.mxu0 %v1172
    %1568 = vmatpush1.bf16.msra.mxu0 %v1171
    %1569 = vmatprep.subr.bf16.mxu0 %v1176
    %1570 = vmatpush1.bf16.msra.mxu0 %v1175
    %1571 = vmatprep.subr.bf16.mxu0 %v1180
    %1572 = vmatpush1.bf16.msra.mxu0 %v1179
    %1573 = vmatprep.subr.bf16.mxu0 %v1184
    %1574 = vmatpush1.bf16.msra.mxu0 %v1183
    %1575 = vmatprep.subr.bf16.mxu0 %v1188
    %1576 = vmatpush1.bf16.msra.mxu0 %v1187
    %1577 = vmatprep.subr.bf16.mxu0 %v1192
    %1578 = vmatpush1.bf16.msra.mxu0 %v1191
    %1579 = vmatprep.subr.bf16.mxu0 %v1196
    %1580 = vmatpush1.bf16.msra.mxu0 %v1195
    %1581 = vmatprep.subr.bf16.mxu0 %v1200
    %1582 = vmatpush1.bf16.msra.mxu0 %v1199
    %1583 = vmatprep.subr.bf16.mxu0 %v1204
    %1584 = vmatpush1.bf16.msra.mxu0 %v1203
    %1585 = vmatprep.subr.bf16.mxu0 %v1208
    %1586 = vmatpush1.bf16.msra.mxu0 %v1207
    %1587 = vmatprep.subr.bf16.mxu0 %v1212
    %1588 = vmatpush1.bf16.msra.mxu0 %v1211
    %1589 = vmatprep.subr.bf16.mxu0 %v1216
    %1590 = vmatpush1.bf16.msra.mxu0 %v1215
    %1591 = vmatprep.subr.bf16.mxu0 %v1220
    %1592 = vmatpush1.bf16.msra.mxu0 %v1219
    %1593 = vmatprep.mubr.bf16.mxu0 %v412
    %1594 = vmatmul.mubr.bf16.gmra.mrb[0].mxu0 %v411
    %v1595 = vpop.f32.mrb[0].mxu0
    %v1596 = vadd.f32 %v1523, %v1595
    %v1597 = vpop.f32.mrb[0].mxu0
    %v1598 = vadd.f32 %v1525, %v1597
    %v1599 = vpop.f32.mrb[0].mxu0
    %v1600 = vadd.f32 %v1527, %v1599
    %v1601 = vpop.f32.mrb[0].mxu0
    %v1602 = vadd.f32 %v1529, %v1601
    %1603 = vmatprep.mubr.bf16.mxu0 %v418
    %1604 = vmatmul.mubr.bf16.gmra.mrb[0].mxu0 %v417
    %v1605 = vpop.f32.mrb[0].mxu0
    %v1606 = vadd.f32 %v1533, %v1605
    %v1607 = vpop.f32.mrb[0].mxu0
    %v1608 = vadd.f32 %v1535, %v1607
    %v1609 = vpop.f32.mrb[0].mxu0
    %v1610 = vadd.f32 %v1537, %v1609
    %v1611 = vpop.f32.mrb[0].mxu0
    %v1612 = vadd.f32 %v1539, %v1611
    %1613 = vmatprep.mubr.bf16.mxu0 %v424
    %1614 = vmatmul.mubr.bf16.gmra.mrb[0].mxu0 %v423
    %v1615 = vpop.f32.mrb[0].mxu0
    %v1616 = vadd.f32 %v1543, %v1615
    %v1617 = vpop.f32.mrb[0].mxu0
    %v1618 = vadd.f32 %v1545, %v1617
    %v1619 = vpop.f32.mrb[0].mxu0
    %v1620 = vadd.f32 %v1547, %v1619
    %v1621 = vpop.f32.mrb[0].mxu0
    %v1622 = vadd.f32 %v1549, %v1621
    %1623 = vmatprep.mubr.bf16.mxu0 %v430
    %1624 = vmatmul.mubr.bf16.gmra.mrb[0].mxu0 %v429
    %v1625 = vpop.f32.mrb[0].mxu0
    %v1626 = vadd.f32 %v1553, %v1625
    %v1627 = vpop.f32.mrb[0].mxu0
    %v1628 = vadd.f32 %v1555, %v1627
    %v1629 = vpop.f32.mrb[0].mxu0
    %v1630 = vadd.f32 %v1557, %v1629
    %v1631 = vpop.f32.mrb[0].mxu0
    %v1632 = vadd.f32 %v1559, %v1631
    %1633 = vdwg.mxu0
    %1634 = vmatprep.subr.bf16.mxu0 %v1034
    %1635 = vmatpush1.bf16.msra.mxu0 %v1033
    %1636 = vmatprep.subr.bf16.mxu0 %v1038
    %1637 = vmatpush1.bf16.msra.mxu0 %v1037
    %1638 = vmatprep.subr.bf16.mxu0 %v1042
    %1639 = vmatpush1.bf16.msra.mxu0 %v1041
    %1640 = vmatprep.subr.bf16.mxu0 %v1046
    %1641 = vmatpush1.bf16.msra.mxu0 %v1045
    %1642 = vmatprep.subr.bf16.mxu0 %v1050
    %1643 = vmatpush1.bf16.msra.mxu0 %v1049
    %1644 = vmatprep.subr.bf16.mxu0 %v1054
    %1645 = vmatpush1.bf16.msra.mxu0 %v1053
    %1646 = vmatprep.subr.bf16.mxu0 %v1058
    %1647 = vmatpush1.bf16.msra.mxu0 %v1057
    %1648 = vmatprep.subr.bf16.mxu0 %v1062
    %1649 = vmatpush1.bf16.msra.mxu0 %v1061
    %1650 = vmatprep.subr.bf16.mxu0 %v1066
    %1651 = vmatpush1.bf16.msra.mxu0 %v1065
    %1652 = vmatprep.subr.bf16.mxu0 %v1070
    %1653 = vmatpush1.bf16.msra.mxu0 %v1069
    %1654 = vmatprep.subr.bf16.mxu0 %v1074
    %1655 = vmatpush1.bf16.msra.mxu0 %v1073
    %1656 = vmatprep.subr.bf16.mxu0 %v1078
    %1657 = vmatpush1.bf16.msra.mxu0 %v1077
    %1658 = vmatprep.subr.bf16.mxu0 %v1082
    %1659 = vmatpush1.bf16.msra.mxu0 %v1081
    %1660 = vmatprep.subr.bf16.mxu0 %v1086
    %1661 = vmatpush1.bf16.msra.mxu0 %v1085
    %1662 = vmatprep.subr.bf16.mxu0 %v1090
    %1663 = vmatpush1.bf16.msra.mxu0 %v1089
    %1664 = vmatprep.subr.bf16.mxu0 %v1094
    %1665 = vmatpush1.bf16.msra.mxu0 %v1093
    %1666 = vmatprep.mubr.bf16.mxu0 %v408
    %1667 = vmatmul.mubr.bf16.gmra.mrb[0].mxu0 %v407
    %v1668 = vpop.f32.mrb[0].mxu0
    %v1669 = vadd.f32 %v326, %v1668
    %v1670 = vpop.f32.mrb[0].mxu0
    %v1671 = vadd.f32 %v330, %v1670
    %v1672 = vpop.f32.mrb[0].mxu0
    %v1673 = vadd.f32 %v326, %v1672
    %v1674 = vpop.f32.mrb[0].mxu0
    %v1675 = vadd.f32 %v330, %v1674
    %1676 = vmatprep.mubr.bf16.mxu0 %v414
    %1677 = vmatmul.mubr.bf16.gmra.mrb[0].mxu0 %v413
    %v1678 = vpop.f32.mrb[0].mxu0
    %v1679 = vadd.f32 %v326, %v1678
    %v1680 = vpop.f32.mrb[0].mxu0
    %v1681 = vadd.f32 %v330, %v1680
    %v1682 = vpop.f32.mrb[0].mxu0
    %v1683 = vadd.f32 %v326, %v1682
    %v1684 = vpop.f32.mrb[0].mxu0
    %v1685 = vadd.f32 %v330, %v1684
    %1686 = vmatprep.mubr.bf16.mxu0 %v420
    %1687 = vmatmul.mubr.bf16.gmra.mrb[0].mxu0 %v419
    %v1688 = vpop.f32.mrb[0].mxu0
    %v1689 = vadd.f32 %v326, %v1688
    %v1690 = vpop.f32.mrb[0].mxu0
    %v1691 = vadd.f32 %v330, %v1690
    %v1692 = vpop.f32.mrb[0].mxu0
    %v1693 = vadd.f32 %v326, %v1692
    %v1694 = vpop.f32.mrb[0].mxu0
    %v1695 = vadd.f32 %v330, %v1694
    %1696 = vmatprep.mubr.bf16.mxu0 %v426
    %1697 = vmatmul.mubr.bf16.gmra.mrb[0].mxu0 %v425
    %v1698 = vpop.f32.mrb[0].mxu0
    %v1699 = vadd.f32 %v326, %v1698
    %v1700 = vpop.f32.mrb[0].mxu0
    %v1701 = vadd.f32 %v330, %v1700
    %v1702 = vpop.f32.mrb[0].mxu0
    %v1703 = vadd.f32 %v326, %v1702
    %v1704 = vpop.f32.mrb[0].mxu0
    %v1705 = vadd.f32 %v330, %v1704
    %1706 = vdwg.mxu0
    %1707 = vmatprep.subr.bf16.mxu0 %v1098
    %1708 = vmatpush1.bf16.msra.mxu0 %v1097
    %1709 = vmatprep.subr.bf16.mxu0 %v1102
    %1710 = vmatpush1.bf16.msra.mxu0 %v1101
    %1711 = vmatprep.subr.bf16.mxu0 %v1106
    %1712 = vmatpush1.bf16.msra.mxu0 %v1105
    %1713 = vmatprep.subr.bf16.mxu0 %v1110
    %1714 = vmatpush1.bf16.msra.mxu0 %v1109
    %1715 = vmatprep.subr.bf16.mxu0 %v1114
    %1716 = vmatpush1.bf16.msra.mxu0 %v1113
    %1717 = vmatprep.subr.bf16.mxu0 %v1118
    %1718 = vmatpush1.bf16.msra.mxu0 %v1117
    %1719 = vmatprep.subr.bf16.mxu0 %v1122
    %1720 = vmatpush1.bf16.msra.mxu0 %v1121
    %1721 = vmatprep.subr.bf16.mxu0 %v1126
    %1722 = vmatpush1.bf16.msra.mxu0 %v1125
    %1723 = vmatprep.subr.bf16.mxu0 %v1130
    %1724 = vmatpush1.bf16.msra.mxu0 %v1129
    %1725 = vmatprep.subr.bf16.mxu0 %v1134
    %1726 = vmatpush1.bf16.msra.mxu0 %v1133
    %1727 = vmatprep.subr.bf16.mxu0 %v1138
    %1728 = vmatpush1.bf16.msra.mxu0 %v1137
    %1729 = vmatprep.subr.bf16.mxu0 %v1142
    %1730 = vmatpush1.bf16.msra.mxu0 %v1141
    %1731 = vmatprep.subr.bf16.mxu0 %v1146
    %1732 = vmatpush1.bf16.msra.mxu0 %v1145
    %1733 = vmatprep.subr.bf16.mxu0 %v1150
    %1734 = vmatpush1.bf16.msra.mxu0 %v1149
    %1735 = vmatprep.subr.bf16.mxu0 %v1154
    %1736 = vmatpush1.bf16.msra.mxu0 %v1153
    %1737 = vmatprep.subr.bf16.mxu0 %v1158
    %1738 = vmatpush1.bf16.msra.mxu0 %v1157
    %1739 = vmatprep.mubr.bf16.mxu0 %v410
    %1740 = vmatmul.mubr.bf16.gmra.mrb[0].mxu0 %v409
    %v1741 = vpop.f32.mrb[0].mxu0
    %v1742 = vadd.f32 %v1669, %v1741
    %v1743 = vpop.f32.mrb[0].mxu0
    %v1744 = vadd.f32 %v1671, %v1743
    %v1745 = vpop.f32.mrb[0].mxu0
    %v1746 = vadd.f32 %v1673, %v1745
    %v1747 = vpop.f32.mrb[0].mxu0
    %v1748 = vadd.f32 %v1675, %v1747
    %1749 = vmatprep.mubr.bf16.mxu0 %v416
    %1750 = vmatmul.mubr.bf16.gmra.mrb[0].mxu0 %v415
    %v1751 = vpop.f32.mrb[0].mxu0
    %v1752 = vadd.f32 %v1679, %v1751
    %v1753 = vpop.f32.mrb[0].mxu0
    %v1754 = vadd.f32 %v1681, %v1753
    %v1755 = vpop.f32.mrb[0].mxu0
    %v1756 = vadd.f32 %v1683, %v1755
    %v1757 = vpop.f32.mrb[0].mxu0
    %v1758 = vadd.f32 %v1685, %v1757
    %1759 = vmatprep.mubr.bf16.mxu0 %v422
    %1760 = vmatmul.mubr.bf16.gmra.mrb[0].mxu0 %v421
    %v1761 = vpop.f32.mrb[0].mxu0
    %v1762 = vadd.f32 %v1689, %v1761
    %v1763 = vpop.f32.mrb[0].mxu0
    %v1764 = vadd.f32 %v1691, %v1763
    %v1765 = vpop.f32.mrb[0].mxu0
    %v1766 = vadd.f32 %v1693, %v1765
    %v1767 = vpop.f32.mrb[0].mxu0
    %v1768 = vadd.f32 %v1695, %v1767
    %1769 = vmatprep.mubr.bf16.mxu0 %v428
    %1770 = vmatmul.mubr.bf16.gmra.mrb[0].mxu0 %v427
    %v1771 = vpop.f32.mrb[0].mxu0
    %v1772 = vadd.f32 %v1699, %v1771
    %v1773 = vpop.f32.mrb[0].mxu0
    %v1774 = vadd.f32 %v1701, %v1773
    %v1775 = vpop.f32.mrb[0].mxu0
    %v1776 = vadd.f32 %v1703, %v1775
    %v1777 = vpop.f32.mrb[0].mxu0
    %v1778 = vadd.f32 %v1705, %v1777
    %1779 = vdwg.mxu0
    %1780 = vmatprep.subr.bf16.mxu0 %v1162
    %1781 = vmatpush1.bf16.msra.mxu0 %v1161
    %1782 = vmatprep.subr.bf16.mxu0 %v1166
    %1783 = vmatpush1.bf16.msra.mxu0 %v1165
    %1784 = vmatprep.subr.bf16.mxu0 %v1170
    %1785 = vmatpush1.bf16.msra.mxu0 %v1169
    %1786 = vmatprep.subr.bf16.mxu0 %v1174
    %1787 = vmatpush1.bf16.msra.mxu0 %v1173
    %1788 = vmatprep.subr.bf16.mxu0 %v1178
    %1789 = vmatpush1.bf16.msra.mxu0 %v1177
    %1790 = vmatprep.subr.bf16.mxu0 %v1182
    %1791 = vmatpush1.bf16.msra.mxu0 %v1181
    %1792 = vmatprep.subr.bf16.mxu0 %v1186
    %1793 = vmatpush1.bf16.msra.mxu0 %v1185
    %1794 = vmatprep.subr.bf16.mxu0 %v1190
    %1795 = vmatpush1.bf16.msra.mxu0 %v1189
    %1796 = vmatprep.subr.bf16.mxu0 %v1194
    %1797 = vmatpush1.bf16.msra.mxu0 %v1193
    %1798 = vmatprep.subr.bf16.mxu0 %v1198
    %1799 = vmatpush1.bf16.msra.mxu0 %v1197
    %1800 = vmatprep.subr.bf16.mxu0 %v1202
    %1801 = vmatpush1.bf16.msra.mxu0 %v1201
    %1802 = vmatprep.subr.bf16.mxu0 %v1206
    %1803 = vmatpush1.bf16.msra.mxu0 %v1205
    %1804 = vmatprep.subr.bf16.mxu0 %v1210
    %1805 = vmatpush1.bf16.msra.mxu0 %v1209
    %1806 = vmatprep.subr.bf16.mxu0 %v1214
    %1807 = vmatpush1.bf16.msra.mxu0 %v1213
    %1808 = vmatprep.subr.bf16.mxu0 %v1218
    %1809 = vmatpush1.bf16.msra.mxu0 %v1217
    %1810 = vmatprep.subr.bf16.mxu0 %v1222
    %1811 = vmatpush1.bf16.msra.mxu0 %v1221
    %1812 = vmatprep.mubr.bf16.mxu0 %v412
    %1813 = vmatmul.mubr.bf16.gmra.mrb[0].mxu0 %v411
    %v1814 = vpop.f32.mrb[0].mxu0
    %v1815 = vadd.f32 %v1742, %v1814
    %v1816 = vpop.f32.mrb[0].mxu0
    %v1817 = vadd.f32 %v1744, %v1816
    %v1818 = vpop.f32.mrb[0].mxu0
    %v1819 = vadd.f32 %v1746, %v1818
    %v1820 = vpop.f32.mrb[0].mxu0
    %v1821 = vadd.f32 %v1748, %v1820
    %1822 = vmatprep.mubr.bf16.mxu0 %v418
    %1823 = vmatmul.mubr.bf16.gmra.mrb[0].mxu0 %v417
    %v1824 = vpop.f32.mrb[0].mxu0
    %v1825 = vadd.f32 %v1752, %v1824
    %v1826 = vpop.f32.mrb[0].mxu0
    %v1827 = vadd.f32 %v1754, %v1826
    %v1828 = vpop.f32.mrb[0].mxu0
    %v1829 = vadd.f32 %v1756, %v1828
    %v1830 = vpop.f32.mrb[0].mxu0
    %v1831 = vadd.f32 %v1758, %v1830
    %1832 = vmatprep.mubr.bf16.mxu0 %v424
    %1833 = vmatmul.mubr.bf16.gmra.mrb[0].mxu0 %v423
    %v1834 = vpop.f32.mrb[0].mxu0
    %v1835 = vadd.f32 %v1762, %v1834
    %v1836 = vpop.f32.mrb[0].mxu0
    %v1837 = vadd.f32 %v1764, %v1836
    %v1838 = vpop.f32.mrb[0].mxu0
    %v1839 = vadd.f32 %v1766, %v1838
    %v1840 = vpop.f32.mrb[0].mxu0
    %v1841 = vadd.f32 %v1768, %v1840
    %1842 = vmatprep.mubr.bf16.mxu0 %v430
    %1843 = vmatmul.mubr.bf16.gmra.mrb[0].mxu0 %v429
    %v1844 = vpop.f32.mrb[0].mxu0
    %v1845 = vadd.f32 %v1772, %v1844
    %v1846 = vpop.f32.mrb[0].mxu0
    %v1847 = vadd.f32 %v1774, %v1846
    %v1848 = vpop.f32.mrb[0].mxu0
    %v1849 = vadd.f32 %v1776, %v1848
    %v1850 = vpop.f32.mrb[0].mxu0
    %v1851 = vadd.f32 %v1778, %v1850
    %1852 = vdwg.mxu0
    %s1853 = smul.u32 0, 4
    %s1854 = smul.addr %s1853, 8
    %s1855 = scalar_lea.vmem [#allocation2], %s1854
    %1856 = vst [vmem:[%s1855] sm:$0xff] %v1596
    %1857 = vst [vmem:[%s1855 + $0x8] sm:$0xff] %v1598
    %1858 = vst [vmem:[%s1855 + $0x10] sm:$0xff] %v1815
    %1859 = vst [vmem:[%s1855 + $0x18] sm:$0xff] %v1817
    %1860 = vst [vmem:[%s1855 + $0x20] sm:$0xff] %v1600
    %1861 = vst [vmem:[%s1855 + $0x28] sm:$0xff] %v1602
    %1862 = vst [vmem:[%s1855 + $0x30] sm:$0xff] %v1819
    %1863 = vst [vmem:[%s1855 + $0x38] sm:$0xff] %v1821
    %1864 = vst [vmem:[%s1855 + $0x40] sm:$0xff] %v1606
    %1865 = vst [vmem:[%s1855 + $0x48] sm:$0xff] %v1608
    %1866 = vst [vmem:[%s1855 + $0x50] sm:$0xff] %v1825
    %1867 = vst [vmem:[%s1855 + $0x58] sm:$0xff] %v1827
    %1868 = vst [vmem:[%s1855 + $0x60] sm:$0xff] %v1610
    %1869 = vst [vmem:[%s1855 + $0x68] sm:$0xff] %v1612
    %1870 = vst [vmem:[%s1855 + $0x70] sm:$0xff] %v1829
    %1871 = vst [vmem:[%s1855 + $0x78] sm:$0xff] %v1831
    %1872 = vst [vmem:[%s1855 + $0x80] sm:$0xff] %v1616
    %1873 = vst [vmem:[%s1855 + $0x88] sm:$0xff] %v1618
    %1874 = vst [vmem:[%s1855 + $0x90] sm:$0xff] %v1835
    %1875 = vst [vmem:[%s1855 + $0x98] sm:$0xff] %v1837
    %1876 = vst [vmem:[%s1855 + $0xa0] sm:$0xff] %v1620
    %1877 = vst [vmem:[%s1855 + $0xa8] sm:$0xff] %v1622
    %1878 = vst [vmem:[%s1855 + $0xb0] sm:$0xff] %v1839
    %1879 = vst [vmem:[%s1855 + $0xb8] sm:$0xff] %v1841
    %1880 = vst [vmem:[%s1855 + $0xc0] sm:$0xff] %v1626
    %1881 = vst [vmem:[%s1855 + $0xc8] sm:$0xff] %v1628
    %1882 = vst [vmem:[%s1855 + $0xd0] sm:$0xff] %v1845
    %1883 = vst [vmem:[%s1855 + $0xd8] sm:$0xff] %v1847
    %1884 = vst [vmem:[%s1855 + $0xe0] sm:$0xff] %v1630
    %1885 = vst [vmem:[%s1855 + $0xe8] sm:$0xff] %v1632
    %1886 = vst [vmem:[%s1855 + $0xf0] sm:$0xff] %v1849
    %1887 = vst [vmem:[%s1855 + $0xf8] sm:$0xff] %v1851
    %v1888 = vld [vmem:[%s2] sm:$0xff]
    %v1889 = vld [vmem:[%s2 + $0x8] sm:$0xff]
    %v1890 = vld [vmem:[%s2 + $0x10] sm:$0xff]
    %v1891 = vld [vmem:[%s2 + $0x18] sm:$0xff]
    %v1892 = vld [vmem:[%s2 + $0x20] sm:$0xff]
    %v1893 = vld [vmem:[%s2 + $0x28] sm:$0xff]
    %v1894 = vld [vmem:[%s2 + $0x30] sm:$0xff]
    %v1895 = vld [vmem:[%s2 + $0x38] sm:$0xff]
    %v1896 = vld [vmem:[%s2 + $0x40] sm:$0xff]
    %v1897 = vld [vmem:[%s2 + $0x48] sm:$0xff]
    %v1898 = vld [vmem:[%s2 + $0x50] sm:$0xff]
    %v1899 = vld [vmem:[%s2 + $0x58] sm:$0xff]
    %v1900 = vld [vmem:[%s2 + $0x60] sm:$0xff]
    %v1901 = vld [vmem:[%s2 + $0x68] sm:$0xff]
    %v1902 = vld [vmem:[%s2 + $0x70] sm:$0xff]
    %v1903 = vld [vmem:[%s2 + $0x78] sm:$0xff]
    %v1920 = vunpack.c.l.b16 %v1888
    %v1921 = vunpack.c.h.b16 %v1888
    %v1922 = vunpack.c.l.b16 %v1889
    %v1923 = vunpack.c.h.b16 %v1889
    %v1924 = vunpack.c.l.b16 %v1890
    %v1925 = vunpack.c.h.b16 %v1890
    %v1926 = vunpack.c.l.b16 %v1891
    %v1927 = vunpack.c.h.b16 %v1891
    %v1928 = vunpack.c.l.b16 %v1892
    %v1929 = vunpack.c.h.b16 %v1892
    %v1930 = vunpack.c.l.b16 %v1893
    %v1931 = vunpack.c.h.b16 %v1893
    %v1932 = vunpack.c.l.b16 %v1894
    %v1933 = vunpack.c.h.b16 %v1894
    %v1934 = vunpack.c.l.b16 %v1895
    %v1935 = vunpack.c.h.b16 %v1895
    %v1936 = vunpack.c.l.b16 %v1896
    %v1937 = vunpack.c.h.b16 %v1896
    %v1938 = vunpack.c.l.b16 %v1897
    %v1939 = vunpack.c.h.b16 %v1897
    %v1940 = vunpack.c.l.b16 %v1898
    %v1941 = vunpack.c.h.b16 %v1898
    %v1942 = vunpack.c.l.b16 %v1899
    %v1943 = vunpack.c.h.b16 %v1899
    %v1944 = vunpack.c.l.b16 %v1900
    %v1945 = vunpack.c.h.b16 %v1900
    %v1946 = vunpack.c.l.b16 %v1901
    %v1947 = vunpack.c.h.b16 %v1901
    %v1948 = vunpack.c.l.b16 %v1902
    %v1949 = vunpack.c.h.b16 %v1902
    %v1950 = vunpack.c.l.b16 %v1903
    %v1951 = vunpack.c.h.b16 %v1903
    %v1952 = vpack.c.b16 %v1924, %v1920
    %v1953 = vpack.c.b16 %v1925, %v1921
    %v1954 = vpack.c.b16 %v1926, %v1922
    %v1955 = vpack.c.b16 %v1927, %v1923
    %v1956 = vpack.c.b16 %v1932, %v1928
    %v1957 = vpack.c.b16 %v1933, %v1929
    %v1958 = vpack.c.b16 %v1934, %v1930
    %v1959 = vpack.c.b16 %v1935, %v1931
    %v1960 = vpack.c.b16 %v1940, %v1936
    %v1961 = vpack.c.b16 %v1941, %v1937
    %v1962 = vpack.c.b16 %v1942, %v1938
    %v1963 = vpack.c.b16 %v1943, %v1939
    %v1964 = vpack.c.b16 %v1948, %v1944
    %v1965 = vpack.c.b16 %v1949, %v1945
    %v1966 = vpack.c.b16 %v1950, %v1946
    %v1967 = vpack.c.b16 %v1951, %v1947
    %vm1984 = vcmask 523264
    %v1986 = vsel %vm1984, 0, 0
    %1988 = vmatprep.subr.bf16.mxu0 %v1953
    %1989 = vmatpush1.bf16.msra.mxu0 %v1952
    %1990 = vmatprep.subr.bf16.mxu0 %v1957
    %1991 = vmatpush1.bf16.msra.mxu0 %v1956
    %1992 = vmatprep.subr.bf16.mxu0 %v1961
    %1993 = vmatpush1.bf16.msra.mxu0 %v1960
    %1994 = vmatprep.subr.bf16.mxu0 %v1965
    %1995 = vmatpush1.bf16.msra.mxu0 %v1964
    %1996 = vmatprep.subr.bf16.mxu0 0
    %1997 = vmatpush1.bf16.msra.mxu0 0
    %1998 = vmatprep.subr.bf16.mxu0 0
    %1999 = vmatpush1.bf16.msra.mxu0 0
    %2000 = vmatprep.subr.bf16.mxu0 0
    %2001 = vmatpush1.bf16.msra.mxu0 0
    %2002 = vmatprep.subr.bf16.mxu0 0
    %2003 = vmatpush1.bf16.msra.mxu0 0
    %2004 = vmatprep.subr.bf16.mxu0 0
    %2005 = vmatpush1.bf16.msra.mxu0 0
    %2006 = vmatprep.subr.bf16.mxu0 0
    %2007 = vmatpush1.bf16.msra.mxu0 0
    %2008 = vmatprep.subr.bf16.mxu0 0
    %2009 = vmatpush1.bf16.msra.mxu0 0
    %2010 = vmatprep.subr.bf16.mxu0 0
    %2011 = vmatpush1.bf16.msra.mxu0 0
    %2012 = vmatprep.subr.bf16.mxu0 0
    %2013 = vmatpush1.bf16.msra.mxu0 0
    %2014 = vmatprep.subr.bf16.mxu0 0
    %2015 = vmatpush1.bf16.msra.mxu0 0
    %2016 = vmatprep.subr.bf16.mxu0 0
    %2017 = vmatpush1.bf16.msra.mxu0 0
    %2018 = vmatprep.subr.bf16.mxu0 0
    %2019 = vmatpush1.bf16.msra.mxu0 0
    %2020 = vmatprep.mubr.bf16.mxu0 0
    %2021 = vmatmul.mubr.bf16.gmra.mrb[0].mxu0 %v1986
    %v2022 = vpop.f32.mrb[0].mxu0
    %v2023 = vadd.f32 0.0, %v2022
    %v2024 = vpop.f32.mrb[0].mxu0
    %v2025 = vadd.f32 0.0, %v2024
    %v2026 = vpop.f32.mrb[0].mxu0
    %v2027 = vpop.f32.mrb[0].mxu0
    %2028 = vdwg.mxu0
    %2029 = vmatprep.subr.bf16.mxu0 %v1955
    %2030 = vmatpush1.bf16.msra.mxu0 %v1954
    %2031 = vmatprep.subr.bf16.mxu0 %v1959
    %2032 = vmatpush1.bf16.msra.mxu0 %v1958
    %2033 = vmatprep.subr.bf16.mxu0 %v1963
    %2034 = vmatpush1.bf16.msra.mxu0 %v1962
    %2035 = vmatprep.subr.bf16.mxu0 %v1967
    %2036 = vmatpush1.bf16.msra.mxu0 %v1966
    %2037 = vmatprep.subr.bf16.mxu0 0
    %2038 = vmatpush1.bf16.msra.mxu0 0
    %2039 = vmatprep.subr.bf16.mxu0 0
    %2040 = vmatpush1.bf16.msra.mxu0 0
    %2041 = vmatprep.subr.bf16.mxu0 0
    %2042 = vmatpush1.bf16.msra.mxu0 0
    %2043 = vmatprep.subr.bf16.mxu0 0
    %2044 = vmatpush1.bf16.msra.mxu0 0
    %2045 = vmatprep.subr.bf16.mxu0 0
    %2046 = vmatpush1.bf16.msra.mxu0 0
    %2047 = vmatprep.subr.bf16.mxu0 0
    %2048 = vmatpush1.bf16.msra.mxu0 0
    %2049 = vmatprep.subr.bf16.mxu0 0
    %2050 = vmatpush1.bf16.msra.mxu0 0
    %2051 = vmatprep.subr.bf16.mxu0 0
    %2052 = vmatpush1.bf16.msra.mxu0 0
    %2053 = vmatprep.subr.bf16.mxu0 0
    %2054 = vmatpush1.bf16.msra.mxu0 0
    %2055 = vmatprep.subr.bf16.mxu0 0
    %2056 = vmatpush1.bf16.msra.mxu0 0
    %2057 = vmatprep.subr.bf16.mxu0 0
    %2058 = vmatpush1.bf16.msra.mxu0 0
    %2059 = vmatprep.subr.bf16.mxu0 0
    %2060 = vmatpush1.bf16.msra.mxu0 0
    %2061 = vmatprep.mubr.bf16.mxu0 0
    %2062 = vmatmul.mubr.bf16.gmra.mrb[0].mxu0 %v1986
    %v2063 = vpop.f32.mrb[0].mxu0
    %v2064 = vpop.f32.mrb[0].mxu0
    %v2065 = vpop.f32.mrb[0].mxu0
    %v2066 = vadd.f32 0.0, %v2065
    %v2067 = vpop.f32.mrb[0].mxu0
    %v2068 = vadd.f32 0.0, %v2067
    %2069 = vdwg.mxu0
    %v2070 = vld [vmem:[#allocation2] sm:$0xff]
    %v2071 = vld [vmem:[#allocation2 + $0x8] sm:$0xff]
    %v2072 = vadd.f32 %v2070, %v2023
    %v2073 = vadd.f32 %v2071, %v2025
    %s2074 = scalar_lea.vmem [#allocation2], 224
    %v2075 = vld [vmem:[%s2074 + $0x10] sm:$0xff]
    %v2076 = vld [vmem:[%s2074 + $0x18] sm:$0xff]
    %v2077 = vadd.f32 %v2075, %v2066
    %v2078 = vadd.f32 %v2076, %v2068
    %v2079 = vxor.u32 %v2072, 2147483648
    %v2080 = vxor.u32 %v2073, 2147483648
    %v2081 = vxor.u32 %v2077, 2147483648
    %v2082 = vxor.u32 %v2078, 2147483648
    %v2083 = vmul.f32 %v2079, 1.442695
    %v2084 = vpow.pop %v2083
    %v2085 = vmul.f32 %v2080, 1.442695
    %v2086 = vpow.pop %v2085
    %v2087 = vmul.f32 %v2081, 1.442695
    %v2088 = vpow.pop %v2087
    %v2089 = vmul.f32 %v2082, 1.442695
    %v2090 = vpow.pop %v2089
    %v2091 = vadd.f32 %v2084, 1.0
    %v2092 = vadd.f32 %v2086, 1.0
    %v2093 = vadd.f32 %v2088, 1.0
    %v2094 = vadd.f32 %v2090, 1.0
    %v2095 = vrcp.pop %v2091
    %v2096 = vmul.f32 1.0, %v2095
    %v2097 = vrcp.pop %v2092
    %v2098 = vmul.f32 1.0, %v2097
    %v2099 = vrcp.pop %v2093
    %v2100 = vmul.f32 1.0, %v2099
    %v2101 = vrcp.pop %v2094
    %v2102 = vmul.f32 1.0, %v2101
    %v2103 = vtanh.pop %v2073
    %v2104 = vtanh.pop %v2078
    %v2105 = vmul.f32 %v2096, 0.0
    %v2106 = vmul.f32 %v2100, 0.0
    %2109 = vrot.lane.b32.xlu0 %v2103, 64
    %v2110 = vpop.permute.xlu0 %2109
    %2111 = vrot.lane.b32.xlu0 %v2104, 64
    %v2112 = vpop.permute.xlu0 %2111
    %v2115 = vmul.f32 %v2096, %v2110
    %v2116 = vmul.f32 %v2100, %v2112
    %2119 = vrot.lane.b32.xlu0 %v2115, 64
    %v2120 = vpop.permute.xlu0 %2119
    %2121 = vrot.lane.b32.xlu0 %v2116, 64
    %v2122 = vpop.permute.xlu0 %2121
    %v2125 = vadd.f32 %v2105, %v2120
    %v2126 = vadd.f32 %v2106, %v2122
    %v2127 = vtanh.pop %v2125
    %v2128 = vtanh.pop %v2126
    %2131 = vrot.lane.b32.xlu0 %v2127, 64
    %v2132 = vpop.permute.xlu0 %2131
    %2133 = vrot.lane.b32.xlu0 %v2128, 64
    %v2134 = vpop.permute.xlu0 %2133
    %v2137 = vmul.f32 %v2098, %v2132
    %v2138 = vmul.f32 %v2102, %v2134
    %2139 = vst.msk [vmem:[#allocation3] sm:$0xff] %vm1984, %v2137
    %s2140 = scalar_lea.vmem [#allocation3], 112
    %2141 = vst.msk [vmem:[%s2140 + $0x8] sm:$0xff] %vm1984, %v2138
    %v2142 = vpack.c.bf16 %v2138, %v2137
    %v2144 = vsel %vm1984, %v2142, 0
    %2146 = vmatprep.subr.bf16.mxu0 %v1953
    %2147 = vmatpush1.bf16.msra.mxu0 %v1952
    %2148 = vmatprep.subr.bf16.mxu0 %v1957
    %2149 = vmatpush1.bf16.msra.mxu0 %v1956
    %2150 = vmatprep.subr.bf16.mxu0 %v1961
    %2151 = vmatpush1.bf16.msra.mxu0 %v1960
    %2152 = vmatprep.subr.bf16.mxu0 %v1965
    %2153 = vmatpush1.bf16.msra.mxu0 %v1964
    %2154 = vmatprep.subr.bf16.mxu0 0
    %2155 = vmatpush1.bf16.msra.mxu0 0
    %2156 = vmatprep.subr.bf16.mxu0 0
    %2157 = vmatpush1.bf16.msra.mxu0 0
    %2158 = vmatprep.subr.bf16.mxu0 0
    %2159 = vmatpush1.bf16.msra.mxu0 0
    %2160 = vmatprep.subr.bf16.mxu0 0
    %2161 = vmatpush1.bf16.msra.mxu0 0
    %2162 = vmatprep.subr.bf16.mxu0 0
    %2163 = vmatpush1.bf16.msra.mxu0 0
    %2164 = vmatprep.subr.bf16.mxu0 0
    %2165 = vmatpush1.bf16.msra.mxu0 0
    %2166 = vmatprep.subr.bf16.mxu0 0
    %2167 = vmatpush1.bf16.msra.mxu0 0
    %2168 = vmatprep.subr.bf16.mxu0 0
    %2169 = vmatpush1.bf16.msra.mxu0 0
    %2170 = vmatprep.subr.bf16.mxu0 0
    %2171 = vmatpush1.bf16.msra.mxu0 0
    %2172 = vmatprep.subr.bf16.mxu0 0
    %2173 = vmatpush1.bf16.msra.mxu0 0
    %2174 = vmatprep.subr.bf16.mxu0 0
    %2175 = vmatpush1.bf16.msra.mxu0 0
    %2176 = vmatprep.subr.bf16.mxu0 0
    %2177 = vmatpush1.bf16.msra.mxu0 0
    %2178 = vmatprep.mubr.bf16.mxu0 0
    %2179 = vmatmul.mubr.bf16.gmra.mrb[0].mxu0 %v2144
    %v2180 = vpop.f32.mrb[0].mxu0
    %v2181 = vadd.f32 0.0, %v2180
    %v2182 = vpop.f32.mrb[0].mxu0
    %v2183 = vadd.f32 0.0, %v2182
    %v2184 = vpop.f32.mrb[0].mxu0
    %v2185 = vpop.f32.mrb[0].mxu0
    %2186 = vdwg.mxu0
    %2187 = vmatprep.subr.bf16.mxu0 %v1955
    %2188 = vmatpush1.bf16.msra.mxu0 %v1954
    %2189 = vmatprep.subr.bf16.mxu0 %v1959
    %2190 = vmatpush1.bf16.msra.mxu0 %v1958
    %2191 = vmatprep.subr.bf16.mxu0 %v1963
    %2192 = vmatpush1.bf16.msra.mxu0 %v1962
    %2193 = vmatprep.subr.bf16.mxu0 %v1967
    %2194 = vmatpush1.bf16.msra.mxu0 %v1966
    %2195 = vmatprep.subr.bf16.mxu0 0
    %2196 = vmatpush1.bf16.msra.mxu0 0
    %2197 = vmatprep.subr.bf16.mxu0 0
    %2198 = vmatpush1.bf16.msra.mxu0 0
    %2199 = vmatprep.subr.bf16.mxu0 0
    %2200 = vmatpush1.bf16.msra.mxu0 0
    %2201 = vmatprep.subr.bf16.mxu0 0
    %2202 = vmatpush1.bf16.msra.mxu0 0
    %2203 = vmatprep.subr.bf16.mxu0 0
    %2204 = vmatpush1.bf16.msra.mxu0 0
    %2205 = vmatprep.subr.bf16.mxu0 0
    %2206 = vmatpush1.bf16.msra.mxu0 0
    %2207 = vmatprep.subr.bf16.mxu0 0
    %2208 = vmatpush1.bf16.msra.mxu0 0
    %2209 = vmatprep.subr.bf16.mxu0 0
    %2210 = vmatpush1.bf16.msra.mxu0 0
    %2211 = vmatprep.subr.bf16.mxu0 0
    %2212 = vmatpush1.bf16.msra.mxu0 0
    %2213 = vmatprep.subr.bf16.mxu0 0
    %2214 = vmatpush1.bf16.msra.mxu0 0
    %2215 = vmatprep.subr.bf16.mxu0 0
    %2216 = vmatpush1.bf16.msra.mxu0 0
    %2217 = vmatprep.subr.bf16.mxu0 0
    %2218 = vmatpush1.bf16.msra.mxu0 0
    %2219 = vmatprep.mubr.bf16.mxu0 0
    %2220 = vmatmul.mubr.bf16.gmra.mrb[0].mxu0 %v2144
    %v2221 = vpop.f32.mrb[0].mxu0
    %v2222 = vpop.f32.mrb[0].mxu0
    %v2223 = vpop.f32.mrb[0].mxu0
    %v2224 = vadd.f32 0.0, %v2223
    %v2225 = vpop.f32.mrb[0].mxu0
    %v2226 = vadd.f32 0.0, %v2225
    %2227 = vdwg.mxu0
    %s2228 = scalar_lea.vmem [#allocation2], 32
    %v2229 = vld [vmem:[%s2228] sm:$0xff]
    %v2230 = vld [vmem:[%s2228 + $0x8] sm:$0xff]
    %v2231 = vadd.f32 %v2229, %v2181
    %v2232 = vadd.f32 %v2230, %v2183
    %s2233 = scalar_lea.vmem [#allocation2], 192
    %v2234 = vld [vmem:[%s2233 + $0x10] sm:$0xff]
    %v2235 = vld [vmem:[%s2233 + $0x18] sm:$0xff]
    %v2236 = vadd.f32 %v2234, %v2224
    %v2237 = vadd.f32 %v2235, %v2226
    %v2238 = vxor.u32 %v2231, 2147483648
    %v2239 = vxor.u32 %v2232, 2147483648
    %v2240 = vxor.u32 %v2236, 2147483648
    %v2241 = vxor.u32 %v2237, 2147483648
    %v2242 = vmul.f32 %v2238, 1.442695
    %v2243 = vpow.pop %v2242
    %v2244 = vmul.f32 %v2239, 1.442695
    %v2245 = vpow.pop %v2244
    %v2246 = vmul.f32 %v2240, 1.442695
    %v2247 = vpow.pop %v2246
    %v2248 = vmul.f32 %v2241, 1.442695
    %v2249 = vpow.pop %v2248
    %v2250 = vadd.f32 %v2243, 1.0
    %v2251 = vadd.f32 %v2245, 1.0
    %v2252 = vadd.f32 %v2247, 1.0
    %v2253 = vadd.f32 %v2249, 1.0
    %v2254 = vrcp.pop %v2250
    %v2255 = vmul.f32 1.0, %v2254
    %v2256 = vrcp.pop %v2251
    %v2257 = vmul.f32 1.0, %v2256
    %v2258 = vrcp.pop %v2252
    %v2259 = vmul.f32 1.0, %v2258
    %v2260 = vrcp.pop %v2253
    %v2261 = vmul.f32 1.0, %v2260
    %v2262 = vtanh.pop %v2232
    %v2263 = vtanh.pop %v2237
    %v2264 = vmul.f32 %v2255, %v2125
    %v2265 = vmul.f32 %v2259, %v2126
    %2268 = vrot.lane.b32.xlu0 %v2262, 64
    %v2269 = vpop.permute.xlu0 %2268
    %2270 = vrot.lane.b32.xlu0 %v2263, 64
    %v2271 = vpop.permute.xlu0 %2270
    %v2274 = vmul.f32 %v2255, %v2269
    %v2275 = vmul.f32 %v2259, %v2271
    %2278 = vrot.lane.b32.xlu0 %v2274, 64
    %v2279 = vpop.permute.xlu0 %2278
    %2280 = vrot.lane.b32.xlu0 %v2275, 64
    %v2281 = vpop.permute.xlu0 %2280
    %v2284 = vadd.f32 %v2264, %v2279
    %v2285 = vadd.f32 %v2265, %v2281
    %v2286 = vtanh.pop %v2284
    %v2287 = vtanh.pop %v2285
    %2290 = vrot.lane.b32.xlu0 %v2286, 64
    %v2291 = vpop.permute.xlu0 %2290
    %2292 = vrot.lane.b32.xlu0 %v2287, 64
    %v2293 = vpop.permute.xlu0 %2292
    %v2296 = vmul.f32 %v2257, %v2291
    %v2297 = vmul.f32 %v2261, %v2293
    %s2298 = scalar_lea.vmem [#allocation3], 16
    %2299 = vst.msk [vmem:[%s2298] sm:$0xff] %vm1984, %v2296
    %s2300 = scalar_lea.vmem [#allocation3], 96
    %2301 = vst.msk [vmem:[%s2300 + $0x8] sm:$0xff] %vm1984, %v2297
    %v2302 = vpack.c.bf16 %v2297, %v2296
    %v2304 = vsel %vm1984, %v2302, 0
    %2306 = vmatprep.subr.bf16.mxu0 %v1953
    %2307 = vmatpush1.bf16.msra.mxu0 %v1952
    %2308 = vmatprep.subr.bf16.mxu0 %v1957
    %2309 = vmatpush1.bf16.msra.mxu0 %v1956
    %2310 = vmatprep.subr.bf16.mxu0 %v1961
    %2311 = vmatpush1.bf16.msra.mxu0 %v1960
    %2312 = vmatprep.subr.bf16.mxu0 %v1965
    %2313 = vmatpush1.bf16.msra.mxu0 %v1964
    %2314 = vmatprep.subr.bf16.mxu0 0
    %2315 = vmatpush1.bf16.msra.mxu0 0
    %2316 = vmatprep.subr.bf16.mxu0 0
    %2317 = vmatpush1.bf16.msra.mxu0 0
    %2318 = vmatprep.subr.bf16.mxu0 0
    %2319 = vmatpush1.bf16.msra.mxu0 0
    %2320 = vmatprep.subr.bf16.mxu0 0
    %2321 = vmatpush1.bf16.msra.mxu0 0
    %2322 = vmatprep.subr.bf16.mxu0 0
    %2323 = vmatpush1.bf16.msra.mxu0 0
    %2324 = vmatprep.subr.bf16.mxu0 0
    %2325 = vmatpush1.bf16.msra.mxu0 0
    %2326 = vmatprep.subr.bf16.mxu0 0
    %2327 = vmatpush1.bf16.msra.mxu0 0
    %2328 = vmatprep.subr.bf16.mxu0 0
    %2329 = vmatpush1.bf16.msra.mxu0 0
    %2330 = vmatprep.subr.bf16.mxu0 0
    %2331 = vmatpush1.bf16.msra.mxu0 0
    %2332 = vmatprep.subr.bf16.mxu0 0
    %2333 = vmatpush1.bf16.msra.mxu0 0
    %2334 = vmatprep.subr.bf16.mxu0 0
    %2335 = vmatpush1.bf16.msra.mxu0 0
    %2336 = vmatprep.subr.bf16.mxu0 0
    %2337 = vmatpush1.bf16.msra.mxu0 0
    %2338 = vmatprep.mubr.bf16.mxu0 0
    %2339 = vmatmul.mubr.bf16.gmra.mrb[0].mxu0 %v2304
    %v2340 = vpop.f32.mrb[0].mxu0
    %v2341 = vadd.f32 0.0, %v2340
    %v2342 = vpop.f32.mrb[0].mxu0
    %v2343 = vadd.f32 0.0, %v2342
    %v2344 = vpop.f32.mrb[0].mxu0
    %v2345 = vpop.f32.mrb[0].mxu0
    %2346 = vdwg.mxu0
    %2347 = vmatprep.subr.bf16.mxu0 %v1955
    %2348 = vmatpush1.bf16.msra.mxu0 %v1954
    %2349 = vmatprep.subr.bf16.mxu0 %v1959
    %2350 = vmatpush1.bf16.msra.mxu0 %v1958
    %2351 = vmatprep.subr.bf16.mxu0 %v1963
    %2352 = vmatpush1.bf16.msra.mxu0 %v1962
    %2353 = vmatprep.subr.bf16.mxu0 %v1967
    %2354 = vmatpush1.bf16.msra.mxu0 %v1966
    %2355 = vmatprep.subr.bf16.mxu0 0
    %2356 = vmatpush1.bf16.msra.mxu0 0
    %2357 = vmatprep.subr.bf16.mxu0 0
    %2358 = vmatpush1.bf16.msra.mxu0 0
    %2359 = vmatprep.subr.bf16.mxu0 0
    %2360 = vmatpush1.bf16.msra.mxu0 0
    %2361 = vmatprep.subr.bf16.mxu0 0
    %2362 = vmatpush1.bf16.msra.mxu0 0
    %2363 = vmatprep.subr.bf16.mxu0 0
    %2364 = vmatpush1.bf16.msra.mxu0 0
    %2365 = vmatprep.subr.bf16.mxu0 0
    %2366 = vmatpush1.bf16.msra.mxu0 0
    %2367 = vmatprep.subr.bf16.mxu0 0
    %2368 = vmatpush1.bf16.msra.mxu0 0
    %2369 = vmatprep.subr.bf16.mxu0 0
    %2370 = vmatpush1.bf16.msra.mxu0 0
    %2371 = vmatprep.subr.bf16.mxu0 0
    %2372 = vmatpush1.bf16.msra.mxu0 0
    %2373 = vmatprep.subr.bf16.mxu0 0
    %2374 = vmatpush1.bf16.msra.mxu0 0
    %2375 = vmatprep.subr.bf16.mxu0 0
    %2376 = vmatpush1.bf16.msra.mxu0 0
    %2377 = vmatprep.subr.bf16.mxu0 0
    %2378 = vmatpush1.bf16.msra.mxu0 0
    %2379 = vmatprep.mubr.bf16.mxu0 0
    %2380 = vmatmul.mubr.bf16.gmra.mrb[0].mxu0 %v2304
    %v2381 = vpop.f32.mrb[0].mxu0
    %v2382 = vpop.f32.mrb[0].mxu0
    %v2383 = vpop.f32.mrb[0].mxu0
    %v2384 = vadd.f32 0.0, %v2383
    %v2385 = vpop.f32.mrb[0].mxu0
    %v2386 = vadd.f32 0.0, %v2385
    %2387 = vdwg.mxu0
    %s2388 = scalar_lea.vmem [#allocation2], 64
    %v2389 = vld [vmem:[%s2388] sm:$0xff]
    %v2390 = vld [vmem:[%s2388 + $0x8] sm:$0xff]
    %v2391 = vadd.f32 %v2389, %v2341
    %v2392 = vadd.f32 %v2390, %v2343
    %s2393 = scalar_lea.vmem [#allocation2], 160
    %v2394 = vld [vmem:[%s2393 + $0x10] sm:$0xff]
    %v2395 = vld [vmem:[%s2393 + $0x18] sm:$0xff]
    %v2396 = vadd.f32 %v2394, %v2384
    %v2397 = vadd.f32 %v2395, %v2386
    %v2398 = vxor.u32 %v2391, 2147483648
    %v2399 = vxor.u32 %v2392, 2147483648
    %v2400 = vxor.u32 %v2396, 2147483648
    %v2401 = vxor.u32 %v2397, 2147483648
    %v2402 = vmul.f32 %v2398, 1.442695
    %v2403 = vpow.pop %v2402
    %v2404 = vmul.f32 %v2399, 1.442695
    %v2405 = vpow.pop %v2404
    %v2406 = vmul.f32 %v2400, 1.442695
    %v2407 = vpow.pop %v2406
    %v2408 = vmul.f32 %v2401, 1.442695
    %v2409 = vpow.pop %v2408
    %v2410 = vadd.f32 %v2403, 1.0
    %v2411 = vadd.f32 %v2405, 1.0
    %v2412 = vadd.f32 %v2407, 1.0
    %v2413 = vadd.f32 %v2409, 1.0
    %v2414 = vrcp.pop %v2410
    %v2415 = vmul.f32 1.0, %v2414
    %v2416 = vrcp.pop %v2411
    %v2417 = vmul.f32 1.0, %v2416
    %v2418 = vrcp.pop %v2412
    %v2419 = vmul.f32 1.0, %v2418
    %v2420 = vrcp.pop %v2413
    %v2421 = vmul.f32 1.0, %v2420
    %v2422 = vtanh.pop %v2392
    %v2423 = vtanh.pop %v2397
    %v2424 = vmul.f32 %v2415, %v2284
    %v2425 = vmul.f32 %v2419, %v2285
    %2428 = vrot.lane.b32.xlu0 %v2422, 64
    %v2429 = vpop.permute.xlu0 %2428
    %2430 = vrot.lane.b32.xlu0 %v2423, 64
    %v2431 = vpop.permute.xlu0 %2430
    %v2434 = vmul.f32 %v2415, %v2429
    %v2435 = vmul.f32 %v2419, %v2431
    %2438 = vrot.lane.b32.xlu0 %v2434, 64
    %v2439 = vpop.permute.xlu0 %2438
    %2440 = vrot.lane.b32.xlu0 %v2435, 64
    %v2441 = vpop.permute.xlu0 %2440
    %v2444 = vadd.f32 %v2424, %v2439
    %v2445 = vadd.f32 %v2425, %v2441
    %v2446 = vtanh.pop %v2444
    %v2447 = vtanh.pop %v2445
    %2450 = vrot.lane.b32.xlu0 %v2446, 64
    %v2451 = vpop.permute.xlu0 %2450
    %2452 = vrot.lane.b32.xlu0 %v2447, 64
    %v2453 = vpop.permute.xlu0 %2452
    %v2456 = vmul.f32 %v2417, %v2451
    %v2457 = vmul.f32 %v2421, %v2453
    %s2458 = scalar_lea.vmem [#allocation3], 32
    %2459 = vst.msk [vmem:[%s2458] sm:$0xff] %vm1984, %v2456
    %s2460 = scalar_lea.vmem [#allocation3], 80
    %2461 = vst.msk [vmem:[%s2460 + $0x8] sm:$0xff] %vm1984, %v2457
    %v2462 = vpack.c.bf16 %v2457, %v2456
    %v2464 = vsel %vm1984, %v2462, 0
    %2466 = vmatprep.subr.bf16.mxu0 %v1953
    %2467 = vmatpush1.bf16.msra.mxu0 %v1952
    %2468 = vmatprep.subr.bf16.mxu0 %v1957
    %2469 = vmatpush1.bf16.msra.mxu0 %v1956
    %2470 = vmatprep.subr.bf16.mxu0 %v1961
    %2471 = vmatpush1.bf16.msra.mxu0 %v1960
    %2472 = vmatprep.subr.bf16.mxu0 %v1965
    %2473 = vmatpush1.bf16.msra.mxu0 %v1964
    %2474 = vmatprep.subr.bf16.mxu0 0
    %2475 = vmatpush1.bf16.msra.mxu0 0
    %2476 = vmatprep.subr.bf16.mxu0 0
    %2477 = vmatpush1.bf16.msra.mxu0 0
    %2478 = vmatprep.subr.bf16.mxu0 0
    %2479 = vmatpush1.bf16.msra.mxu0 0
    %2480 = vmatprep.subr.bf16.mxu0 0
    %2481 = vmatpush1.bf16.msra.mxu0 0
    %2482 = vmatprep.subr.bf16.mxu0 0
    %2483 = vmatpush1.bf16.msra.mxu0 0
    %2484 = vmatprep.subr.bf16.mxu0 0
    %2485 = vmatpush1.bf16.msra.mxu0 0
    %2486 = vmatprep.subr.bf16.mxu0 0
    %2487 = vmatpush1.bf16.msra.mxu0 0
    %2488 = vmatprep.subr.bf16.mxu0 0
    %2489 = vmatpush1.bf16.msra.mxu0 0
    %2490 = vmatprep.subr.bf16.mxu0 0
    %2491 = vmatpush1.bf16.msra.mxu0 0
    %2492 = vmatprep.subr.bf16.mxu0 0
    %2493 = vmatpush1.bf16.msra.mxu0 0
    %2494 = vmatprep.subr.bf16.mxu0 0
    %2495 = vmatpush1.bf16.msra.mxu0 0
    %2496 = vmatprep.subr.bf16.mxu0 0
    %2497 = vmatpush1.bf16.msra.mxu0 0
    %2498 = vmatprep.mubr.bf16.mxu0 0
    %2499 = vmatmul.mubr.bf16.gmra.mrb[0].mxu0 %v2464
    %v2500 = vpop.f32.mrb[0].mxu0
    %v2501 = vadd.f32 0.0, %v2500
    %v2502 = vpop.f32.mrb[0].mxu0
    %v2503 = vadd.f32 0.0, %v2502
    %v2504 = vpop.f32.mrb[0].mxu0
    %v2505 = vpop.f32.mrb[0].mxu0
    %2506 = vdwg.mxu0
    %2507 = vmatprep.subr.bf16.mxu0 %v1955
    %2508 = vmatpush1.bf16.msra.mxu0 %v1954
    %2509 = vmatprep.subr.bf16.mxu0 %v1959
    %2510 = vmatpush1.bf16.msra.mxu0 %v1958
    %2511 = vmatprep.subr.bf16.mxu0 %v1963
    %2512 = vmatpush1.bf16.msra.mxu0 %v1962
    %2513 = vmatprep.subr.bf16.mxu0 %v1967
    %2514 = vmatpush1.bf16.msra.mxu0 %v1966
    %2515 = vmatprep.subr.bf16.mxu0 0
    %2516 = vmatpush1.bf16.msra.mxu0 0
    %2517 = vmatprep.subr.bf16.mxu0 0
    %2518 = vmatpush1.bf16.msra.mxu0 0
    %2519 = vmatprep.subr.bf16.mxu0 0
    %2520 = vmatpush1.bf16.msra.mxu0 0
    %2521 = vmatprep.subr.bf16.mxu0 0
    %2522 = vmatpush1.bf16.msra.mxu0 0
    %2523 = vmatprep.subr.bf16.mxu0 0
    %2524 = vmatpush1.bf16.msra.mxu0 0
    %2525 = vmatprep.subr.bf16.mxu0 0
    %2526 = vmatpush1.bf16.msra.mxu0 0
    %2527 = vmatprep.subr.bf16.mxu0 0
    %2528 = vmatpush1.bf16.msra.mxu0 0
    %2529 = vmatprep.subr.bf16.mxu0 0
    %2530 = vmatpush1.bf16.msra.mxu0 0
    %2531 = vmatprep.subr.bf16.mxu0 0
    %2532 = vmatpush1.bf16.msra.mxu0 0
    %2533 = vmatprep.subr.bf16.mxu0 0
    %2534 = vmatpush1.bf16.msra.mxu0 0
    %2535 = vmatprep.subr.bf16.mxu0 0
    %2536 = vmatpush1.bf16.msra.mxu0 0
    %2537 = vmatprep.subr.bf16.mxu0 0
    %2538 = vmatpush1.bf16.msra.mxu0 0
    %2539 = vmatprep.mubr.bf16.mxu0 0
    %2540 = vmatmul.mubr.bf16.gmra.mrb[0].mxu0 %v2464
    %v2541 = vpop.f32.mrb[0].mxu0
    %v2542 = vpop.f32.mrb[0].mxu0
    %v2543 = vpop.f32.mrb[0].mxu0
    %v2544 = vadd.f32 0.0, %v2543
    %v2545 = vpop.f32.mrb[0].mxu0
    %v2546 = vadd.f32 0.0, %v2545
    %2547 = vdwg.mxu0
    %s2548 = scalar_lea.vmem [#allocation2], 96
    %v2549 = vld [vmem:[%s2548] sm:$0xff]
    %v2550 = vld [vmem:[%s2548 + $0x8] sm:$0xff]
    %v2551 = vadd.f32 %v2549, %v2501
    %v2552 = vadd.f32 %v2550, %v2503
    %s2553 = scalar_lea.vmem [#allocation2], 128
    %v2554 = vld [vmem:[%s2553 + $0x10] sm:$0xff]
    %v2555 = vld [vmem:[%s2553 + $0x18] sm:$0xff]
    %v2556 = vadd.f32 %v2554, %v2544
    %v2557 = vadd.f32 %v2555, %v2546
    %v2558 = vxor.u32 %v2551, 2147483648
    %v2559 = vxor.u32 %v2552, 2147483648
    %v2560 = vxor.u32 %v2556, 2147483648
    %v2561 = vxor.u32 %v2557, 2147483648
    %v2562 = vmul.f32 %v2558, 1.442695
    %v2563 = vpow.pop %v2562
    %v2564 = vmul.f32 %v2559, 1.442695
    %v2565 = vpow.pop %v2564
    %v2566 = vmul.f32 %v2560, 1.442695
    %v2567 = vpow.pop %v2566
    %v2568 = vmul.f32 %v2561, 1.442695
    %v2569 = vpow.pop %v2568
    %v2570 = vadd.f32 %v2563, 1.0
    %v2571 = vadd.f32 %v2565, 1.0
    %v2572 = vadd.f32 %v2567, 1.0
    %v2573 = vadd.f32 %v2569, 1.0
    %v2574 = vrcp.pop %v2570
    %v2575 = vmul.f32 1.0, %v2574
    %v2576 = vrcp.pop %v2571
    %v2577 = vmul.f32 1.0, %v2576
    %v2578 = vrcp.pop %v2572
    %v2579 = vmul.f32 1.0, %v2578
    %v2580 = vrcp.pop %v2573
    %v2581 = vmul.f32 1.0, %v2580
    %v2582 = vtanh.pop %v2552
    %v2583 = vtanh.pop %v2557
    %v2584 = vmul.f32 %v2575, %v2444
    %v2585 = vmul.f32 %v2579, %v2445
    %2588 = vrot.lane.b32.xlu0 %v2582, 64
    %v2589 = vpop.permute.xlu0 %2588
    %2590 = vrot.lane.b32.xlu0 %v2583, 64
    %v2591 = vpop.permute.xlu0 %2590
    %v2594 = vmul.f32 %v2575, %v2589
    %v2595 = vmul.f32 %v2579, %v2591
    %2598 = vrot.lane.b32.xlu0 %v2594, 64
    %v2599 = vpop.permute.xlu0 %2598
    %2600 = vrot.lane.b32.xlu0 %v2595, 64
    %v2601 = vpop.permute.xlu0 %2600
    %v2604 = vadd.f32 %v2584, %v2599
    %v2605 = vadd.f32 %v2585, %v2601
    %v2606 = vtanh.pop %v2604
    %v2607 = vtanh.pop %v2605
    %2610 = vrot.lane.b32.xlu0 %v2606, 64
    %v2611 = vpop.permute.xlu0 %2610
    %2612 = vrot.lane.b32.xlu0 %v2607, 64
    %v2613 = vpop.permute.xlu0 %2612
    %v2616 = vmul.f32 %v2577, %v2611
    %v2617 = vmul.f32 %v2581, %v2613
    %s2618 = scalar_lea.vmem [#allocation3], 48
    %2619 = vst.msk [vmem:[%s2618] sm:$0xff] %vm1984, %v2616
    %s2620 = scalar_lea.vmem [#allocation3], 64
    %2621 = vst.msk [vmem:[%s2620 + $0x8] sm:$0xff] %vm1984, %v2617
    %v2622 = vpack.c.bf16 %v2617, %v2616
    %v2624 = vsel %vm1984, %v2622, 0
    %2626 = vmatprep.subr.bf16.mxu0 %v1953
    %2627 = vmatpush1.bf16.msra.mxu0 %v1952
    %2628 = vmatprep.subr.bf16.mxu0 %v1957
    %2629 = vmatpush1.bf16.msra.mxu0 %v1956
    %2630 = vmatprep.subr.bf16.mxu0 %v1961
    %2631 = vmatpush1.bf16.msra.mxu0 %v1960
    %2632 = vmatprep.subr.bf16.mxu0 %v1965
    %2633 = vmatpush1.bf16.msra.mxu0 %v1964
    %2634 = vmatprep.subr.bf16.mxu0 0
    %2635 = vmatpush1.bf16.msra.mxu0 0
    %2636 = vmatprep.subr.bf16.mxu0 0
    %2637 = vmatpush1.bf16.msra.mxu0 0
    %2638 = vmatprep.subr.bf16.mxu0 0
    %2639 = vmatpush1.bf16.msra.mxu0 0
    %2640 = vmatprep.subr.bf16.mxu0 0
    %2641 = vmatpush1.bf16.msra.mxu0 0
    %2642 = vmatprep.subr.bf16.mxu0 0
    %2643 = vmatpush1.bf16.msra.mxu0 0
    %2644 = vmatprep.subr.bf16.mxu0 0
    %2645 = vmatpush1.bf16.msra.mxu0 0
    %2646 = vmatprep.subr.bf16.mxu0 0
    %2647 = vmatpush1.bf16.msra.mxu0 0
    %2648 = vmatprep.subr.bf16.mxu0 0
    %2649 = vmatpush1.bf16.msra.mxu0 0
    %2650 = vmatprep.subr.bf16.mxu0 0
    %2651 = vmatpush1.bf16.msra.mxu0 0
    %2652 = vmatprep.subr.bf16.mxu0 0
    %2653 = vmatpush1.bf16.msra.mxu0 0
    %2654 = vmatprep.subr.bf16.mxu0 0
    %2655 = vmatpush1.bf16.msra.mxu0 0
    %2656 = vmatprep.subr.bf16.mxu0 0
    %2657 = vmatpush1.bf16.msra.mxu0 0
    %2658 = vmatprep.mubr.bf16.mxu0 0
    %2659 = vmatmul.mubr.bf16.gmra.mrb[0].mxu0 %v2624
    %v2660 = vpop.f32.mrb[0].mxu0
    %v2661 = vadd.f32 0.0, %v2660
    %v2662 = vpop.f32.mrb[0].mxu0
    %v2663 = vadd.f32 0.0, %v2662
    %v2664 = vpop.f32.mrb[0].mxu0
    %v2665 = vpop.f32.mrb[0].mxu0
    %2666 = vdwg.mxu0
    %2667 = vmatprep.subr.bf16.mxu0 %v1955
    %2668 = vmatpush1.bf16.msra.mxu0 %v1954
    %2669 = vmatprep.subr.bf16.mxu0 %v1959
    %2670 = vmatpush1.bf16.msra.mxu0 %v1958
    %2671 = vmatprep.subr.bf16.mxu0 %v1963
    %2672 = vmatpush1.bf16.msra.mxu0 %v1962
    %2673 = vmatprep.subr.bf16.mxu0 %v1967
    %2674 = vmatpush1.bf16.msra.mxu0 %v1966
    %2675 = vmatprep.subr.bf16.mxu0 0
    %2676 = vmatpush1.bf16.msra.mxu0 0
    %2677 = vmatprep.subr.bf16.mxu0 0
    %2678 = vmatpush1.bf16.msra.mxu0 0
    %2679 = vmatprep.subr.bf16.mxu0 0
    %2680 = vmatpush1.bf16.msra.mxu0 0
    %2681 = vmatprep.subr.bf16.mxu0 0
    %2682 = vmatpush1.bf16.msra.mxu0 0
    %2683 = vmatprep.subr.bf16.mxu0 0
    %2684 = vmatpush1.bf16.msra.mxu0 0
    %2685 = vmatprep.subr.bf16.mxu0 0
    %2686 = vmatpush1.bf16.msra.mxu0 0
    %2687 = vmatprep.subr.bf16.mxu0 0
    %2688 = vmatpush1.bf16.msra.mxu0 0
    %2689 = vmatprep.subr.bf16.mxu0 0
    %2690 = vmatpush1.bf16.msra.mxu0 0
    %2691 = vmatprep.subr.bf16.mxu0 0
    %2692 = vmatpush1.bf16.msra.mxu0 0
    %2693 = vmatprep.subr.bf16.mxu0 0
    %2694 = vmatpush1.bf16.msra.mxu0 0
    %2695 = vmatprep.subr.bf16.mxu0 0
    %2696 = vmatpush1.bf16.msra.mxu0 0
    %2697 = vmatprep.subr.bf16.mxu0 0
    %2698 = vmatpush1.bf16.msra.mxu0 0
    %2699 = vmatprep.mubr.bf16.mxu0 0
    %2700 = vmatmul.mubr.bf16.gmra.mrb[0].mxu0 %v2624
    %v2701 = vpop.f32.mrb[0].mxu0
    %v2702 = vpop.f32.mrb[0].mxu0
    %v2703 = vpop.f32.mrb[0].mxu0
    %v2704 = vadd.f32 0.0, %v2703
    %v2705 = vpop.f32.mrb[0].mxu0
    %v2706 = vadd.f32 0.0, %v2705
    %2707 = vdwg.mxu0
    %v2708 = vld [vmem:[%s2553] sm:$0xff]
    %v2709 = vld [vmem:[%s2553 + $0x8] sm:$0xff]
    %v2710 = vadd.f32 %v2708, %v2661
    %v2711 = vadd.f32 %v2709, %v2663
    %v2712 = vld [vmem:[%s2548 + $0x10] sm:$0xff]
    %v2713 = vld [vmem:[%s2548 + $0x18] sm:$0xff]
    %v2714 = vadd.f32 %v2712, %v2704
    %v2715 = vadd.f32 %v2713, %v2706
    %v2716 = vxor.u32 %v2710, 2147483648
    %v2717 = vxor.u32 %v2711, 2147483648
    %v2718 = vxor.u32 %v2714, 2147483648
    %v2719 = vxor.u32 %v2715, 2147483648
    %v2720 = vmul.f32 %v2716, 1.442695
    %v2721 = vpow.pop %v2720
    %v2722 = vmul.f32 %v2717, 1.442695
    %v2723 = vpow.pop %v2722
    %v2724 = vmul.f32 %v2718, 1.442695
    %v2725 = vpow.pop %v2724
    %v2726 = vmul.f32 %v2719, 1.442695
    %v2727 = vpow.pop %v2726
    %v2728 = vadd.f32 %v2721, 1.0
    %v2729 = vadd.f32 %v2723, 1.0
    %v2730 = vadd.f32 %v2725, 1.0
    %v2731 = vadd.f32 %v2727, 1.0
    %v2732 = vrcp.pop %v2728
    %v2733 = vmul.f32 1.0, %v2732
    %v2734 = vrcp.pop %v2729
    %v2735 = vmul.f32 1.0, %v2734
    %v2736 = vrcp.pop %v2730
    %v2737 = vmul.f32 1.0, %v2736
    %v2738 = vrcp.pop %v2731
    %v2739 = vmul.f32 1.0, %v2738
    %v2740 = vtanh.pop %v2711
    %v2741 = vtanh.pop %v2715
    %v2742 = vmul.f32 %v2733, %v2604
    %v2743 = vmul.f32 %v2737, %v2605
    %2746 = vrot.lane.b32.xlu0 %v2740, 64
    %v2747 = vpop.permute.xlu0 %2746
    %2748 = vrot.lane.b32.xlu0 %v2741, 64
    %v2749 = vpop.permute.xlu0 %2748
    %v2752 = vmul.f32 %v2733, %v2747
    %v2753 = vmul.f32 %v2737, %v2749
    %2756 = vrot.lane.b32.xlu0 %v2752, 64
    %v2757 = vpop.permute.xlu0 %2756
    %2758 = vrot.lane.b32.xlu0 %v2753, 64
    %v2759 = vpop.permute.xlu0 %2758
    %v2762 = vadd.f32 %v2742, %v2757
    %v2763 = vadd.f32 %v2743, %v2759
    %v2764 = vtanh.pop %v2762
    %v2765 = vtanh.pop %v2763
    %2768 = vrot.lane.b32.xlu0 %v2764, 64
    %v2769 = vpop.permute.xlu0 %2768
    %2770 = vrot.lane.b32.xlu0 %v2765, 64
    %v2771 = vpop.permute.xlu0 %2770
    %v2774 = vmul.f32 %v2735, %v2769
    %v2775 = vmul.f32 %v2739, %v2771
    %2776 = vst.msk [vmem:[%s2620] sm:$0xff] %vm1984, %v2774
    %2777 = vst.msk [vmem:[%s2618 + $0x8] sm:$0xff] %vm1984, %v2775
    %v2778 = vpack.c.bf16 %v2775, %v2774
    %v2780 = vsel %vm1984, %v2778, 0
    %2782 = vmatprep.subr.bf16.mxu0 %v1953
    %2783 = vmatpush1.bf16.msra.mxu0 %v1952
    %2784 = vmatprep.subr.bf16.mxu0 %v1957
    %2785 = vmatpush1.bf16.msra.mxu0 %v1956
    %2786 = vmatprep.subr.bf16.mxu0 %v1961
    %2787 = vmatpush1.bf16.msra.mxu0 %v1960
    %2788 = vmatprep.subr.bf16.mxu0 %v1965
    %2789 = vmatpush1.bf16.msra.mxu0 %v1964
    %2790 = vmatprep.subr.bf16.mxu0 0
    %2791 = vmatpush1.bf16.msra.mxu0 0
    %2792 = vmatprep.subr.bf16.mxu0 0
    %2793 = vmatpush1.bf16.msra.mxu0 0
    %2794 = vmatprep.subr.bf16.mxu0 0
    %2795 = vmatpush1.bf16.msra.mxu0 0
    %2796 = vmatprep.subr.bf16.mxu0 0
    %2797 = vmatpush1.bf16.msra.mxu0 0
    %2798 = vmatprep.subr.bf16.mxu0 0
    %2799 = vmatpush1.bf16.msra.mxu0 0
    %2800 = vmatprep.subr.bf16.mxu0 0
    %2801 = vmatpush1.bf16.msra.mxu0 0
    %2802 = vmatprep.subr.bf16.mxu0 0
    %2803 = vmatpush1.bf16.msra.mxu0 0
    %2804 = vmatprep.subr.bf16.mxu0 0
    %2805 = vmatpush1.bf16.msra.mxu0 0
    %2806 = vmatprep.subr.bf16.mxu0 0
    %2807 = vmatpush1.bf16.msra.mxu0 0
    %2808 = vmatprep.subr.bf16.mxu0 0
    %2809 = vmatpush1.bf16.msra.mxu0 0
    %2810 = vmatprep.subr.bf16.mxu0 0
    %2811 = vmatpush1.bf16.msra.mxu0 0
    %2812 = vmatprep.subr.bf16.mxu0 0
    %2813 = vmatpush1.bf16.msra.mxu0 0
    %2814 = vmatprep.mubr.bf16.mxu0 0
    %2815 = vmatmul.mubr.bf16.gmra.mrb[0].mxu0 %v2780
    %v2816 = vpop.f32.mrb[0].mxu0
    %v2817 = vadd.f32 0.0, %v2816
    %v2818 = vpop.f32.mrb[0].mxu0
    %v2819 = vadd.f32 0.0, %v2818
    %v2820 = vpop.f32.mrb[0].mxu0
    %v2821 = vpop.f32.mrb[0].mxu0
    %2822 = vdwg.mxu0
    %2823 = vmatprep.subr.bf16.mxu0 %v1955
    %2824 = vmatpush1.bf16.msra.mxu0 %v1954
    %2825 = vmatprep.subr.bf16.mxu0 %v1959
    %2826 = vmatpush1.bf16.msra.mxu0 %v1958
    %2827 = vmatprep.subr.bf16.mxu0 %v1963
    %2828 = vmatpush1.bf16.msra.mxu0 %v1962
    %2829 = vmatprep.subr.bf16.mxu0 %v1967
    %2830 = vmatpush1.bf16.msra.mxu0 %v1966
    %2831 = vmatprep.subr.bf16.mxu0 0
    %2832 = vmatpush1.bf16.msra.mxu0 0
    %2833 = vmatprep.subr.bf16.mxu0 0
    %2834 = vmatpush1.bf16.msra.mxu0 0
    %2835 = vmatprep.subr.bf16.mxu0 0
    %2836 = vmatpush1.bf16.msra.mxu0 0
    %2837 = vmatprep.subr.bf16.mxu0 0
    %2838 = vmatpush1.bf16.msra.mxu0 0
    %2839 = vmatprep.subr.bf16.mxu0 0
    %2840 = vmatpush1.bf16.msra.mxu0 0
    %2841 = vmatprep.subr.bf16.mxu0 0
    %2842 = vmatpush1.bf16.msra.mxu0 0
    %2843 = vmatprep.subr.bf16.mxu0 0
    %2844 = vmatpush1.bf16.msra.mxu0 0
    %2845 = vmatprep.subr.bf16.mxu0 0
    %2846 = vmatpush1.bf16.msra.mxu0 0
    %2847 = vmatprep.subr.bf16.mxu0 0
    %2848 = vmatpush1.bf16.msra.mxu0 0
    %2849 = vmatprep.subr.bf16.mxu0 0
    %2850 = vmatpush1.bf16.msra.mxu0 0
    %2851 = vmatprep.subr.bf16.mxu0 0
    %2852 = vmatpush1.bf16.msra.mxu0 0
    %2853 = vmatprep.subr.bf16.mxu0 0
    %2854 = vmatpush1.bf16.msra.mxu0 0
    %2855 = vmatprep.mubr.bf16.mxu0 0
    %2856 = vmatmul.mubr.bf16.gmra.mrb[0].mxu0 %v2780
    %v2857 = vpop.f32.mrb[0].mxu0
    %v2858 = vpop.f32.mrb[0].mxu0
    %v2859 = vpop.f32.mrb[0].mxu0
    %v2860 = vadd.f32 0.0, %v2859
    %v2861 = vpop.f32.mrb[0].mxu0
    %v2862 = vadd.f32 0.0, %v2861
    %2863 = vdwg.mxu0
    %v2864 = vld [vmem:[%s2393] sm:$0xff]
    %v2865 = vld [vmem:[%s2393 + $0x8] sm:$0xff]
    %v2866 = vadd.f32 %v2864, %v2817
    %v2867 = vadd.f32 %v2865, %v2819
    %v2868 = vld [vmem:[%s2388 + $0x10] sm:$0xff]
    %v2869 = vld [vmem:[%s2388 + $0x18] sm:$0xff]
    %v2870 = vadd.f32 %v2868, %v2860
    %v2871 = vadd.f32 %v2869, %v2862
    %v2872 = vxor.u32 %v2866, 2147483648
    %v2873 = vxor.u32 %v2867, 2147483648
    %v2874 = vxor.u32 %v2870, 2147483648
    %v2875 = vxor.u32 %v2871, 2147483648
    %v2876 = vmul.f32 %v2872, 1.442695
    %v2877 = vpow.pop %v2876
    %v2878 = vmul.f32 %v2873, 1.442695
    %v2879 = vpow.pop %v2878
    %v2880 = vmul.f32 %v2874, 1.442695
    %v2881 = vpow.pop %v2880
    %v2882 = vmul.f32 %v2875, 1.442695
    %v2883 = vpow.pop %v2882
    %v2884 = vadd.f32 %v2877, 1.0
    %v2885 = vadd.f32 %v2879, 1.0
    %v2886 = vadd.f32 %v2881, 1.0
    %v2887 = vadd.f32 %v2883, 1.0
    %v2888 = vrcp.pop %v2884
    %v2889 = vmul.f32 1.0, %v2888
    %v2890 = vrcp.pop %v2885
    %v2891 = vmul.f32 1.0, %v2890
    %v2892 = vrcp.pop %v2886
    %v2893 = vmul.f32 1.0, %v2892
    %v2894 = vrcp.pop %v2887
    %v2895 = vmul.f32 1.0, %v2894
    %v2896 = vtanh.pop %v2867
    %v2897 = vtanh.pop %v2871
    %v2898 = vmul.f32 %v2889, %v2762
    %v2899 = vmul.f32 %v2893, %v2763
    %2902 = vrot.lane.b32.xlu0 %v2896, 64
    %v2903 = vpop.permute.xlu0 %2902
    %2904 = vrot.lane.b32.xlu0 %v2897, 64
    %v2905 = vpop.permute.xlu0 %2904
    %v2908 = vmul.f32 %v2889, %v2903
    %v2909 = vmul.f32 %v2893, %v2905
    %2912 = vrot.lane.b32.xlu0 %v2908, 64
    %v2913 = vpop.permute.xlu0 %2912
    %2914 = vrot.lane.b32.xlu0 %v2909, 64
    %v2915 = vpop.permute.xlu0 %2914
    %v2918 = vadd.f32 %v2898, %v2913
    %v2919 = vadd.f32 %v2899, %v2915
    %v2920 = vtanh.pop %v2918
    %v2921 = vtanh.pop %v2919
    %2924 = vrot.lane.b32.xlu0 %v2920, 64
    %v2925 = vpop.permute.xlu0 %2924
    %2926 = vrot.lane.b32.xlu0 %v2921, 64
    %v2927 = vpop.permute.xlu0 %2926
    %v2930 = vmul.f32 %v2891, %v2925
    %v2931 = vmul.f32 %v2895, %v2927
    %2932 = vst.msk [vmem:[%s2460] sm:$0xff] %vm1984, %v2930
    %2933 = vst.msk [vmem:[%s2458 + $0x8] sm:$0xff] %vm1984, %v2931
    %v2934 = vpack.c.bf16 %v2931, %v2930
    %v2936 = vsel %vm1984, %v2934, 0
    %2938 = vmatprep.subr.bf16.mxu0 %v1953
    %2939 = vmatpush1.bf16.msra.mxu0 %v1952
    %2940 = vmatprep.subr.bf16.mxu0 %v1957
    %2941 = vmatpush1.bf16.msra.mxu0 %v1956
    %2942 = vmatprep.subr.bf16.mxu0 %v1961
    %2943 = vmatpush1.bf16.msra.mxu0 %v1960
    %2944 = vmatprep.subr.bf16.mxu0 %v1965
    %2945 = vmatpush1.bf16.msra.mxu0 %v1964
    %2946 = vmatprep.subr.bf16.mxu0 0
    %2947 = vmatpush1.bf16.msra.mxu0 0
    %2948 = vmatprep.subr.bf16.mxu0 0
    %2949 = vmatpush1.bf16.msra.mxu0 0
    %2950 = vmatprep.subr.bf16.mxu0 0
    %2951 = vmatpush1.bf16.msra.mxu0 0
    %2952 = vmatprep.subr.bf16.mxu0 0
    %2953 = vmatpush1.bf16.msra.mxu0 0
    %2954 = vmatprep.subr.bf16.mxu0 0
    %2955 = vmatpush1.bf16.msra.mxu0 0
    %2956 = vmatprep.subr.bf16.mxu0 0
    %2957 = vmatpush1.bf16.msra.mxu0 0
    %2958 = vmatprep.subr.bf16.mxu0 0
    %2959 = vmatpush1.bf16.msra.mxu0 0
    %2960 = vmatprep.subr.bf16.mxu0 0
    %2961 = vmatpush1.bf16.msra.mxu0 0
    %2962 = vmatprep.subr.bf16.mxu0 0
    %2963 = vmatpush1.bf16.msra.mxu0 0
    %2964 = vmatprep.subr.bf16.mxu0 0
    %2965 = vmatpush1.bf16.msra.mxu0 0
    %2966 = vmatprep.subr.bf16.mxu0 0
    %2967 = vmatpush1.bf16.msra.mxu0 0
    %2968 = vmatprep.subr.bf16.mxu0 0
    %2969 = vmatpush1.bf16.msra.mxu0 0
    %2970 = vmatprep.mubr.bf16.mxu0 0
    %2971 = vmatmul.mubr.bf16.gmra.mrb[0].mxu0 %v2936
    %v2972 = vpop.f32.mrb[0].mxu0
    %v2973 = vadd.f32 0.0, %v2972
    %v2974 = vpop.f32.mrb[0].mxu0
    %v2975 = vadd.f32 0.0, %v2974
    %v2976 = vpop.f32.mrb[0].mxu0
    %v2977 = vpop.f32.mrb[0].mxu0
    %2978 = vdwg.mxu0
    %2979 = vmatprep.subr.bf16.mxu0 %v1955
    %2980 = vmatpush1.bf16.msra.mxu0 %v1954
    %2981 = vmatprep.subr.bf16.mxu0 %v1959
    %2982 = vmatpush1.bf16.msra.mxu0 %v1958
    %2983 = vmatprep.subr.bf16.mxu0 %v1963
    %2984 = vmatpush1.bf16.msra.mxu0 %v1962
    %2985 = vmatprep.subr.bf16.mxu0 %v1967
    %2986 = vmatpush1.bf16.msra.mxu0 %v1966
    %2987 = vmatprep.subr.bf16.mxu0 0
    %2988 = vmatpush1.bf16.msra.mxu0 0
    %2989 = vmatprep.subr.bf16.mxu0 0
    %2990 = vmatpush1.bf16.msra.mxu0 0
    %2991 = vmatprep.subr.bf16.mxu0 0
    %2992 = vmatpush1.bf16.msra.mxu0 0
    %2993 = vmatprep.subr.bf16.mxu0 0
    %2994 = vmatpush1.bf16.msra.mxu0 0
    %2995 = vmatprep.subr.bf16.mxu0 0
    %2996 = vmatpush1.bf16.msra.mxu0 0
    %2997 = vmatprep.subr.bf16.mxu0 0
    %2998 = vmatpush1.bf16.msra.mxu0 0
    %2999 = vmatprep.subr.bf16.mxu0 0
    %3000 = vmatpush1.bf16.msra.mxu0 0
    %3001 = vmatprep.subr.bf16.mxu0 0
    %3002 = vmatpush1.bf16.msra.mxu0 0
    %3003 = vmatprep.subr.bf16.mxu0 0
    %3004 = vmatpush1.bf16.msra.mxu0 0
    %3005 = vmatprep.subr.bf16.mxu0 0
    %3006 = vmatpush1.bf16.msra.mxu0 0
    %3007 = vmatprep.subr.bf16.mxu0 0
    %3008 = vmatpush1.bf16.msra.mxu0 0
    %3009 = vmatprep.subr.bf16.mxu0 0
    %3010 = vmatpush1.bf16.msra.mxu0 0
    %3011 = vmatprep.mubr.bf16.mxu0 0
    %3012 = vmatmul.mubr.bf16.gmra.mrb[0].mxu0 %v2936
    %v3013 = vpop.f32.mrb[0].mxu0
    %v3014 = vpop.f32.mrb[0].mxu0
    %v3015 = vpop.f32.mrb[0].mxu0
    %v3016 = vadd.f32 0.0, %v3015
    %v3017 = vpop.f32.mrb[0].mxu0
    %v3018 = vadd.f32 0.0, %v3017
    %3019 = vdwg.mxu0
    %v3020 = vld [vmem:[%s2233] sm:$0xff]
    %v3021 = vld [vmem:[%s2233 + $0x8] sm:$0xff]
    %v3022 = vadd.f32 %v3020, %v2973
    %v3023 = vadd.f32 %v3021, %v2975
    %v3024 = vld [vmem:[%s2228 + $0x10] sm:$0xff]
    %v3025 = vld [vmem:[%s2228 + $0x18] sm:$0xff]
    %v3026 = vadd.f32 %v3024, %v3016
    %v3027 = vadd.f32 %v3025, %v3018
    %v3028 = vxor.u32 %v3022, 2147483648
    %v3029 = vxor.u32 %v3023, 2147483648
    %v3030 = vxor.u32 %v3026, 2147483648
    %v3031 = vxor.u32 %v3027, 2147483648
    %v3032 = vmul.f32 %v3028, 1.442695
    %v3033 = vpow.pop %v3032
    %v3034 = vmul.f32 %v3029, 1.442695
    %v3035 = vpow.pop %v3034
    %v3036 = vmul.f32 %v3030, 1.442695
    %v3037 = vpow.pop %v3036
    %v3038 = vmul.f32 %v3031, 1.442695
    %v3039 = vpow.pop %v3038
    %v3040 = vadd.f32 %v3033, 1.0
    %v3041 = vadd.f32 %v3035, 1.0
    %v3042 = vadd.f32 %v3037, 1.0
    %v3043 = vadd.f32 %v3039, 1.0
    %v3044 = vrcp.pop %v3040
    %v3045 = vmul.f32 1.0, %v3044
    %v3046 = vrcp.pop %v3041
    %v3047 = vmul.f32 1.0, %v3046
    %v3048 = vrcp.pop %v3042
    %v3049 = vmul.f32 1.0, %v3048
    %v3050 = vrcp.pop %v3043
    %v3051 = vmul.f32 1.0, %v3050
    %v3052 = vtanh.pop %v3023
    %v3053 = vtanh.pop %v3027
    %v3054 = vmul.f32 %v3045, %v2918
    %v3055 = vmul.f32 %v3049, %v2919
    %3058 = vrot.lane.b32.xlu0 %v3052, 64
    %v3059 = vpop.permute.xlu0 %3058
    %3060 = vrot.lane.b32.xlu0 %v3053, 64
    %v3061 = vpop.permute.xlu0 %3060
    %v3064 = vmul.f32 %v3045, %v3059
    %v3065 = vmul.f32 %v3049, %v3061
    %3068 = vrot.lane.b32.xlu0 %v3064, 64
    %v3069 = vpop.permute.xlu0 %3068
    %3070 = vrot.lane.b32.xlu0 %v3065, 64
    %v3071 = vpop.permute.xlu0 %3070
    %v3074 = vadd.f32 %v3054, %v3069
    %v3075 = vadd.f32 %v3055, %v3071
    %v3076 = vtanh.pop %v3074
    %v3077 = vtanh.pop %v3075
    %3080 = vrot.lane.b32.xlu0 %v3076, 64
    %v3081 = vpop.permute.xlu0 %3080
    %3082 = vrot.lane.b32.xlu0 %v3077, 64
    %v3083 = vpop.permute.xlu0 %3082
    %v3086 = vmul.f32 %v3047, %v3081
    %v3087 = vmul.f32 %v3051, %v3083
    %3088 = vst.msk [vmem:[%s2300] sm:$0xff] %vm1984, %v3086
    %3089 = vst.msk [vmem:[%s2298 + $0x8] sm:$0xff] %vm1984, %v3087
    %v3090 = vpack.c.bf16 %v3087, %v3086
    %v3092 = vsel %vm1984, %v3090, 0
    %3094 = vmatprep.subr.bf16.mxu0 %v1953
    %3095 = vmatpush1.bf16.msra.mxu0 %v1952
    %3096 = vmatprep.subr.bf16.mxu0 %v1957
    %3097 = vmatpush1.bf16.msra.mxu0 %v1956
    %3098 = vmatprep.subr.bf16.mxu0 %v1961
    %3099 = vmatpush1.bf16.msra.mxu0 %v1960
    %3100 = vmatprep.subr.bf16.mxu0 %v1965
    %3101 = vmatpush1.bf16.msra.mxu0 %v1964
    %3102 = vmatprep.subr.bf16.mxu0 0
    %3103 = vmatpush1.bf16.msra.mxu0 0
    %3104 = vmatprep.subr.bf16.mxu0 0
    %3105 = vmatpush1.bf16.msra.mxu0 0
    %3106 = vmatprep.subr.bf16.mxu0 0
    %3107 = vmatpush1.bf16.msra.mxu0 0
    %3108 = vmatprep.subr.bf16.mxu0 0
    %3109 = vmatpush1.bf16.msra.mxu0 0
    %3110 = vmatprep.subr.bf16.mxu0 0
    %3111 = vmatpush1.bf16.msra.mxu0 0
    %3112 = vmatprep.subr.bf16.mxu0 0
    %3113 = vmatpush1.bf16.msra.mxu0 0
    %3114 = vmatprep.subr.bf16.mxu0 0
    %3115 = vmatpush1.bf16.msra.mxu0 0
    %3116 = vmatprep.subr.bf16.mxu0 0
    %3117 = vmatpush1.bf16.msra.mxu0 0
    %3118 = vmatprep.subr.bf16.mxu0 0
    %3119 = vmatpush1.bf16.msra.mxu0 0
    %3120 = vmatprep.subr.bf16.mxu0 0
    %3121 = vmatpush1.bf16.msra.mxu0 0
    %3122 = vmatprep.subr.bf16.mxu0 0
    %3123 = vmatpush1.bf16.msra.mxu0 0
    %3124 = vmatprep.subr.bf16.mxu0 0
    %3125 = vmatpush1.bf16.msra.mxu0 0
    %3126 = vmatprep.mubr.bf16.mxu0 0
    %3127 = vmatmul.mubr.bf16.gmra.mrb[0].mxu0 %v3092
    %v3128 = vpop.f32.mrb[0].mxu0
    %v3129 = vadd.f32 0.0, %v3128
    %v3130 = vpop.f32.mrb[0].mxu0
    %v3131 = vadd.f32 0.0, %v3130
    %v3132 = vpop.f32.mrb[0].mxu0
    %v3133 = vpop.f32.mrb[0].mxu0
    %3134 = vdwg.mxu0
    %3135 = vmatprep.subr.bf16.mxu0 %v1955
    %3136 = vmatpush1.bf16.msra.mxu0 %v1954
    %3137 = vmatprep.subr.bf16.mxu0 %v1959
    %3138 = vmatpush1.bf16.msra.mxu0 %v1958
    %3139 = vmatprep.subr.bf16.mxu0 %v1963
    %3140 = vmatpush1.bf16.msra.mxu0 %v1962
    %3141 = vmatprep.subr.bf16.mxu0 %v1967
    %3142 = vmatpush1.bf16.msra.mxu0 %v1966
    %3143 = vmatprep.subr.bf16.mxu0 0
    %3144 = vmatpush1.bf16.msra.mxu0 0
    %3145 = vmatprep.subr.bf16.mxu0 0
    %3146 = vmatpush1.bf16.msra.mxu0 0
    %3147 = vmatprep.subr.bf16.mxu0 0
    %3148 = vmatpush1.bf16.msra.mxu0 0
    %3149 = vmatprep.subr.bf16.mxu0 0
    %3150 = vmatpush1.bf16.msra.mxu0 0
    %3151 = vmatprep.subr.bf16.mxu0 0
    %3152 = vmatpush1.bf16.msra.mxu0 0
    %3153 = vmatprep.subr.bf16.mxu0 0
    %3154 = vmatpush1.bf16.msra.mxu0 0
    %3155 = vmatprep.subr.bf16.mxu0 0
    %3156 = vmatpush1.bf16.msra.mxu0 0
    %3157 = vmatprep.subr.bf16.mxu0 0
    %3158 = vmatpush1.bf16.msra.mxu0 0
    %3159 = vmatprep.subr.bf16.mxu0 0
    %3160 = vmatpush1.bf16.msra.mxu0 0
    %3161 = vmatprep.subr.bf16.mxu0 0
    %3162 = vmatpush1.bf16.msra.mxu0 0
    %3163 = vmatprep.subr.bf16.mxu0 0
    %3164 = vmatpush1.bf16.msra.mxu0 0
    %3165 = vmatprep.subr.bf16.mxu0 0
    %3166 = vmatpush1.bf16.msra.mxu0 0
    %3167 = vmatprep.mubr.bf16.mxu0 0
    %3168 = vmatmul.mubr.bf16.gmra.mrb[0].mxu0 %v3092
    %v3169 = vpop.f32.mrb[0].mxu0
    %v3170 = vpop.f32.mrb[0].mxu0
    %v3171 = vpop.f32.mrb[0].mxu0
    %v3172 = vadd.f32 0.0, %v3171
    %v3173 = vpop.f32.mrb[0].mxu0
    %v3174 = vadd.f32 0.0, %v3173
    %3175 = vdwg.mxu0
    %v3176 = vld [vmem:[%s2074] sm:$0xff]
    %v3177 = vld [vmem:[%s2074 + $0x8] sm:$0xff]
    %v3178 = vadd.f32 %v3176, %v3129
    %v3179 = vadd.f32 %v3177, %v3131
    %v3180 = vld [vmem:[#allocation2 + $0x10] sm:$0xff]
    %v3181 = vld [vmem:[#allocation2 + $0x18] sm:$0xff]
    %v3182 = vadd.f32 %v3180, %v3172
    %v3183 = vadd.f32 %v3181, %v3174
    %v3184 = vxor.u32 %v3178, 2147483648
    %v3185 = vxor.u32 %v3179, 2147483648
    %v3186 = vxor.u32 %v3182, 2147483648
    %v3187 = vxor.u32 %v3183, 2147483648
    %v3188 = vmul.f32 %v3184, 1.442695
    %v3189 = vpow.pop %v3188
    %v3190 = vmul.f32 %v3185, 1.442695
    %v3191 = vpow.pop %v3190
    %v3192 = vmul.f32 %v3186, 1.442695
    %v3193 = vpow.pop %v3192
    %v3194 = vmul.f32 %v3187, 1.442695
    %v3195 = vpow.pop %v3194
    %v3196 = vadd.f32 %v3189, 1.0
    %v3197 = vadd.f32 %v3191, 1.0
    %v3198 = vadd.f32 %v3193, 1.0
    %v3199 = vadd.f32 %v3195, 1.0
    %v3200 = vrcp.pop %v3196
    %v3201 = vmul.f32 1.0, %v3200
    %v3202 = vrcp.pop %v3197
    %v3203 = vmul.f32 1.0, %v3202
    %v3204 = vrcp.pop %v3198
    %v3205 = vmul.f32 1.0, %v3204
    %v3206 = vrcp.pop %v3199
    %v3207 = vmul.f32 1.0, %v3206
    %v3208 = vtanh.pop %v3179
    %v3209 = vtanh.pop %v3183
    %v3210 = vmul.f32 %v3201, %v3074
    %v3211 = vmul.f32 %v3205, %v3075
    %3214 = vrot.lane.b32.xlu0 %v3208, 64
    %v3215 = vpop.permute.xlu0 %3214
    %3216 = vrot.lane.b32.xlu0 %v3209, 64
    %v3217 = vpop.permute.xlu0 %3216
    %v3220 = vmul.f32 %v3201, %v3215
    %v3221 = vmul.f32 %v3205, %v3217
    %3224 = vrot.lane.b32.xlu0 %v3220, 64
    %v3225 = vpop.permute.xlu0 %3224
    %3226 = vrot.lane.b32.xlu0 %v3221, 64
    %v3227 = vpop.permute.xlu0 %3226
    %v3230 = vadd.f32 %v3210, %v3225
    %v3231 = vadd.f32 %v3211, %v3227
    %v3232 = vtanh.pop %v3230
    %v3233 = vtanh.pop %v3231
    %3236 = vrot.lane.b32.xlu0 %v3232, 64
    %v3237 = vpop.permute.xlu0 %3236
    %3238 = vrot.lane.b32.xlu0 %v3233, 64
    %v3239 = vpop.permute.xlu0 %3238
    %v3242 = vmul.f32 %v3203, %v3237
    %v3243 = vmul.f32 %v3207, %v3239
    %3244 = vst.msk [vmem:[%s2140] sm:$0xff] %vm1984, %v3242
    %3245 = vst.msk [vmem:[#allocation3 + $0x8] sm:$0xff] %vm1984, %v3243
    %v3246 = vld [vmem:[#allocation8] sm:$0xff]
    %v3247 = vld [vmem:[#allocation8 + $0x8] sm:$0xff]
    %v3248 = vld [vmem:[#allocation8 + $0x10] sm:$0xff]
    %v3249 = vld [vmem:[#allocation8 + $0x18] sm:$0xff]
    %v3250 = vld [vmem:[#allocation8 + $0x20] sm:$0xff]
    %v3251 = vld [vmem:[#allocation8 + $0x28] sm:$0xff]
    %v3252 = vld [vmem:[#allocation8 + $0x30] sm:$0xff]
    %v3253 = vld [vmem:[#allocation8 + $0x38] sm:$0xff]
    %v3254 = vld [vmem:[#allocation8 + $0x40] sm:$0xff]
    %v3255 = vld [vmem:[#allocation8 + $0x48] sm:$0xff]
    %v3256 = vld [vmem:[#allocation8 + $0x50] sm:$0xff]
    %v3257 = vld [vmem:[#allocation8 + $0x58] sm:$0xff]
    %v3258 = vld [vmem:[#allocation8 + $0x60] sm:$0xff]
    %v3259 = vld [vmem:[#allocation8 + $0x68] sm:$0xff]
    %v3260 = vld [vmem:[#allocation8 + $0x70] sm:$0xff]
    %v3261 = vld [vmem:[#allocation8 + $0x78] sm:$0xff]
    %v3262 = vld [vmem:[#allocation8 + $0x80] sm:$0xff]
    %v3263 = vld [vmem:[#allocation8 + $0x88] sm:$0xff]
    %v3264 = vld [vmem:[#allocation8 + $0x90] sm:$0xff]
    %v3265 = vld [vmem:[#allocation8 + $0x98] sm:$0xff]
    %v3266 = vld [vmem:[#allocation8 + $0xa0] sm:$0xff]
    %v3267 = vld [vmem:[#allocation8 + $0xa8] sm:$0xff]
    %v3268 = vld [vmem:[#allocation8 + $0xb0] sm:$0xff]
    %v3269 = vld [vmem:[#allocation8 + $0xb8] sm:$0xff]
    %v3270 = vld [vmem:[#allocation8 + $0xc0] sm:$0xff]
    %v3271 = vld [vmem:[#allocation8 + $0xc8] sm:$0xff]
    %v3272 = vld [vmem:[#allocation8 + $0xd0] sm:$0xff]
    %v3273 = vld [vmem:[#allocation8 + $0xd8] sm:$0xff]
    %v3274 = vld [vmem:[#allocation8 + $0xe0] sm:$0xff]
    %v3275 = vld [vmem:[#allocation8 + $0xe8] sm:$0xff]
    %v3276 = vld [vmem:[#allocation8 + $0xf0] sm:$0xff]
    %v3277 = vld [vmem:[#allocation8 + $0xf8] sm:$0xff]
    %v3278 = vld [vmem:[%s6] sm:$0xf]
    %s3279 = smul.u32 0, 16
    %s3280 = scalar_lea.vmem [#allocation3], %s3279
    %v3281 = vld [vmem:[%s3280] sm:$0xff]
    %v3282 = vld [vmem:[%s3280 + $0x10] sm:$0xff]
    %v3283 = vld [vmem:[%s3280 + $0x20] sm:$0xff]
    %v3284 = vld [vmem:[%s3280 + $0x30] sm:$0xff]
    %v3285 = vld [vmem:[%s3280 + $0x40] sm:$0xff]
    %v3286 = vld [vmem:[%s3280 + $0x50] sm:$0xff]
    %v3287 = vld [vmem:[%s3280 + $0x60] sm:$0xff]
    %v3288 = vld [vmem:[%s3280 + $0x70] sm:$0xff]
    %v3289 = vpack.c.bf16 %v3282, %v3281
    %v3290 = vpack.c.bf16 %v3284, %v3283
    %v3291 = vpack.c.bf16 %v3286, %v3285
    %v3292 = vpack.c.bf16 %v3288, %v3287
    %v3293 = vld [vmem:[%s3280 + $0x8] sm:$0xff]
    %v3294 = vld [vmem:[%s3280 + $0x18] sm:$0xff]
    %v3295 = vld [vmem:[%s3280 + $0x28] sm:$0xff]
    %v3296 = vld [vmem:[%s3280 + $0x38] sm:$0xff]
    %v3297 = vld [vmem:[%s3280 + $0x48] sm:$0xff]
    %v3298 = vld [vmem:[%s3280 + $0x58] sm:$0xff]
    %v3299 = vld [vmem:[%s3280 + $0x68] sm:$0xff]
    %v3300 = vld [vmem:[%s3280 + $0x78] sm:$0xff]
    %v3301 = vpack.c.bf16 %v3294, %v3293
    %v3302 = vpack.c.bf16 %v3296, %v3295
    %v3303 = vpack.c.bf16 %v3298, %v3297
    %v3304 = vpack.c.bf16 %v3300, %v3299
    %v3321 = vunpack.c.l.b16 %v3262
    %v3322 = vunpack.c.h.b16 %v3262
    %v3323 = vunpack.c.l.b16 %v3263
    %v3324 = vunpack.c.h.b16 %v3263
    %v3325 = vunpack.c.l.b16 %v3264
    %v3326 = vunpack.c.h.b16 %v3264
    %v3327 = vunpack.c.l.b16 %v3265
    %v3328 = vunpack.c.h.b16 %v3265
    %v3329 = vunpack.c.l.b16 %v3266
    %v3330 = vunpack.c.h.b16 %v3266
    %v3331 = vunpack.c.l.b16 %v3267
    %v3332 = vunpack.c.h.b16 %v3267
    %v3333 = vunpack.c.l.b16 %v3268
    %v3334 = vunpack.c.h.b16 %v3268
    %v3335 = vunpack.c.l.b16 %v3269
    %v3336 = vunpack.c.h.b16 %v3269
    %v3337 = vunpack.c.l.b16 %v3270
    %v3338 = vunpack.c.h.b16 %v3270
    %v3339 = vunpack.c.l.b16 %v3271
    %v3340 = vunpack.c.h.b16 %v3271
    %v3341 = vunpack.c.l.b16 %v3272
    %v3342 = vunpack.c.h.b16 %v3272
    %v3343 = vunpack.c.l.b16 %v3273
    %v3344 = vunpack.c.h.b16 %v3273
    %v3345 = vunpack.c.l.b16 %v3274
    %v3346 = vunpack.c.h.b16 %v3274
    %v3347 = vunpack.c.l.b16 %v3275
    %v3348 = vunpack.c.h.b16 %v3275
    %v3349 = vunpack.c.l.b16 %v3276
    %v3350 = vunpack.c.h.b16 %v3276
    %v3351 = vunpack.c.l.b16 %v3277
    %v3352 = vunpack.c.h.b16 %v3277
    %v3353 = vpack.c.b16 %v3325, %v3321
    %v3354 = vpack.c.b16 %v3326, %v3322
    %v3355 = vpack.c.b16 %v3327, %v3323
    %v3356 = vpack.c.b16 %v3328, %v3324
    %v3357 = vpack.c.b16 %v3333, %v3329
    %v3358 = vpack.c.b16 %v3334, %v3330
    %v3359 = vpack.c.b16 %v3335, %v3331
    %v3360 = vpack.c.b16 %v3336, %v3332
    %v3361 = vpack.c.b16 %v3341, %v3337
    %v3362 = vpack.c.b16 %v3342, %v3338
    %v3363 = vpack.c.b16 %v3343, %v3339
    %v3364 = vpack.c.b16 %v3344, %v3340
    %v3365 = vpack.c.b16 %v3349, %v3345
    %v3366 = vpack.c.b16 %v3350, %v3346
    %v3367 = vpack.c.b16 %v3351, %v3347
    %v3368 = vpack.c.b16 %v3352, %v3348
    %v3386 = vsel %vm1984, %v3301, 0
    %v3389 = vsel %vm1984, %v3302, 0
    %v3392 = vsel %vm1984, %v3303, 0
    %v3395 = vsel %vm1984, %v3304, 0
    %3397 = vmatprep.subr.bf16.mxu0 %v3354
    %3398 = vmatpush1.bf16.msra.mxu0 %v3353
    %3399 = vmatprep.subr.bf16.mxu0 %v3358
    %3400 = vmatpush1.bf16.msra.mxu0 %v3357
    %3401 = vmatprep.subr.bf16.mxu0 %v3362
    %3402 = vmatpush1.bf16.msra.mxu0 %v3361
    %3403 = vmatprep.subr.bf16.mxu0 %v3366
    %3404 = vmatpush1.bf16.msra.mxu0 %v3365
    %3405 = vmatprep.subr.bf16.mxu0 0
    %3406 = vmatpush1.bf16.msra.mxu0 0
    %3407 = vmatprep.subr.bf16.mxu0 0
    %3408 = vmatpush1.bf16.msra.mxu0 0
    %3409 = vmatprep.subr.bf16.mxu0 0
    %3410 = vmatpush1.bf16.msra.mxu0 0
    %3411 = vmatprep.subr.bf16.mxu0 0
    %3412 = vmatpush1.bf16.msra.mxu0 0
    %3413 = vmatprep.subr.bf16.mxu0 0
    %3414 = vmatpush1.bf16.msra.mxu0 0
    %3415 = vmatprep.subr.bf16.mxu0 0
    %3416 = vmatpush1.bf16.msra.mxu0 0
    %3417 = vmatprep.subr.bf16.mxu0 0
    %3418 = vmatpush1.bf16.msra.mxu0 0
    %3419 = vmatprep.subr.bf16.mxu0 0
    %3420 = vmatpush1.bf16.msra.mxu0 0
    %3421 = vmatprep.subr.bf16.mxu0 0
    %3422 = vmatpush1.bf16.msra.mxu0 0
    %3423 = vmatprep.subr.bf16.mxu0 0
    %3424 = vmatpush1.bf16.msra.mxu0 0
    %3425 = vmatprep.subr.bf16.mxu0 0
    %3426 = vmatpush1.bf16.msra.mxu0 0
    %3427 = vmatprep.subr.bf16.mxu0 0
    %3428 = vmatpush1.bf16.msra.mxu0 0
    %3429 = vmatprep.mubr.bf16.mxu0 0
    %3430 = vmatmul.mubr.bf16.gmra.mrb[0].mxu0 %v3386
    %v3431 = vpop.f32.mrb[0].mxu0
    %v3432 = vadd.f32 0.0, %v3431
    %v3433 = vpop.f32.mrb[0].mxu0
    %v3434 = vadd.f32 0.0, %v3433
    %v3435 = vpop.f32.mrb[0].mxu0
    %v3436 = vadd.f32 0.0, %v3435
    %v3437 = vpop.f32.mrb[0].mxu0
    %v3438 = vadd.f32 0.0, %v3437
    %3439 = vmatprep.mubr.bf16.mxu0 0
    %3440 = vmatmul.mubr.bf16.gmra.mrb[0].mxu0 %v3389
    %v3441 = vpop.f32.mrb[0].mxu0
    %v3442 = vadd.f32 0.0, %v3441
    %v3443 = vpop.f32.mrb[0].mxu0
    %v3444 = vadd.f32 0.0, %v3443
    %v3445 = vpop.f32.mrb[0].mxu0
    %v3446 = vadd.f32 0.0, %v3445
    %v3447 = vpop.f32.mrb[0].mxu0
    %v3448 = vadd.f32 0.0, %v3447
    %3449 = vmatprep.mubr.bf16.mxu0 0
    %3450 = vmatmul.mubr.bf16.gmra.mrb[0].mxu0 %v3392
    %v3451 = vpop.f32.mrb[0].mxu0
    %v3452 = vadd.f32 0.0, %v3451
    %v3453 = vpop.f32.mrb[0].mxu0
    %v3454 = vadd.f32 0.0, %v3453
    %v3455 = vpop.f32.mrb[0].mxu0
    %v3456 = vadd.f32 0.0, %v3455
    %v3457 = vpop.f32.mrb[0].mxu0
    %v3458 = vadd.f32 0.0, %v3457
    %3459 = vmatprep.mubr.bf16.mxu0 0
    %3460 = vmatmul.mubr.bf16.gmra.mrb[0].mxu0 %v3395
    %v3461 = vpop.f32.mrb[0].mxu0
    %v3462 = vadd.f32 0.0, %v3461
    %v3463 = vpop.f32.mrb[0].mxu0
    %v3464 = vadd.f32 0.0, %v3463
    %v3465 = vpop.f32.mrb[0].mxu0
    %v3466 = vadd.f32 0.0, %v3465
    %v3467 = vpop.f32.mrb[0].mxu0
    %v3468 = vadd.f32 0.0, %v3467
    %3469 = vdwg.mxu0
    %3470 = vmatprep.subr.bf16.mxu0 %v3356
    %3471 = vmatpush1.bf16.msra.mxu0 %v3355
    %3472 = vmatprep.subr.bf16.mxu0 %v3360
    %3473 = vmatpush1.bf16.msra.mxu0 %v3359
    %3474 = vmatprep.subr.bf16.mxu0 %v3364
    %3475 = vmatpush1.bf16.msra.mxu0 %v3363
    %3476 = vmatprep.subr.bf16.mxu0 %v3368
    %3477 = vmatpush1.bf16.msra.mxu0 %v3367
    %3478 = vmatprep.subr.bf16.mxu0 0
    %3479 = vmatpush1.bf16.msra.mxu0 0
    %3480 = vmatprep.subr.bf16.mxu0 0
    %3481 = vmatpush1.bf16.msra.mxu0 0
    %3482 = vmatprep.subr.bf16.mxu0 0
    %3483 = vmatpush1.bf16.msra.mxu0 0
    %3484 = vmatprep.subr.bf16.mxu0 0
    %3485 = vmatpush1.bf16.msra.mxu0 0
    %3486 = vmatprep.subr.bf16.mxu0 0
    %3487 = vmatpush1.bf16.msra.mxu0 0
    %3488 = vmatprep.subr.bf16.mxu0 0
    %3489 = vmatpush1.bf16.msra.mxu0 0
    %3490 = vmatprep.subr.bf16.mxu0 0
    %3491 = vmatpush1.bf16.msra.mxu0 0
    %3492 = vmatprep.subr.bf16.mxu0 0
    %3493 = vmatpush1.bf16.msra.mxu0 0
    %3494 = vmatprep.subr.bf16.mxu0 0
    %3495 = vmatpush1.bf16.msra.mxu0 0
    %3496 = vmatprep.subr.bf16.mxu0 0
    %3497 = vmatpush1.bf16.msra.mxu0 0
    %3498 = vmatprep.subr.bf16.mxu0 0
    %3499 = vmatpush1.bf16.msra.mxu0 0
    %3500 = vmatprep.subr.bf16.mxu0 0
    %3501 = vmatpush1.bf16.msra.mxu0 0
    %3502 = vmatprep.mubr.bf16.mxu0 0
    %3503 = vmatmul.mubr.bf16.gmra.mrb[0].mxu0 %v3386
    %v3504 = vpop.f32.mrb[0].mxu0
    %v3505 = vadd.f32 0.0, %v3504
    %v3506 = vpop.f32.mrb[0].mxu0
    %v3507 = vadd.f32 0.0, %v3506
    %v3508 = vpop.f32.mrb[0].mxu0
    %v3509 = vadd.f32 0.0, %v3508
    %v3510 = vpop.f32.mrb[0].mxu0
    %v3511 = vadd.f32 0.0, %v3510
    %3512 = vmatprep.mubr.bf16.mxu0 0
    %3513 = vmatmul.mubr.bf16.gmra.mrb[0].mxu0 %v3389
    %v3514 = vpop.f32.mrb[0].mxu0
    %v3515 = vadd.f32 0.0, %v3514
    %v3516 = vpop.f32.mrb[0].mxu0
    %v3517 = vadd.f32 0.0, %v3516
    %v3518 = vpop.f32.mrb[0].mxu0
    %v3519 = vadd.f32 0.0, %v3518
    %v3520 = vpop.f32.mrb[0].mxu0
    %v3521 = vadd.f32 0.0, %v3520
    %3522 = vmatprep.mubr.bf16.mxu0 0
    %3523 = vmatmul.mubr.bf16.gmra.mrb[0].mxu0 %v3392
    %v3524 = vpop.f32.mrb[0].mxu0
    %v3525 = vadd.f32 0.0, %v3524
    %v3526 = vpop.f32.mrb[0].mxu0
    %v3527 = vadd.f32 0.0, %v3526
    %v3528 = vpop.f32.mrb[0].mxu0
    %v3529 = vadd.f32 0.0, %v3528
    %v3530 = vpop.f32.mrb[0].mxu0
    %v3531 = vadd.f32 0.0, %v3530
    %3532 = vmatprep.mubr.bf16.mxu0 0
    %3533 = vmatmul.mubr.bf16.gmra.mrb[0].mxu0 %v3395
    %v3534 = vpop.f32.mrb[0].mxu0
    %v3535 = vadd.f32 0.0, %v3534
    %v3536 = vpop.f32.mrb[0].mxu0
    %v3537 = vadd.f32 0.0, %v3536
    %v3538 = vpop.f32.mrb[0].mxu0
    %v3539 = vadd.f32 0.0, %v3538
    %v3540 = vpop.f32.mrb[0].mxu0
    %v3541 = vadd.f32 0.0, %v3540
    %3542 = vdwg.mxu0
    %v3559 = vunpack.c.l.b16 %v3246
    %v3560 = vunpack.c.h.b16 %v3246
    %v3561 = vunpack.c.l.b16 %v3247
    %v3562 = vunpack.c.h.b16 %v3247
    %v3563 = vunpack.c.l.b16 %v3248
    %v3564 = vunpack.c.h.b16 %v3248
    %v3565 = vunpack.c.l.b16 %v3249
    %v3566 = vunpack.c.h.b16 %v3249
    %v3567 = vunpack.c.l.b16 %v3250
    %v3568 = vunpack.c.h.b16 %v3250
    %v3569 = vunpack.c.l.b16 %v3251
    %v3570 = vunpack.c.h.b16 %v3251
    %v3571 = vunpack.c.l.b16 %v3252
    %v3572 = vunpack.c.h.b16 %v3252
    %v3573 = vunpack.c.l.b16 %v3253
    %v3574 = vunpack.c.h.b16 %v3253
    %v3575 = vunpack.c.l.b16 %v3254
    %v3576 = vunpack.c.h.b16 %v3254
    %v3577 = vunpack.c.l.b16 %v3255
    %v3578 = vunpack.c.h.b16 %v3255
    %v3579 = vunpack.c.l.b16 %v3256
    %v3580 = vunpack.c.h.b16 %v3256
    %v3581 = vunpack.c.l.b16 %v3257
    %v3582 = vunpack.c.h.b16 %v3257
    %v3583 = vunpack.c.l.b16 %v3258
    %v3584 = vunpack.c.h.b16 %v3258
    %v3585 = vunpack.c.l.b16 %v3259
    %v3586 = vunpack.c.h.b16 %v3259
    %v3587 = vunpack.c.l.b16 %v3260
    %v3588 = vunpack.c.h.b16 %v3260
    %v3589 = vunpack.c.l.b16 %v3261
    %v3590 = vunpack.c.h.b16 %v3261
    %v3591 = vpack.c.b16 %v3563, %v3559
    %v3592 = vpack.c.b16 %v3564, %v3560
    %v3593 = vpack.c.b16 %v3565, %v3561
    %v3594 = vpack.c.b16 %v3566, %v3562
    %v3595 = vpack.c.b16 %v3571, %v3567
    %v3596 = vpack.c.b16 %v3572, %v3568
    %v3597 = vpack.c.b16 %v3573, %v3569
    %v3598 = vpack.c.b16 %v3574, %v3570
    %v3599 = vpack.c.b16 %v3579, %v3575
    %v3600 = vpack.c.b16 %v3580, %v3576
    %v3601 = vpack.c.b16 %v3581, %v3577
    %v3602 = vpack.c.b16 %v3582, %v3578
    %v3603 = vpack.c.b16 %v3587, %v3583
    %v3604 = vpack.c.b16 %v3588, %v3584
    %v3605 = vpack.c.b16 %v3589, %v3585
    %v3606 = vpack.c.b16 %v3590, %v3586
    %v3624 = vsel %vm1984, %v3289, 0
    %v3627 = vsel %vm1984, %v3290, 0
    %v3630 = vsel %vm1984, %v3291, 0
    %v3633 = vsel %vm1984, %v3292, 0
    %3635 = vmatprep.subr.bf16.mxu0 %v3592
    %3636 = vmatpush1.bf16.msra.mxu0 %v3591
    %3637 = vmatprep.subr.bf16.mxu0 %v3596
    %3638 = vmatpush1.bf16.msra.mxu0 %v3595
    %3639 = vmatprep.subr.bf16.mxu0 %v3600
    %3640 = vmatpush1.bf16.msra.mxu0 %v3599
    %3641 = vmatprep.subr.bf16.mxu0 %v3604
    %3642 = vmatpush1.bf16.msra.mxu0 %v3603
    %3643 = vmatprep.subr.bf16.mxu0 0
    %3644 = vmatpush1.bf16.msra.mxu0 0
    %3645 = vmatprep.subr.bf16.mxu0 0
    %3646 = vmatpush1.bf16.msra.mxu0 0
    %3647 = vmatprep.subr.bf16.mxu0 0
    %3648 = vmatpush1.bf16.msra.mxu0 0
    %3649 = vmatprep.subr.bf16.mxu0 0
    %3650 = vmatpush1.bf16.msra.mxu0 0
    %3651 = vmatprep.subr.bf16.mxu0 0
    %3652 = vmatpush1.bf16.msra.mxu0 0
    %3653 = vmatprep.subr.bf16.mxu0 0
    %3654 = vmatpush1.bf16.msra.mxu0 0
    %3655 = vmatprep.subr.bf16.mxu0 0
    %3656 = vmatpush1.bf16.msra.mxu0 0
    %3657 = vmatprep.subr.bf16.mxu0 0
    %3658 = vmatpush1.bf16.msra.mxu0 0
    %3659 = vmatprep.subr.bf16.mxu0 0
    %3660 = vmatpush1.bf16.msra.mxu0 0
    %3661 = vmatprep.subr.bf16.mxu0 0
    %3662 = vmatpush1.bf16.msra.mxu0 0
    %3663 = vmatprep.subr.bf16.mxu0 0
    %3664 = vmatpush1.bf16.msra.mxu0 0
    %3665 = vmatprep.subr.bf16.mxu0 0
    %3666 = vmatpush1.bf16.msra.mxu0 0
    %3667 = vmatprep.mubr.bf16.mxu0 0
    %3668 = vmatmul.mubr.bf16.gmra.mrb[0].mxu0 %v3624
    %v3669 = vpop.f32.mrb[0].mxu0
    %v3670 = vadd.f32 %v3432, %v3669
    %v3671 = vpop.f32.mrb[0].mxu0
    %v3672 = vadd.f32 %v3434, %v3671
    %v3673 = vpop.f32.mrb[0].mxu0
    %v3674 = vadd.f32 %v3436, %v3673
    %v3675 = vpop.f32.mrb[0].mxu0
    %v3676 = vadd.f32 %v3438, %v3675
    %3677 = vmatprep.mubr.bf16.mxu0 0
    %3678 = vmatmul.mubr.bf16.gmra.mrb[0].mxu0 %v3627
    %v3679 = vpop.f32.mrb[0].mxu0
    %v3680 = vadd.f32 %v3442, %v3679
    %v3681 = vpop.f32.mrb[0].mxu0
    %v3682 = vadd.f32 %v3444, %v3681
    %v3683 = vpop.f32.mrb[0].mxu0
    %v3684 = vadd.f32 %v3446, %v3683
    %v3685 = vpop.f32.mrb[0].mxu0
    %v3686 = vadd.f32 %v3448, %v3685
    %3687 = vmatprep.mubr.bf16.mxu0 0
    %3688 = vmatmul.mubr.bf16.gmra.mrb[0].mxu0 %v3630
    %v3689 = vpop.f32.mrb[0].mxu0
    %v3690 = vadd.f32 %v3452, %v3689
    %v3691 = vpop.f32.mrb[0].mxu0
    %v3692 = vadd.f32 %v3454, %v3691
    %v3693 = vpop.f32.mrb[0].mxu0
    %v3694 = vadd.f32 %v3456, %v3693
    %v3695 = vpop.f32.mrb[0].mxu0
    %v3696 = vadd.f32 %v3458, %v3695
    %3697 = vmatprep.mubr.bf16.mxu0 0
    %3698 = vmatmul.mubr.bf16.gmra.mrb[0].mxu0 %v3633
    %v3699 = vpop.f32.mrb[0].mxu0
    %v3700 = vadd.f32 %v3462, %v3699
    %v3701 = vpop.f32.mrb[0].mxu0
    %v3702 = vadd.f32 %v3464, %v3701
    %v3703 = vpop.f32.mrb[0].mxu0
    %v3704 = vadd.f32 %v3466, %v3703
    %v3705 = vpop.f32.mrb[0].mxu0
    %v3706 = vadd.f32 %v3468, %v3705
    %3707 = vdwg.mxu0
    %3708 = vmatprep.subr.bf16.mxu0 %v3594
    %3709 = vmatpush1.bf16.msra.mxu0 %v3593
    %3710 = vmatprep.subr.bf16.mxu0 %v3598
    %3711 = vmatpush1.bf16.msra.mxu0 %v3597
    %3712 = vmatprep.subr.bf16.mxu0 %v3602
    %3713 = vmatpush1.bf16.msra.mxu0 %v3601
    %3714 = vmatprep.subr.bf16.mxu0 %v3606
    %3715 = vmatpush1.bf16.msra.mxu0 %v3605
    %3716 = vmatprep.subr.bf16.mxu0 0
    %3717 = vmatpush1.bf16.msra.mxu0 0
    %3718 = vmatprep.subr.bf16.mxu0 0
    %3719 = vmatpush1.bf16.msra.mxu0 0
    %3720 = vmatprep.subr.bf16.mxu0 0
    %3721 = vmatpush1.bf16.msra.mxu0 0
    %3722 = vmatprep.subr.bf16.mxu0 0
    %3723 = vmatpush1.bf16.msra.mxu0 0
    %3724 = vmatprep.subr.bf16.mxu0 0
    %3725 = vmatpush1.bf16.msra.mxu0 0
    %3726 = vmatprep.subr.bf16.mxu0 0
    %3727 = vmatpush1.bf16.msra.mxu0 0
    %3728 = vmatprep.subr.bf16.mxu0 0
    %3729 = vmatpush1.bf16.msra.mxu0 0
    %3730 = vmatprep.subr.bf16.mxu0 0
    %3731 = vmatpush1.bf16.msra.mxu0 0
    %3732 = vmatprep.subr.bf16.mxu0 0
    %3733 = vmatpush1.bf16.msra.mxu0 0
    %3734 = vmatprep.subr.bf16.mxu0 0
    %3735 = vmatpush1.bf16.msra.mxu0 0
    %3736 = vmatprep.subr.bf16.mxu0 0
    %3737 = vmatpush1.bf16.msra.mxu0 0
    %3738 = vmatprep.subr.bf16.mxu0 0
    %3739 = vmatpush1.bf16.msra.mxu0 0
    %3740 = vmatprep.mubr.bf16.mxu0 0
    %3741 = vmatmul.mubr.bf16.gmra.mrb[0].mxu0 %v3624
    %v3742 = vpop.f32.mrb[0].mxu0
    %v3743 = vadd.f32 %v3505, %v3742
    %v3744 = vpop.f32.mrb[0].mxu0
    %v3745 = vadd.f32 %v3507, %v3744
    %v3746 = vpop.f32.mrb[0].mxu0
    %v3747 = vadd.f32 %v3509, %v3746
    %v3748 = vpop.f32.mrb[0].mxu0
    %v3749 = vadd.f32 %v3511, %v3748
    %3750 = vmatprep.mubr.bf16.mxu0 0
    %3751 = vmatmul.mubr.bf16.gmra.mrb[0].mxu0 %v3627
    %v3752 = vpop.f32.mrb[0].mxu0
    %v3753 = vadd.f32 %v3515, %v3752
    %v3754 = vpop.f32.mrb[0].mxu0
    %v3755 = vadd.f32 %v3517, %v3754
    %v3756 = vpop.f32.mrb[0].mxu0
    %v3757 = vadd.f32 %v3519, %v3756
    %v3758 = vpop.f32.mrb[0].mxu0
    %v3759 = vadd.f32 %v3521, %v3758
    %3760 = vmatprep.mubr.bf16.mxu0 0
    %3761 = vmatmul.mubr.bf16.gmra.mrb[0].mxu0 %v3630
    %v3762 = vpop.f32.mrb[0].mxu0
    %v3763 = vadd.f32 %v3525, %v3762
    %v3764 = vpop.f32.mrb[0].mxu0
    %v3765 = vadd.f32 %v3527, %v3764
    %v3766 = vpop.f32.mrb[0].mxu0
    %v3767 = vadd.f32 %v3529, %v3766
    %v3768 = vpop.f32.mrb[0].mxu0
    %v3769 = vadd.f32 %v3531, %v3768
    %3770 = vmatprep.mubr.bf16.mxu0 0
    %3771 = vmatmul.mubr.bf16.gmra.mrb[0].mxu0 %v3633
    %v3772 = vpop.f32.mrb[0].mxu0
    %v3773 = vadd.f32 %v3535, %v3772
    %v3774 = vpop.f32.mrb[0].mxu0
    %v3775 = vadd.f32 %v3537, %v3774
    %v3776 = vpop.f32.mrb[0].mxu0
    %v3777 = vadd.f32 %v3539, %v3776
    %v3778 = vpop.f32.mrb[0].mxu0
    %v3779 = vadd.f32 %v3541, %v3778
    %3780 = vdwg.mxu0
    %v3782 = vlaneseq
    %v3783 = vshrl.u32 %v3782, 7
    %v3784 = vsub.s32 0, %v3783
    %v3785 = vrot.slane %v3278, %v3784
    %v3786 = vlaneseq
    %v3787 = vshrl.u32 %v3786, 7
    %v3788 = vsub.s32 1, %v3787
    %v3789 = vrot.slane %v3278, %v3788
    %v3790 = vlaneseq
    %v3791 = vshrl.u32 %v3790, 7
    %v3792 = vsub.s32 2, %v3791
    %v3793 = vrot.slane %v3278, %v3792
    %v3794 = vlaneseq
    %v3795 = vshrl.u32 %v3794, 7
    %v3796 = vsub.s32 3, %v3795
    %v3797 = vrot.slane %v3278, %v3796
    %v3802 = vadd.f32 %v3670, %v3785
    %v3803 = vadd.f32 %v3672, %v3789
    %v3804 = vadd.f32 %v3743, %v3793
    %v3805 = vadd.f32 %v3745, %v3797
    %v3806 = vadd.f32 %v3674, %v3785
    %v3807 = vadd.f32 %v3676, %v3789
    %v3808 = vadd.f32 %v3747, %v3793
    %v3809 = vadd.f32 %v3749, %v3797
    %v3810 = vadd.f32 %v3680, %v3785
    %v3811 = vadd.f32 %v3682, %v3789
    %v3812 = vadd.f32 %v3753, %v3793
    %v3813 = vadd.f32 %v3755, %v3797
    %v3814 = vadd.f32 %v3684, %v3785
    %v3815 = vadd.f32 %v3686, %v3789
    %v3816 = vadd.f32 %v3757, %v3793
    %v3817 = vadd.f32 %v3759, %v3797
    %v3818 = vadd.f32 %v3690, %v3785
    %v3819 = vadd.f32 %v3692, %v3789
    %v3820 = vadd.f32 %v3763, %v3793
    %v3821 = vadd.f32 %v3765, %v3797
    %v3822 = vadd.f32 %v3694, %v3785
    %v3823 = vadd.f32 %v3696, %v3789
    %v3824 = vadd.f32 %v3767, %v3793
    %v3825 = vadd.f32 %v3769, %v3797
    %v3826 = vadd.f32 %v3700, %v3785
    %v3827 = vadd.f32 %v3702, %v3789
    %v3828 = vadd.f32 %v3773, %v3793
    %v3829 = vadd.f32 %v3775, %v3797
    %v3830 = vadd.f32 %v3704, %v3785
    %v3831 = vadd.f32 %v3706, %v3789
    %v3832 = vadd.f32 %v3777, %v3793
    %v3833 = vadd.f32 %v3779, %v3797
    %3834 = vst [vmem:[%s1855] sm:$0xff] %v3802
    %3835 = vst [vmem:[%s1855 + $0x8] sm:$0xff] %v3803
    %3836 = vst [vmem:[%s1855 + $0x10] sm:$0xff] %v3804
    %3837 = vst [vmem:[%s1855 + $0x18] sm:$0xff] %v3805
    %3838 = vst [vmem:[%s1855 + $0x20] sm:$0xff] %v3806
    %3839 = vst [vmem:[%s1855 + $0x28] sm:$0xff] %v3807
    %3840 = vst [vmem:[%s1855 + $0x30] sm:$0xff] %v3808
    %3841 = vst [vmem:[%s1855 + $0x38] sm:$0xff] %v3809
    %3842 = vst [vmem:[%s1855 + $0x40] sm:$0xff] %v3810
    %3843 = vst [vmem:[%s1855 + $0x48] sm:$0xff] %v3811
    %3844 = vst [vmem:[%s1855 + $0x50] sm:$0xff] %v3812
    %3845 = vst [vmem:[%s1855 + $0x58] sm:$0xff] %v3813
    %3846 = vst [vmem:[%s1855 + $0x60] sm:$0xff] %v3814
    %3847 = vst [vmem:[%s1855 + $0x68] sm:$0xff] %v3815
    %3848 = vst [vmem:[%s1855 + $0x70] sm:$0xff] %v3816
    %3849 = vst [vmem:[%s1855 + $0x78] sm:$0xff] %v3817
    %3850 = vst [vmem:[%s1855 + $0x80] sm:$0xff] %v3818
    %3851 = vst [vmem:[%s1855 + $0x88] sm:$0xff] %v3819
    %3852 = vst [vmem:[%s1855 + $0x90] sm:$0xff] %v3820
    %3853 = vst [vmem:[%s1855 + $0x98] sm:$0xff] %v3821
    %3854 = vst [vmem:[%s1855 + $0xa0] sm:$0xff] %v3822
    %3855 = vst [vmem:[%s1855 + $0xa8] sm:$0xff] %v3823
    %3856 = vst [vmem:[%s1855 + $0xb0] sm:$0xff] %v3824
    %3857 = vst [vmem:[%s1855 + $0xb8] sm:$0xff] %v3825
    %3858 = vst [vmem:[%s1855 + $0xc0] sm:$0xff] %v3826
    %3859 = vst [vmem:[%s1855 + $0xc8] sm:$0xff] %v3827
    %3860 = vst [vmem:[%s1855 + $0xd0] sm:$0xff] %v3828
    %3861 = vst [vmem:[%s1855 + $0xd8] sm:$0xff] %v3829
    %3862 = vst [vmem:[%s1855 + $0xe0] sm:$0xff] %v3830
    %3863 = vst [vmem:[%s1855 + $0xe8] sm:$0xff] %v3831
    %3864 = vst [vmem:[%s1855 + $0xf0] sm:$0xff] %v3832
    %3865 = vst [vmem:[%s1855 + $0xf8] sm:$0xff] %v3833
    %v3866 = vld [vmem:[#allocation9] sm:$0xff]
    %v3867 = vld [vmem:[#allocation9 + $0x8] sm:$0xff]
    %v3868 = vld [vmem:[#allocation9 + $0x10] sm:$0xff]
    %v3869 = vld [vmem:[#allocation9 + $0x18] sm:$0xff]
    %v3870 = vld [vmem:[#allocation9 + $0x20] sm:$0xff]
    %v3871 = vld [vmem:[#allocation9 + $0x28] sm:$0xff]
    %v3872 = vld [vmem:[#allocation9 + $0x30] sm:$0xff]
    %v3873 = vld [vmem:[#allocation9 + $0x38] sm:$0xff]
    %v3874 = vld [vmem:[#allocation9 + $0x40] sm:$0xff]
    %v3875 = vld [vmem:[#allocation9 + $0x48] sm:$0xff]
    %v3876 = vld [vmem:[#allocation9 + $0x50] sm:$0xff]
    %v3877 = vld [vmem:[#allocation9 + $0x58] sm:$0xff]
    %v3878 = vld [vmem:[#allocation9 + $0x60] sm:$0xff]
    %v3879 = vld [vmem:[#allocation9 + $0x68] sm:$0xff]
    %v3880 = vld [vmem:[#allocation9 + $0x70] sm:$0xff]
    %v3881 = vld [vmem:[#allocation9 + $0x78] sm:$0xff]
    %v3898 = vunpack.c.l.b16 %v3866
    %v3899 = vunpack.c.h.b16 %v3866
    %v3900 = vunpack.c.l.b16 %v3867
    %v3901 = vunpack.c.h.b16 %v3867
    %v3902 = vunpack.c.l.b16 %v3868
    %v3903 = vunpack.c.h.b16 %v3868
    %v3904 = vunpack.c.l.b16 %v3869
    %v3905 = vunpack.c.h.b16 %v3869
    %v3906 = vunpack.c.l.b16 %v3870
    %v3907 = vunpack.c.h.b16 %v3870
    %v3908 = vunpack.c.l.b16 %v3871
    %v3909 = vunpack.c.h.b16 %v3871
    %v3910 = vunpack.c.l.b16 %v3872
    %v3911 = vunpack.c.h.b16 %v3872
    %v3912 = vunpack.c.l.b16 %v3873
    %v3913 = vunpack.c.h.b16 %v3873
    %v3914 = vunpack.c.l.b16 %v3874
    %v3915 = vunpack.c.h.b16 %v3874
    %v3916 = vunpack.c.l.b16 %v3875
    %v3917 = vunpack.c.h.b16 %v3875
    %v3918 = vunpack.c.l.b16 %v3876
    %v3919 = vunpack.c.h.b16 %v3876
    %v3920 = vunpack.c.l.b16 %v3877
    %v3921 = vunpack.c.h.b16 %v3877
    %v3922 = vunpack.c.l.b16 %v3878
    %v3923 = vunpack.c.h.b16 %v3878
    %v3924 = vunpack.c.l.b16 %v3879
    %v3925 = vunpack.c.h.b16 %v3879
    %v3926 = vunpack.c.l.b16 %v3880
    %v3927 = vunpack.c.h.b16 %v3880
    %v3928 = vunpack.c.l.b16 %v3881
    %v3929 = vunpack.c.h.b16 %v3881
    %v3930 = vpack.c.b16 %v3902, %v3898
    %v3931 = vpack.c.b16 %v3903, %v3899
    %v3932 = vpack.c.b16 %v3904, %v3900
    %v3933 = vpack.c.b16 %v3905, %v3901
    %v3934 = vpack.c.b16 %v3910, %v3906
    %v3935 = vpack.c.b16 %v3911, %v3907
    %v3936 = vpack.c.b16 %v3912, %v3908
    %v3937 = vpack.c.b16 %v3913, %v3909
    %v3938 = vpack.c.b16 %v3918, %v3914
    %v3939 = vpack.c.b16 %v3919, %v3915
    %v3940 = vpack.c.b16 %v3920, %v3916
    %v3941 = vpack.c.b16 %v3921, %v3917
    %v3942 = vpack.c.b16 %v3926, %v3922
    %v3943 = vpack.c.b16 %v3927, %v3923
    %v3944 = vpack.c.b16 %v3928, %v3924
    %v3945 = vpack.c.b16 %v3929, %v3925
    %3962 = vmatprep.subr.bf16.mxu0 %v3931
    %3963 = vmatpush1.bf16.msra.mxu0 %v3930
    %3964 = vmatprep.subr.bf16.mxu0 %v3935
    %3965 = vmatpush1.bf16.msra.mxu0 %v3934
    %3966 = vmatprep.subr.bf16.mxu0 %v3939
    %3967 = vmatpush1.bf16.msra.mxu0 %v3938
    %3968 = vmatprep.subr.bf16.mxu0 %v3943
    %3969 = vmatpush1.bf16.msra.mxu0 %v3942
    %3970 = vmatprep.subr.bf16.mxu0 0
    %3971 = vmatpush1.bf16.msra.mxu0 0
    %3972 = vmatprep.subr.bf16.mxu0 0
    %3973 = vmatpush1.bf16.msra.mxu0 0
    %3974 = vmatprep.subr.bf16.mxu0 0
    %3975 = vmatpush1.bf16.msra.mxu0 0
    %3976 = vmatprep.subr.bf16.mxu0 0
    %3977 = vmatpush1.bf16.msra.mxu0 0
    %3978 = vmatprep.subr.bf16.mxu0 0
    %3979 = vmatpush1.bf16.msra.mxu0 0
    %3980 = vmatprep.subr.bf16.mxu0 0
    %3981 = vmatpush1.bf16.msra.mxu0 0
    %3982 = vmatprep.subr.bf16.mxu0 0
    %3983 = vmatpush1.bf16.msra.mxu0 0
    %3984 = vmatprep.subr.bf16.mxu0 0
    %3985 = vmatpush1.bf16.msra.mxu0 0
    %3986 = vmatprep.subr.bf16.mxu0 0
    %3987 = vmatpush1.bf16.msra.mxu0 0
    %3988 = vmatprep.subr.bf16.mxu0 0
    %3989 = vmatpush1.bf16.msra.mxu0 0
    %3990 = vmatprep.subr.bf16.mxu0 0
    %3991 = vmatpush1.bf16.msra.mxu0 0
    %3992 = vmatprep.subr.bf16.mxu0 0
    %3993 = vmatpush1.bf16.msra.mxu0 0
    %3994 = vmatprep.mubr.bf16.mxu0 0
    %3995 = vmatmul.mubr.bf16.gmra.mrb[0].mxu0 %v1986
    %v3996 = vpop.f32.mrb[0].mxu0
    %v3997 = vadd.f32 0.0, %v3996
    %v3998 = vpop.f32.mrb[0].mxu0
    %v3999 = vadd.f32 0.0, %v3998
    %v4000 = vpop.f32.mrb[0].mxu0
    %v4001 = vpop.f32.mrb[0].mxu0
    %4002 = vdwg.mxu0
    %4003 = vmatprep.subr.bf16.mxu0 %v3933
    %4004 = vmatpush1.bf16.msra.mxu0 %v3932
    %4005 = vmatprep.subr.bf16.mxu0 %v3937
    %4006 = vmatpush1.bf16.msra.mxu0 %v3936
    %4007 = vmatprep.subr.bf16.mxu0 %v3941
    %4008 = vmatpush1.bf16.msra.mxu0 %v3940
    %4009 = vmatprep.subr.bf16.mxu0 %v3945
    %4010 = vmatpush1.bf16.msra.mxu0 %v3944
    %4011 = vmatprep.subr.bf16.mxu0 0
    %4012 = vmatpush1.bf16.msra.mxu0 0
    %4013 = vmatprep.subr.bf16.mxu0 0
    %4014 = vmatpush1.bf16.msra.mxu0 0
    %4015 = vmatprep.subr.bf16.mxu0 0
    %4016 = vmatpush1.bf16.msra.mxu0 0
    %4017 = vmatprep.subr.bf16.mxu0 0
    %4018 = vmatpush1.bf16.msra.mxu0 0
    %4019 = vmatprep.subr.bf16.mxu0 0
    %4020 = vmatpush1.bf16.msra.mxu0 0
    %4021 = vmatprep.subr.bf16.mxu0 0
    %4022 = vmatpush1.bf16.msra.mxu0 0
    %4023 = vmatprep.subr.bf16.mxu0 0
    %4024 = vmatpush1.bf16.msra.mxu0 0
    %4025 = vmatprep.subr.bf16.mxu0 0
    %4026 = vmatpush1.bf16.msra.mxu0 0
    %4027 = vmatprep.subr.bf16.mxu0 0
    %4028 = vmatpush1.bf16.msra.mxu0 0
    %4029 = vmatprep.subr.bf16.mxu0 0
    %4030 = vmatpush1.bf16.msra.mxu0 0
    %4031 = vmatprep.subr.bf16.mxu0 0
    %4032 = vmatpush1.bf16.msra.mxu0 0
    %4033 = vmatprep.subr.bf16.mxu0 0
    %4034 = vmatpush1.bf16.msra.mxu0 0
    %4035 = vmatprep.mubr.bf16.mxu0 0
    %4036 = vmatmul.mubr.bf16.gmra.mrb[0].mxu0 %v1986
    %v4037 = vpop.f32.mrb[0].mxu0
    %v4038 = vpop.f32.mrb[0].mxu0
    %v4039 = vpop.f32.mrb[0].mxu0
    %v4040 = vadd.f32 0.0, %v4039
    %v4041 = vpop.f32.mrb[0].mxu0
    %v4042 = vadd.f32 0.0, %v4041
    %4043 = vdwg.mxu0
    %v4044 = vld [vmem:[#allocation2] sm:$0xff]
    %v4045 = vld [vmem:[#allocation2 + $0x8] sm:$0xff]
    %v4046 = vadd.f32 %v4044, %v3997
    %v4047 = vadd.f32 %v4045, %v3999
    %v4048 = vld [vmem:[%s2074 + $0x10] sm:$0xff]
    %v4049 = vld [vmem:[%s2074 + $0x18] sm:$0xff]
    %v4050 = vadd.f32 %v4048, %v4040
    %v4051 = vadd.f32 %v4049, %v4042
    %v4052 = vxor.u32 %v4046, 2147483648
    %v4053 = vxor.u32 %v4047, 2147483648
    %v4054 = vxor.u32 %v4050, 2147483648
    %v4055 = vxor.u32 %v4051, 2147483648
    %v4056 = vmul.f32 %v4052, 1.442695
    %v4057 = vpow.pop %v4056
    %v4058 = vmul.f32 %v4053, 1.442695
    %v4059 = vpow.pop %v4058
    %v4060 = vmul.f32 %v4054, 1.442695
    %v4061 = vpow.pop %v4060
    %v4062 = vmul.f32 %v4055, 1.442695
    %v4063 = vpow.pop %v4062
    %v4064 = vadd.f32 %v4057, 1.0
    %v4065 = vadd.f32 %v4059, 1.0
    %v4066 = vadd.f32 %v4061, 1.0
    %v4067 = vadd.f32 %v4063, 1.0
    %v4068 = vrcp.pop %v4064
    %v4069 = vmul.f32 1.0, %v4068
    %v4070 = vrcp.pop %v4065
    %v4071 = vmul.f32 1.0, %v4070
    %v4072 = vrcp.pop %v4066
    %v4073 = vmul.f32 1.0, %v4072
    %v4074 = vrcp.pop %v4067
    %v4075 = vmul.f32 1.0, %v4074
    %v4076 = vtanh.pop %v4047
    %v4077 = vtanh.pop %v4051
    %v4078 = vmul.f32 %v4069, 0.0
    %v4079 = vmul.f32 %v4073, 0.0
    %4082 = vrot.lane.b32.xlu0 %v4076, 64
    %v4083 = vpop.permute.xlu0 %4082
    %4084 = vrot.lane.b32.xlu0 %v4077, 64
    %v4085 = vpop.permute.xlu0 %4084
    %v4088 = vmul.f32 %v4069, %v4083
    %v4089 = vmul.f32 %v4073, %v4085
    %4092 = vrot.lane.b32.xlu0 %v4088, 64
    %v4093 = vpop.permute.xlu0 %4092
    %4094 = vrot.lane.b32.xlu0 %v4089, 64
    %v4095 = vpop.permute.xlu0 %4094
    %v4098 = vadd.f32 %v4078, %v4093
    %v4099 = vadd.f32 %v4079, %v4095
    %v4100 = vtanh.pop %v4098
    %v4101 = vtanh.pop %v4099
    %4104 = vrot.lane.b32.xlu0 %v4100, 64
    %v4105 = vpop.permute.xlu0 %4104
    %4106 = vrot.lane.b32.xlu0 %v4101, 64
    %v4107 = vpop.permute.xlu0 %4106
    %v4110 = vmul.f32 %v4071, %v4105
    %v4111 = vmul.f32 %v4075, %v4107
    %v4112 = vadd.f32 %v4110, 0.0
    %v4113 = vadd.f32 %v4111, 0.0
    %v4114 = vpack.c.bf16 %v4111, %v4110
    %v4116 = vsel %vm1984, %v4114, 0
    %4118 = vmatprep.subr.bf16.mxu0 %v3931
    %4119 = vmatpush1.bf16.msra.mxu0 %v3930
    %4120 = vmatprep.subr.bf16.mxu0 %v3935
    %4121 = vmatpush1.bf16.msra.mxu0 %v3934
    %4122 = vmatprep.subr.bf16.mxu0 %v3939
    %4123 = vmatpush1.bf16.msra.mxu0 %v3938
    %4124 = vmatprep.subr.bf16.mxu0 %v3943
    %4125 = vmatpush1.bf16.msra.mxu0 %v3942
    %4126 = vmatprep.subr.bf16.mxu0 0
    %4127 = vmatpush1.bf16.msra.mxu0 0
    %4128 = vmatprep.subr.bf16.mxu0 0
    %4129 = vmatpush1.bf16.msra.mxu0 0
    %4130 = vmatprep.subr.bf16.mxu0 0
    %4131 = vmatpush1.bf16.msra.mxu0 0
    %4132 = vmatprep.subr.bf16.mxu0 0
    %4133 = vmatpush1.bf16.msra.mxu0 0
    %4134 = vmatprep.subr.bf16.mxu0 0
    %4135 = vmatpush1.bf16.msra.mxu0 0
    %4136 = vmatprep.subr.bf16.mxu0 0
    %4137 = vmatpush1.bf16.msra.mxu0 0
    %4138 = vmatprep.subr.bf16.mxu0 0
    %4139 = vmatpush1.bf16.msra.mxu0 0
    %4140 = vmatprep.subr.bf16.mxu0 0
    %4141 = vmatpush1.bf16.msra.mxu0 0
    %4142 = vmatprep.subr.bf16.mxu0 0
    %4143 = vmatpush1.bf16.msra.mxu0 0
    %4144 = vmatprep.subr.bf16.mxu0 0
    %4145 = vmatpush1.bf16.msra.mxu0 0
    %4146 = vmatprep.subr.bf16.mxu0 0
    %4147 = vmatpush1.bf16.msra.mxu0 0
    %4148 = vmatprep.subr.bf16.mxu0 0
    %4149 = vmatpush1.bf16.msra.mxu0 0
    %4150 = vmatprep.mubr.bf16.mxu0 0
    %4151 = vmatmul.mubr.bf16.gmra.mrb[0].mxu0 %v4116
    %v4152 = vpop.f32.mrb[0].mxu0
    %v4153 = vadd.f32 0.0, %v4152
    %v4154 = vpop.f32.mrb[0].mxu0
    %v4155 = vadd.f32 0.0, %v4154
    %v4156 = vpop.f32.mrb[0].mxu0
    %v4157 = vpop.f32.mrb[0].mxu0
    %4158 = vdwg.mxu0
    %4159 = vmatprep.subr.bf16.mxu0 %v3933
    %4160 = vmatpush1.bf16.msra.mxu0 %v3932
    %4161 = vmatprep.subr.bf16.mxu0 %v3937
    %4162 = vmatpush1.bf16.msra.mxu0 %v3936
    %4163 = vmatprep.subr.bf16.mxu0 %v3941
    %4164 = vmatpush1.bf16.msra.mxu0 %v3940
    %4165 = vmatprep.subr.bf16.mxu0 %v3945
    %4166 = vmatpush1.bf16.msra.mxu0 %v3944
    %4167 = vmatprep.subr.bf16.mxu0 0
    %4168 = vmatpush1.bf16.msra.mxu0 0
    %4169 = vmatprep.subr.bf16.mxu0 0
    %4170 = vmatpush1.bf16.msra.mxu0 0
    %4171 = vmatprep.subr.bf16.mxu0 0
    %4172 = vmatpush1.bf16.msra.mxu0 0
    %4173 = vmatprep.subr.bf16.mxu0 0
    %4174 = vmatpush1.bf16.msra.mxu0 0
    %4175 = vmatprep.subr.bf16.mxu0 0
    %4176 = vmatpush1.bf16.msra.mxu0 0
    %4177 = vmatprep.subr.bf16.mxu0 0
    %4178 = vmatpush1.bf16.msra.mxu0 0
    %4179 = vmatprep.subr.bf16.mxu0 0
    %4180 = vmatpush1.bf16.msra.mxu0 0
    %4181 = vmatprep.subr.bf16.mxu0 0
    %4182 = vmatpush1.bf16.msra.mxu0 0
    %4183 = vmatprep.subr.bf16.mxu0 0
    %4184 = vmatpush1.bf16.msra.mxu0 0
    %4185 = vmatprep.subr.bf16.mxu0 0
    %4186 = vmatpush1.bf16.msra.mxu0 0
    %4187 = vmatprep.subr.bf16.mxu0 0
    %4188 = vmatpush1.bf16.msra.mxu0 0
    %4189 = vmatprep.subr.bf16.mxu0 0
    %4190 = vmatpush1.bf16.msra.mxu0 0
    %4191 = vmatprep.mubr.bf16.mxu0 0
    %4192 = vmatmul.mubr.bf16.gmra.mrb[0].mxu0 %v4116
    %v4193 = vpop.f32.mrb[0].mxu0
    %v4194 = vpop.f32.mrb[0].mxu0
    %v4195 = vpop.f32.mrb[0].mxu0
    %v4196 = vadd.f32 0.0, %v4195
    %v4197 = vpop.f32.mrb[0].mxu0
    %v4198 = vadd.f32 0.0, %v4197
    %4199 = vdwg.mxu0
    %v4200 = vld [vmem:[%s2228] sm:$0xff]
    %v4201 = vld [vmem:[%s2228 + $0x8] sm:$0xff]
    %v4202 = vadd.f32 %v4200, %v4153
    %v4203 = vadd.f32 %v4201, %v4155
    %v4204 = vld [vmem:[%s2233 + $0x10] sm:$0xff]
    %v4205 = vld [vmem:[%s2233 + $0x18] sm:$0xff]
    %v4206 = vadd.f32 %v4204, %v4196
    %v4207 = vadd.f32 %v4205, %v4198
    %v4208 = vxor.u32 %v4202, 2147483648
    %v4209 = vxor.u32 %v4203, 2147483648
    %v4210 = vxor.u32 %v4206, 2147483648
    %v4211 = vxor.u32 %v4207, 2147483648
    %v4212 = vmul.f32 %v4208, 1.442695
    %v4213 = vpow.pop %v4212
    %v4214 = vmul.f32 %v4209, 1.442695
    %v4215 = vpow.pop %v4214
    %v4216 = vmul.f32 %v4210, 1.442695
    %v4217 = vpow.pop %v4216
    %v4218 = vmul.f32 %v4211, 1.442695
    %v4219 = vpow.pop %v4218
    %v4220 = vadd.f32 %v4213, 1.0
    %v4221 = vadd.f32 %v4215, 1.0
    %v4222 = vadd.f32 %v4217, 1.0
    %v4223 = vadd.f32 %v4219, 1.0
    %v4224 = vrcp.pop %v4220
    %v4225 = vmul.f32 1.0, %v4224
    %v4226 = vrcp.pop %v4221
    %v4227 = vmul.f32 1.0, %v4226
    %v4228 = vrcp.pop %v4222
    %v4229 = vmul.f32 1.0, %v4228
    %v4230 = vrcp.pop %v4223
    %v4231 = vmul.f32 1.0, %v4230
    %v4232 = vtanh.pop %v4203
    %v4233 = vtanh.pop %v4207
    %v4234 = vmul.f32 %v4225, %v4098
    %v4235 = vmul.f32 %v4229, %v4099
    %4238 = vrot.lane.b32.xlu0 %v4232, 64
    %v4239 = vpop.permute.xlu0 %4238
    %4240 = vrot.lane.b32.xlu0 %v4233, 64
    %v4241 = vpop.permute.xlu0 %4240
    %v4244 = vmul.f32 %v4225, %v4239
    %v4245 = vmul.f32 %v4229, %v4241
    %4248 = vrot.lane.b32.xlu0 %v4244, 64
    %v4249 = vpop.permute.xlu0 %4248
    %4250 = vrot.lane.b32.xlu0 %v4245, 64
    %v4251 = vpop.permute.xlu0 %4250
    %v4254 = vadd.f32 %v4234, %v4249
    %v4255 = vadd.f32 %v4235, %v4251
    %v4256 = vtanh.pop %v4254
    %v4257 = vtanh.pop %v4255
    %4260 = vrot.lane.b32.xlu0 %v4256, 64
    %v4261 = vpop.permute.xlu0 %4260
    %4262 = vrot.lane.b32.xlu0 %v4257, 64
    %v4263 = vpop.permute.xlu0 %4262
    %v4266 = vmul.f32 %v4227, %v4261
    %v4267 = vmul.f32 %v4231, %v4263
    %v4268 = vadd.f32 %v4112, %v4266
    %v4269 = vadd.f32 %v4113, %v4267
    %v4270 = vpack.c.bf16 %v4267, %v4266
    %v4272 = vsel %vm1984, %v4270, 0
    %4274 = vmatprep.subr.bf16.mxu0 %v3931
    %4275 = vmatpush1.bf16.msra.mxu0 %v3930
    %4276 = vmatprep.subr.bf16.mxu0 %v3935
    %4277 = vmatpush1.bf16.msra.mxu0 %v3934
    %4278 = vmatprep.subr.bf16.mxu0 %v3939
    %4279 = vmatpush1.bf16.msra.mxu0 %v3938
    %4280 = vmatprep.subr.bf16.mxu0 %v3943
    %4281 = vmatpush1.bf16.msra.mxu0 %v3942
    %4282 = vmatprep.subr.bf16.mxu0 0
    %4283 = vmatpush1.bf16.msra.mxu0 0
    %4284 = vmatprep.subr.bf16.mxu0 0
    %4285 = vmatpush1.bf16.msra.mxu0 0
    %4286 = vmatprep.subr.bf16.mxu0 0
    %4287 = vmatpush1.bf16.msra.mxu0 0
    %4288 = vmatprep.subr.bf16.mxu0 0
    %4289 = vmatpush1.bf16.msra.mxu0 0
    %4290 = vmatprep.subr.bf16.mxu0 0
    %4291 = vmatpush1.bf16.msra.mxu0 0
    %4292 = vmatprep.subr.bf16.mxu0 0
    %4293 = vmatpush1.bf16.msra.mxu0 0
    %4294 = vmatprep.subr.bf16.mxu0 0
    %4295 = vmatpush1.bf16.msra.mxu0 0
    %4296 = vmatprep.subr.bf16.mxu0 0
    %4297 = vmatpush1.bf16.msra.mxu0 0
    %4298 = vmatprep.subr.bf16.mxu0 0
    %4299 = vmatpush1.bf16.msra.mxu0 0
    %4300 = vmatprep.subr.bf16.mxu0 0
    %4301 = vmatpush1.bf16.msra.mxu0 0
    %4302 = vmatprep.subr.bf16.mxu0 0
    %4303 = vmatpush1.bf16.msra.mxu0 0
    %4304 = vmatprep.subr.bf16.mxu0 0
    %4305 = vmatpush1.bf16.msra.mxu0 0
    %4306 = vmatprep.mubr.bf16.mxu0 0
    %4307 = vmatmul.mubr.bf16.gmra.mrb[0].mxu0 %v4272
    %v4308 = vpop.f32.mrb[0].mxu0
    %v4309 = vadd.f32 0.0, %v4308
    %v4310 = vpop.f32.mrb[0].mxu0
    %v4311 = vadd.f32 0.0, %v4310
    %v4312 = vpop.f32.mrb[0].mxu0
    %v4313 = vpop.f32.mrb[0].mxu0
    %4314 = vdwg.mxu0
    %4315 = vmatprep.subr.bf16.mxu0 %v3933
    %4316 = vmatpush1.bf16.msra.mxu0 %v3932
    %4317 = vmatprep.subr.bf16.mxu0 %v3937
    %4318 = vmatpush1.bf16.msra.mxu0 %v3936
    %4319 = vmatprep.subr.bf16.mxu0 %v3941
    %4320 = vmatpush1.bf16.msra.mxu0 %v3940
    %4321 = vmatprep.subr.bf16.mxu0 %v3945
    %4322 = vmatpush1.bf16.msra.mxu0 %v3944
    %4323 = vmatprep.subr.bf16.mxu0 0
    %4324 = vmatpush1.bf16.msra.mxu0 0
    %4325 = vmatprep.subr.bf16.mxu0 0
    %4326 = vmatpush1.bf16.msra.mxu0 0
    %4327 = vmatprep.subr.bf16.mxu0 0
    %4328 = vmatpush1.bf16.msra.mxu0 0
    %4329 = vmatprep.subr.bf16.mxu0 0
    %4330 = vmatpush1.bf16.msra.mxu0 0
    %4331 = vmatprep.subr.bf16.mxu0 0
    %4332 = vmatpush1.bf16.msra.mxu0 0
    %4333 = vmatprep.subr.bf16.mxu0 0
    %4334 = vmatpush1.bf16.msra.mxu0 0
    %4335 = vmatprep.subr.bf16.mxu0 0
    %4336 = vmatpush1.bf16.msra.mxu0 0
    %4337 = vmatprep.subr.bf16.mxu0 0
    %4338 = vmatpush1.bf16.msra.mxu0 0
    %4339 = vmatprep.subr.bf16.mxu0 0
    %4340 = vmatpush1.bf16.msra.mxu0 0
    %4341 = vmatprep.subr.bf16.mxu0 0
    %4342 = vmatpush1.bf16.msra.mxu0 0
    %4343 = vmatprep.subr.bf16.mxu0 0
    %4344 = vmatpush1.bf16.msra.mxu0 0
    %4345 = vmatprep.subr.bf16.mxu0 0
    %4346 = vmatpush1.bf16.msra.mxu0 0
    %4347 = vmatprep.mubr.bf16.mxu0 0
    %4348 = vmatmul.mubr.bf16.gmra.mrb[0].mxu0 %v4272
    %v4349 = vpop.f32.mrb[0].mxu0
    %v4350 = vpop.f32.mrb[0].mxu0
    %v4351 = vpop.f32.mrb[0].mxu0
    %v4352 = vadd.f32 0.0, %v4351
    %v4353 = vpop.f32.mrb[0].mxu0
    %v4354 = vadd.f32 0.0, %v4353
    %4355 = vdwg.mxu0
    %v4356 = vld [vmem:[%s2388] sm:$0xff]
    %v4357 = vld [vmem:[%s2388 + $0x8] sm:$0xff]
    %v4358 = vadd.f32 %v4356, %v4309
    %v4359 = vadd.f32 %v4357, %v4311
    %v4360 = vld [vmem:[%s2393 + $0x10] sm:$0xff]
    %v4361 = vld [vmem:[%s2393 + $0x18] sm:$0xff]
    %v4362 = vadd.f32 %v4360, %v4352
    %v4363 = vadd.f32 %v4361, %v4354
    %v4364 = vxor.u32 %v4358, 2147483648
    %v4365 = vxor.u32 %v4359, 2147483648
    %v4366 = vxor.u32 %v4362, 2147483648
    %v4367 = vxor.u32 %v4363, 2147483648
    %v4368 = vmul.f32 %v4364, 1.442695
    %v4369 = vpow.pop %v4368
    %v4370 = vmul.f32 %v4365, 1.442695
    %v4371 = vpow.pop %v4370
    %v4372 = vmul.f32 %v4366, 1.442695
    %v4373 = vpow.pop %v4372
    %v4374 = vmul.f32 %v4367, 1.442695
    %v4375 = vpow.pop %v4374
    %v4376 = vadd.f32 %v4369, 1.0
    %v4377 = vadd.f32 %v4371, 1.0
    %v4378 = vadd.f32 %v4373, 1.0
    %v4379 = vadd.f32 %v4375, 1.0
    %v4380 = vrcp.pop %v4376
    %v4381 = vmul.f32 1.0, %v4380
    %v4382 = vrcp.pop %v4377
    %v4383 = vmul.f32 1.0, %v4382
    %v4384 = vrcp.pop %v4378
    %v4385 = vmul.f32 1.0, %v4384
    %v4386 = vrcp.pop %v4379
    %v4387 = vmul.f32 1.0, %v4386
    %v4388 = vtanh.pop %v4359
    %v4389 = vtanh.pop %v4363
    %v4390 = vmul.f32 %v4381, %v4254
    %v4391 = vmul.f32 %v4385, %v4255
    %4394 = vrot.lane.b32.xlu0 %v4388, 64
    %v4395 = vpop.permute.xlu0 %4394
    %4396 = vrot.lane.b32.xlu0 %v4389, 64
    %v4397 = vpop.permute.xlu0 %4396
    %v4400 = vmul.f32 %v4381, %v4395
    %v4401 = vmul.f32 %v4385, %v4397
    %4404 = vrot.lane.b32.xlu0 %v4400, 64
    %v4405 = vpop.permute.xlu0 %4404
    %4406 = vrot.lane.b32.xlu0 %v4401, 64
    %v4407 = vpop.permute.xlu0 %4406
    %v4410 = vadd.f32 %v4390, %v4405
    %v4411 = vadd.f32 %v4391, %v4407
    %v4412 = vtanh.pop %v4410
    %v4413 = vtanh.pop %v4411
    %4416 = vrot.lane.b32.xlu0 %v4412, 64
    %v4417 = vpop.permute.xlu0 %4416
    %4418 = vrot.lane.b32.xlu0 %v4413, 64
    %v4419 = vpop.permute.xlu0 %4418
    %v4422 = vmul.f32 %v4383, %v4417
    %v4423 = vmul.f32 %v4387, %v4419
    %v4424 = vadd.f32 %v4268, %v4422
    %v4425 = vadd.f32 %v4269, %v4423
    %v4426 = vpack.c.bf16 %v4423, %v4422
    %v4428 = vsel %vm1984, %v4426, 0
    %4430 = vmatprep.subr.bf16.mxu0 %v3931
    %4431 = vmatpush1.bf16.msra.mxu0 %v3930
    %4432 = vmatprep.subr.bf16.mxu0 %v3935
    %4433 = vmatpush1.bf16.msra.mxu0 %v3934
    %4434 = vmatprep.subr.bf16.mxu0 %v3939
    %4435 = vmatpush1.bf16.msra.mxu0 %v3938
    %4436 = vmatprep.subr.bf16.mxu0 %v3943
    %4437 = vmatpush1.bf16.msra.mxu0 %v3942
    %4438 = vmatprep.subr.bf16.mxu0 0
    %4439 = vmatpush1.bf16.msra.mxu0 0
    %4440 = vmatprep.subr.bf16.mxu0 0
    %4441 = vmatpush1.bf16.msra.mxu0 0
    %4442 = vmatprep.subr.bf16.mxu0 0
    %4443 = vmatpush1.bf16.msra.mxu0 0
    %4444 = vmatprep.subr.bf16.mxu0 0
    %4445 = vmatpush1.bf16.msra.mxu0 0
    %4446 = vmatprep.subr.bf16.mxu0 0
    %4447 = vmatpush1.bf16.msra.mxu0 0
    %4448 = vmatprep.subr.bf16.mxu0 0
    %4449 = vmatpush1.bf16.msra.mxu0 0
    %4450 = vmatprep.subr.bf16.mxu0 0
    %4451 = vmatpush1.bf16.msra.mxu0 0
    %4452 = vmatprep.subr.bf16.mxu0 0
    %4453 = vmatpush1.bf16.msra.mxu0 0
    %4454 = vmatprep.subr.bf16.mxu0 0
    %4455 = vmatpush1.bf16.msra.mxu0 0
    %4456 = vmatprep.subr.bf16.mxu0 0
    %4457 = vmatpush1.bf16.msra.mxu0 0
    %4458 = vmatprep.subr.bf16.mxu0 0
    %4459 = vmatpush1.bf16.msra.mxu0 0
    %4460 = vmatprep.subr.bf16.mxu0 0
    %4461 = vmatpush1.bf16.msra.mxu0 0
    %4462 = vmatprep.mubr.bf16.mxu0 0
    %4463 = vmatmul.mubr.bf16.gmra.mrb[0].mxu0 %v4428
    %v4464 = vpop.f32.mrb[0].mxu0
    %v4465 = vadd.f32 0.0, %v4464
    %v4466 = vpop.f32.mrb[0].mxu0
    %v4467 = vadd.f32 0.0, %v4466
    %v4468 = vpop.f32.mrb[0].mxu0
    %v4469 = vpop.f32.mrb[0].mxu0
    %4470 = vdwg.mxu0
    %4471 = vmatprep.subr.bf16.mxu0 %v3933
    %4472 = vmatpush1.bf16.msra.mxu0 %v3932
    %4473 = vmatprep.subr.bf16.mxu0 %v3937
    %4474 = vmatpush1.bf16.msra.mxu0 %v3936
    %4475 = vmatprep.subr.bf16.mxu0 %v3941
    %4476 = vmatpush1.bf16.msra.mxu0 %v3940
    %4477 = vmatprep.subr.bf16.mxu0 %v3945
    %4478 = vmatpush1.bf16.msra.mxu0 %v3944
    %4479 = vmatprep.subr.bf16.mxu0 0
    %4480 = vmatpush1.bf16.msra.mxu0 0
    %4481 = vmatprep.subr.bf16.mxu0 0
    %4482 = vmatpush1.bf16.msra.mxu0 0
    %4483 = vmatprep.subr.bf16.mxu0 0
    %4484 = vmatpush1.bf16.msra.mxu0 0
    %4485 = vmatprep.subr.bf16.mxu0 0
    %4486 = vmatpush1.bf16.msra.mxu0 0
    %4487 = vmatprep.subr.bf16.mxu0 0
    %4488 = vmatpush1.bf16.msra.mxu0 0
    %4489 = vmatprep.subr.bf16.mxu0 0
    %4490 = vmatpush1.bf16.msra.mxu0 0
    %4491 = vmatprep.subr.bf16.mxu0 0
    %4492 = vmatpush1.bf16.msra.mxu0 0
    %4493 = vmatprep.subr.bf16.mxu0 0
    %4494 = vmatpush1.bf16.msra.mxu0 0
    %4495 = vmatprep.subr.bf16.mxu0 0
    %4496 = vmatpush1.bf16.msra.mxu0 0
    %4497 = vmatprep.subr.bf16.mxu0 0
    %4498 = vmatpush1.bf16.msra.mxu0 0
    %4499 = vmatprep.subr.bf16.mxu0 0
    %4500 = vmatpush1.bf16.msra.mxu0 0
    %4501 = vmatprep.subr.bf16.mxu0 0
    %4502 = vmatpush1.bf16.msra.mxu0 0
    %4503 = vmatprep.mubr.bf16.mxu0 0
    %4504 = vmatmul.mubr.bf16.gmra.mrb[0].mxu0 %v4428
    %v4505 = vpop.f32.mrb[0].mxu0
    %v4506 = vpop.f32.mrb[0].mxu0
    %v4507 = vpop.f32.mrb[0].mxu0
    %v4508 = vadd.f32 0.0, %v4507
    %v4509 = vpop.f32.mrb[0].mxu0
    %v4510 = vadd.f32 0.0, %v4509
    %4511 = vdwg.mxu0
    %v4512 = vld [vmem:[%s2548] sm:$0xff]
    %v4513 = vld [vmem:[%s2548 + $0x8] sm:$0xff]
    %v4514 = vadd.f32 %v4512, %v4465
    %v4515 = vadd.f32 %v4513, %v4467
    %v4516 = vld [vmem:[%s2553 + $0x10] sm:$0xff]
    %v4517 = vld [vmem:[%s2553 + $0x18] sm:$0xff]
    %v4518 = vadd.f32 %v4516, %v4508
    %v4519 = vadd.f32 %v4517, %v4510
    %v4520 = vxor.u32 %v4514, 2147483648
    %v4521 = vxor.u32 %v4515, 2147483648
    %v4522 = vxor.u32 %v4518, 2147483648
    %v4523 = vxor.u32 %v4519, 2147483648
    %v4524 = vmul.f32 %v4520, 1.442695
    %v4525 = vpow.pop %v4524
    %v4526 = vmul.f32 %v4521, 1.442695
    %v4527 = vpow.pop %v4526
    %v4528 = vmul.f32 %v4522, 1.442695
    %v4529 = vpow.pop %v4528
    %v4530 = vmul.f32 %v4523, 1.442695
    %v4531 = vpow.pop %v4530
    %v4532 = vadd.f32 %v4525, 1.0
    %v4533 = vadd.f32 %v4527, 1.0
    %v4534 = vadd.f32 %v4529, 1.0
    %v4535 = vadd.f32 %v4531, 1.0
    %v4536 = vrcp.pop %v4532
    %v4537 = vmul.f32 1.0, %v4536
    %v4538 = vrcp.pop %v4533
    %v4539 = vmul.f32 1.0, %v4538
    %v4540 = vrcp.pop %v4534
    %v4541 = vmul.f32 1.0, %v4540
    %v4542 = vrcp.pop %v4535
    %v4543 = vmul.f32 1.0, %v4542
    %v4544 = vtanh.pop %v4515
    %v4545 = vtanh.pop %v4519
    %v4546 = vmul.f32 %v4537, %v4410
    %v4547 = vmul.f32 %v4541, %v4411
    %4550 = vrot.lane.b32.xlu0 %v4544, 64
    %v4551 = vpop.permute.xlu0 %4550
    %4552 = vrot.lane.b32.xlu0 %v4545, 64
    %v4553 = vpop.permute.xlu0 %4552
    %v4556 = vmul.f32 %v4537, %v4551
    %v4557 = vmul.f32 %v4541, %v4553
    %4560 = vrot.lane.b32.xlu0 %v4556, 64
    %v4561 = vpop.permute.xlu0 %4560
    %4562 = vrot.lane.b32.xlu0 %v4557, 64
    %v4563 = vpop.permute.xlu0 %4562
    %v4566 = vadd.f32 %v4546, %v4561
    %v4567 = vadd.f32 %v4547, %v4563
    %v4568 = vtanh.pop %v4566
    %v4569 = vtanh.pop %v4567
    %4572 = vrot.lane.b32.xlu0 %v4568, 64
    %v4573 = vpop.permute.xlu0 %4572
    %4574 = vrot.lane.b32.xlu0 %v4569, 64
    %v4575 = vpop.permute.xlu0 %4574
    %v4578 = vmul.f32 %v4539, %v4573
    %v4579 = vmul.f32 %v4543, %v4575
    %v4580 = vadd.f32 %v4424, %v4578
    %v4581 = vadd.f32 %v4425, %v4579
    %v4582 = vpack.c.bf16 %v4579, %v4578
    %v4584 = vsel %vm1984, %v4582, 0
    %4586 = vmatprep.subr.bf16.mxu0 %v3931
    %4587 = vmatpush1.bf16.msra.mxu0 %v3930
    %4588 = vmatprep.subr.bf16.mxu0 %v3935
    %4589 = vmatpush1.bf16.msra.mxu0 %v3934
    %4590 = vmatprep.subr.bf16.mxu0 %v3939
    %4591 = vmatpush1.bf16.msra.mxu0 %v3938
    %4592 = vmatprep.subr.bf16.mxu0 %v3943
    %4593 = vmatpush1.bf16.msra.mxu0 %v3942
    %4594 = vmatprep.subr.bf16.mxu0 0
    %4595 = vmatpush1.bf16.msra.mxu0 0
    %4596 = vmatprep.subr.bf16.mxu0 0
    %4597 = vmatpush1.bf16.msra.mxu0 0
    %4598 = vmatprep.subr.bf16.mxu0 0
    %4599 = vmatpush1.bf16.msra.mxu0 0
    %4600 = vmatprep.subr.bf16.mxu0 0
    %4601 = vmatpush1.bf16.msra.mxu0 0
    %4602 = vmatprep.subr.bf16.mxu0 0
    %4603 = vmatpush1.bf16.msra.mxu0 0
    %4604 = vmatprep.subr.bf16.mxu0 0
    %4605 = vmatpush1.bf16.msra.mxu0 0
    %4606 = vmatprep.subr.bf16.mxu0 0
    %4607 = vmatpush1.bf16.msra.mxu0 0
    %4608 = vmatprep.subr.bf16.mxu0 0
    %4609 = vmatpush1.bf16.msra.mxu0 0
    %4610 = vmatprep.subr.bf16.mxu0 0
    %4611 = vmatpush1.bf16.msra.mxu0 0
    %4612 = vmatprep.subr.bf16.mxu0 0
    %4613 = vmatpush1.bf16.msra.mxu0 0
    %4614 = vmatprep.subr.bf16.mxu0 0
    %4615 = vmatpush1.bf16.msra.mxu0 0
    %4616 = vmatprep.subr.bf16.mxu0 0
    %4617 = vmatpush1.bf16.msra.mxu0 0
    %4618 = vmatprep.mubr.bf16.mxu0 0
    %4619 = vmatmul.mubr.bf16.gmra.mrb[0].mxu0 %v4584
    %v4620 = vpop.f32.mrb[0].mxu0
    %v4621 = vadd.f32 0.0, %v4620
    %v4622 = vpop.f32.mrb[0].mxu0
    %v4623 = vadd.f32 0.0, %v4622
    %v4624 = vpop.f32.mrb[0].mxu0
    %v4625 = vpop.f32.mrb[0].mxu0
    %4626 = vdwg.mxu0
    %4627 = vmatprep.subr.bf16.mxu0 %v3933
    %4628 = vmatpush1.bf16.msra.mxu0 %v3932
    %4629 = vmatprep.subr.bf16.mxu0 %v3937
    %4630 = vmatpush1.bf16.msra.mxu0 %v3936
    %4631 = vmatprep.subr.bf16.mxu0 %v3941
    %4632 = vmatpush1.bf16.msra.mxu0 %v3940
    %4633 = vmatprep.subr.bf16.mxu0 %v3945
    %4634 = vmatpush1.bf16.msra.mxu0 %v3944
    %4635 = vmatprep.subr.bf16.mxu0 0
    %4636 = vmatpush1.bf16.msra.mxu0 0
    %4637 = vmatprep.subr.bf16.mxu0 0
    %4638 = vmatpush1.bf16.msra.mxu0 0
    %4639 = vmatprep.subr.bf16.mxu0 0
    %4640 = vmatpush1.bf16.msra.mxu0 0
    %4641 = vmatprep.subr.bf16.mxu0 0
    %4642 = vmatpush1.bf16.msra.mxu0 0
    %4643 = vmatprep.subr.bf16.mxu0 0
    %4644 = vmatpush1.bf16.msra.mxu0 0
    %4645 = vmatprep.subr.bf16.mxu0 0
    %4646 = vmatpush1.bf16.msra.mxu0 0
    %4647 = vmatprep.subr.bf16.mxu0 0
    %4648 = vmatpush1.bf16.msra.mxu0 0
    %4649 = vmatprep.subr.bf16.mxu0 0
    %4650 = vmatpush1.bf16.msra.mxu0 0
    %4651 = vmatprep.subr.bf16.mxu0 0
    %4652 = vmatpush1.bf16.msra.mxu0 0
    %4653 = vmatprep.subr.bf16.mxu0 0
    %4654 = vmatpush1.bf16.msra.mxu0 0
    %4655 = vmatprep.subr.bf16.mxu0 0
    %4656 = vmatpush1.bf16.msra.mxu0 0
    %4657 = vmatprep.subr.bf16.mxu0 0
    %4658 = vmatpush1.bf16.msra.mxu0 0
    %4659 = vmatprep.mubr.bf16.mxu0 0
    %4660 = vmatmul.mubr.bf16.gmra.mrb[0].mxu0 %v4584
    %v4661 = vpop.f32.mrb[0].mxu0
    %v4662 = vpop.f32.mrb[0].mxu0
    %v4663 = vpop.f32.mrb[0].mxu0
    %v4664 = vadd.f32 0.0, %v4663
    %v4665 = vpop.f32.mrb[0].mxu0
    %v4666 = vadd.f32 0.0, %v4665
    %4667 = vdwg.mxu0
    %v4668 = vld [vmem:[%s2553] sm:$0xff]
    %v4669 = vld [vmem:[%s2553 + $0x8] sm:$0xff]
    %v4670 = vadd.f32 %v4668, %v4621
    %v4671 = vadd.f32 %v4669, %v4623
    %v4672 = vld [vmem:[%s2548 + $0x10] sm:$0xff]
    %v4673 = vld [vmem:[%s2548 + $0x18] sm:$0xff]
    %v4674 = vadd.f32 %v4672, %v4664
    %v4675 = vadd.f32 %v4673, %v4666
    %v4676 = vxor.u32 %v4670, 2147483648
    %v4677 = vxor.u32 %v4671, 2147483648
    %v4678 = vxor.u32 %v4674, 2147483648
    %v4679 = vxor.u32 %v4675, 2147483648
    %v4680 = vmul.f32 %v4676, 1.442695
    %v4681 = vpow.pop %v4680
    %v4682 = vmul.f32 %v4677, 1.442695
    %v4683 = vpow.pop %v4682
    %v4684 = vmul.f32 %v4678, 1.442695
    %v4685 = vpow.pop %v4684
    %v4686 = vmul.f32 %v4679, 1.442695
    %v4687 = vpow.pop %v4686
    %v4688 = vadd.f32 %v4681, 1.0
    %v4689 = vadd.f32 %v4683, 1.0
    %v4690 = vadd.f32 %v4685, 1.0
    %v4691 = vadd.f32 %v4687, 1.0
    %v4692 = vrcp.pop %v4688
    %v4693 = vmul.f32 1.0, %v4692
    %v4694 = vrcp.pop %v4689
    %v4695 = vmul.f32 1.0, %v4694
    %v4696 = vrcp.pop %v4690
    %v4697 = vmul.f32 1.0, %v4696
    %v4698 = vrcp.pop %v4691
    %v4699 = vmul.f32 1.0, %v4698
    %v4700 = vtanh.pop %v4671
    %v4701 = vtanh.pop %v4675
    %v4702 = vmul.f32 %v4693, %v4566
    %v4703 = vmul.f32 %v4697, %v4567
    %4706 = vrot.lane.b32.xlu0 %v4700, 64
    %v4707 = vpop.permute.xlu0 %4706
    %4708 = vrot.lane.b32.xlu0 %v4701, 64
    %v4709 = vpop.permute.xlu0 %4708
    %v4712 = vmul.f32 %v4693, %v4707
    %v4713 = vmul.f32 %v4697, %v4709
    %4716 = vrot.lane.b32.xlu0 %v4712, 64
    %v4717 = vpop.permute.xlu0 %4716
    %4718 = vrot.lane.b32.xlu0 %v4713, 64
    %v4719 = vpop.permute.xlu0 %4718
    %v4722 = vadd.f32 %v4702, %v4717
    %v4723 = vadd.f32 %v4703, %v4719
    %v4724 = vtanh.pop %v4722
    %v4725 = vtanh.pop %v4723
    %4728 = vrot.lane.b32.xlu0 %v4724, 64
    %v4729 = vpop.permute.xlu0 %4728
    %4730 = vrot.lane.b32.xlu0 %v4725, 64
    %v4731 = vpop.permute.xlu0 %4730
    %v4734 = vmul.f32 %v4695, %v4729
    %v4735 = vmul.f32 %v4699, %v4731
    %v4736 = vadd.f32 %v4580, %v4734
    %v4737 = vadd.f32 %v4581, %v4735
    %v4738 = vpack.c.bf16 %v4735, %v4734
    %v4740 = vsel %vm1984, %v4738, 0
    %4742 = vmatprep.subr.bf16.mxu0 %v3931
    %4743 = vmatpush1.bf16.msra.mxu0 %v3930
    %4744 = vmatprep.subr.bf16.mxu0 %v3935
    %4745 = vmatpush1.bf16.msra.mxu0 %v3934
    %4746 = vmatprep.subr.bf16.mxu0 %v3939
    %4747 = vmatpush1.bf16.msra.mxu0 %v3938
    %4748 = vmatprep.subr.bf16.mxu0 %v3943
    %4749 = vmatpush1.bf16.msra.mxu0 %v3942
    %4750 = vmatprep.subr.bf16.mxu0 0
    %4751 = vmatpush1.bf16.msra.mxu0 0
    %4752 = vmatprep.subr.bf16.mxu0 0
    %4753 = vmatpush1.bf16.msra.mxu0 0
    %4754 = vmatprep.subr.bf16.mxu0 0
    %4755 = vmatpush1.bf16.msra.mxu0 0
    %4756 = vmatprep.subr.bf16.mxu0 0
    %4757 = vmatpush1.bf16.msra.mxu0 0
    %4758 = vmatprep.subr.bf16.mxu0 0
    %4759 = vmatpush1.bf16.msra.mxu0 0
    %4760 = vmatprep.subr.bf16.mxu0 0
    %4761 = vmatpush1.bf16.msra.mxu0 0
    %4762 = vmatprep.subr.bf16.mxu0 0
    %4763 = vmatpush1.bf16.msra.mxu0 0
    %4764 = vmatprep.subr.bf16.mxu0 0
    %4765 = vmatpush1.bf16.msra.mxu0 0
    %4766 = vmatprep.subr.bf16.mxu0 0
    %4767 = vmatpush1.bf16.msra.mxu0 0
    %4768 = vmatprep.subr.bf16.mxu0 0
    %4769 = vmatpush1.bf16.msra.mxu0 0
    %4770 = vmatprep.subr.bf16.mxu0 0
    %4771 = vmatpush1.bf16.msra.mxu0 0
    %4772 = vmatprep.subr.bf16.mxu0 0
    %4773 = vmatpush1.bf16.msra.mxu0 0
    %4774 = vmatprep.mubr.bf16.mxu0 0
    %4775 = vmatmul.mubr.bf16.gmra.mrb[0].mxu0 %v4740
    %v4776 = vpop.f32.mrb[0].mxu0
    %v4777 = vadd.f32 0.0, %v4776
    %v4778 = vpop.f32.mrb[0].mxu0
    %v4779 = vadd.f32 0.0, %v4778
    %v4780 = vpop.f32.mrb[0].mxu0
    %v4781 = vpop.f32.mrb[0].mxu0
    %4782 = vdwg.mxu0
    %4783 = vmatprep.subr.bf16.mxu0 %v3933
    %4784 = vmatpush1.bf16.msra.mxu0 %v3932
    %4785 = vmatprep.subr.bf16.mxu0 %v3937
    %4786 = vmatpush1.bf16.msra.mxu0 %v3936
    %4787 = vmatprep.subr.bf16.mxu0 %v3941
    %4788 = vmatpush1.bf16.msra.mxu0 %v3940
    %4789 = vmatprep.subr.bf16.mxu0 %v3945
    %4790 = vmatpush1.bf16.msra.mxu0 %v3944
    %4791 = vmatprep.subr.bf16.mxu0 0
    %4792 = vmatpush1.bf16.msra.mxu0 0
    %4793 = vmatprep.subr.bf16.mxu0 0
    %4794 = vmatpush1.bf16.msra.mxu0 0
    %4795 = vmatprep.subr.bf16.mxu0 0
    %4796 = vmatpush1.bf16.msra.mxu0 0
    %4797 = vmatprep.subr.bf16.mxu0 0
    %4798 = vmatpush1.bf16.msra.mxu0 0
    %4799 = vmatprep.subr.bf16.mxu0 0
    %4800 = vmatpush1.bf16.msra.mxu0 0
    %4801 = vmatprep.subr.bf16.mxu0 0
    %4802 = vmatpush1.bf16.msra.mxu0 0
    %4803 = vmatprep.subr.bf16.mxu0 0
    %4804 = vmatpush1.bf16.msra.mxu0 0
    %4805 = vmatprep.subr.bf16.mxu0 0
    %4806 = vmatpush1.bf16.msra.mxu0 0
    %4807 = vmatprep.subr.bf16.mxu0 0
    %4808 = vmatpush1.bf16.msra.mxu0 0
    %4809 = vmatprep.subr.bf16.mxu0 0
    %4810 = vmatpush1.bf16.msra.mxu0 0
    %4811 = vmatprep.subr.bf16.mxu0 0
    %4812 = vmatpush1.bf16.msra.mxu0 0
    %4813 = vmatprep.subr.bf16.mxu0 0
    %4814 = vmatpush1.bf16.msra.mxu0 0
    %4815 = vmatprep.mubr.bf16.mxu0 0
    %4816 = vmatmul.mubr.bf16.gmra.mrb[0].mxu0 %v4740
    %v4817 = vpop.f32.mrb[0].mxu0
    %v4818 = vpop.f32.mrb[0].mxu0
    %v4819 = vpop.f32.mrb[0].mxu0
    %v4820 = vadd.f32 0.0, %v4819
    %v4821 = vpop.f32.mrb[0].mxu0
    %v4822 = vadd.f32 0.0, %v4821
    %4823 = vdwg.mxu0
    %v4824 = vld [vmem:[%s2393] sm:$0xff]
    %v4825 = vld [vmem:[%s2393 + $0x8] sm:$0xff]
    %v4826 = vadd.f32 %v4824, %v4777
    %v4827 = vadd.f32 %v4825, %v4779
    %v4828 = vld [vmem:[%s2388 + $0x10] sm:$0xff]
    %v4829 = vld [vmem:[%s2388 + $0x18] sm:$0xff]
    %v4830 = vadd.f32 %v4828, %v4820
    %v4831 = vadd.f32 %v4829, %v4822
    %v4832 = vxor.u32 %v4826, 2147483648
    %v4833 = vxor.u32 %v4827, 2147483648
    %v4834 = vxor.u32 %v4830, 2147483648
    %v4835 = vxor.u32 %v4831, 2147483648
    %v4836 = vmul.f32 %v4832, 1.442695
    %v4837 = vpow.pop %v4836
    %v4838 = vmul.f32 %v4833, 1.442695
    %v4839 = vpow.pop %v4838
    %v4840 = vmul.f32 %v4834, 1.442695
    %v4841 = vpow.pop %v4840
    %v4842 = vmul.f32 %v4835, 1.442695
    %v4843 = vpow.pop %v4842
    %v4844 = vadd.f32 %v4837, 1.0
    %v4845 = vadd.f32 %v4839, 1.0
    %v4846 = vadd.f32 %v4841, 1.0
    %v4847 = vadd.f32 %v4843, 1.0
    %v4848 = vrcp.pop %v4844
    %v4849 = vmul.f32 1.0, %v4848
    %v4850 = vrcp.pop %v4845
    %v4851 = vmul.f32 1.0, %v4850
    %v4852 = vrcp.pop %v4846
    %v4853 = vmul.f32 1.0, %v4852
    %v4854 = vrcp.pop %v4847
    %v4855 = vmul.f32 1.0, %v4854
    %v4856 = vtanh.pop %v4827
    %v4857 = vtanh.pop %v4831
    %v4858 = vmul.f32 %v4849, %v4722
    %v4859 = vmul.f32 %v4853, %v4723
    %4862 = vrot.lane.b32.xlu0 %v4856, 64
    %v4863 = vpop.permute.xlu0 %4862
    %4864 = vrot.lane.b32.xlu0 %v4857, 64
    %v4865 = vpop.permute.xlu0 %4864
    %v4868 = vmul.f32 %v4849, %v4863
    %v4869 = vmul.f32 %v4853, %v4865
    %4872 = vrot.lane.b32.xlu0 %v4868, 64
    %v4873 = vpop.permute.xlu0 %4872
    %4874 = vrot.lane.b32.xlu0 %v4869, 64
    %v4875 = vpop.permute.xlu0 %4874
    %v4878 = vadd.f32 %v4858, %v4873
    %v4879 = vadd.f32 %v4859, %v4875
    %v4880 = vtanh.pop %v4878
    %v4881 = vtanh.pop %v4879
    %4884 = vrot.lane.b32.xlu0 %v4880, 64
    %v4885 = vpop.permute.xlu0 %4884
    %4886 = vrot.lane.b32.xlu0 %v4881, 64
    %v4887 = vpop.permute.xlu0 %4886
    %v4890 = vmul.f32 %v4851, %v4885
    %v4891 = vmul.f32 %v4855, %v4887
    %v4892 = vadd.f32 %v4736, %v4890
    %v4893 = vadd.f32 %v4737, %v4891
    %v4894 = vpack.c.bf16 %v4891, %v4890
    %v4896 = vsel %vm1984, %v4894, 0
    %4898 = vmatprep.subr.bf16.mxu0 %v3931
    %4899 = vmatpush1.bf16.msra.mxu0 %v3930
    %4900 = vmatprep.subr.bf16.mxu0 %v3935
    %4901 = vmatpush1.bf16.msra.mxu0 %v3934
    %4902 = vmatprep.subr.bf16.mxu0 %v3939
    %4903 = vmatpush1.bf16.msra.mxu0 %v3938
    %4904 = vmatprep.subr.bf16.mxu0 %v3943
    %4905 = vmatpush1.bf16.msra.mxu0 %v3942
    %4906 = vmatprep.subr.bf16.mxu0 0
    %4907 = vmatpush1.bf16.msra.mxu0 0
    %4908 = vmatprep.subr.bf16.mxu0 0
    %4909 = vmatpush1.bf16.msra.mxu0 0
    %4910 = vmatprep.subr.bf16.mxu0 0
    %4911 = vmatpush1.bf16.msra.mxu0 0
    %4912 = vmatprep.subr.bf16.mxu0 0
    %4913 = vmatpush1.bf16.msra.mxu0 0
    %4914 = vmatprep.subr.bf16.mxu0 0
    %4915 = vmatpush1.bf16.msra.mxu0 0
    %4916 = vmatprep.subr.bf16.mxu0 0
    %4917 = vmatpush1.bf16.msra.mxu0 0
    %4918 = vmatprep.subr.bf16.mxu0 0
    %4919 = vmatpush1.bf16.msra.mxu0 0
    %4920 = vmatprep.subr.bf16.mxu0 0
    %4921 = vmatpush1.bf16.msra.mxu0 0
    %4922 = vmatprep.subr.bf16.mxu0 0
    %4923 = vmatpush1.bf16.msra.mxu0 0
    %4924 = vmatprep.subr.bf16.mxu0 0
    %4925 = vmatpush1.bf16.msra.mxu0 0
    %4926 = vmatprep.subr.bf16.mxu0 0
    %4927 = vmatpush1.bf16.msra.mxu0 0
    %4928 = vmatprep.subr.bf16.mxu0 0
    %4929 = vmatpush1.bf16.msra.mxu0 0
    %4930 = vmatprep.mubr.bf16.mxu0 0
    %4931 = vmatmul.mubr.bf16.gmra.mrb[0].mxu0 %v4896
    %v4932 = vpop.f32.mrb[0].mxu0
    %v4933 = vadd.f32 0.0, %v4932
    %v4934 = vpop.f32.mrb[0].mxu0
    %v4935 = vadd.f32 0.0, %v4934
    %v4936 = vpop.f32.mrb[0].mxu0
    %v4937 = vpop.f32.mrb[0].mxu0
    %4938 = vdwg.mxu0
    %4939 = vmatprep.subr.bf16.mxu0 %v3933
    %4940 = vmatpush1.bf16.msra.mxu0 %v3932
    %4941 = vmatprep.subr.bf16.mxu0 %v3937
    %4942 = vmatpush1.bf16.msra.mxu0 %v3936
    %4943 = vmatprep.subr.bf16.mxu0 %v3941
    %4944 = vmatpush1.bf16.msra.mxu0 %v3940
    %4945 = vmatprep.subr.bf16.mxu0 %v3945
    %4946 = vmatpush1.bf16.msra.mxu0 %v3944
    %4947 = vmatprep.subr.bf16.mxu0 0
    %4948 = vmatpush1.bf16.msra.mxu0 0
    %4949 = vmatprep.subr.bf16.mxu0 0
    %4950 = vmatpush1.bf16.msra.mxu0 0
    %4951 = vmatprep.subr.bf16.mxu0 0
    %4952 = vmatpush1.bf16.msra.mxu0 0
    %4953 = vmatprep.subr.bf16.mxu0 0
    %4954 = vmatpush1.bf16.msra.mxu0 0
    %4955 = vmatprep.subr.bf16.mxu0 0
    %4956 = vmatpush1.bf16.msra.mxu0 0
    %4957 = vmatprep.subr.bf16.mxu0 0
    %4958 = vmatpush1.bf16.msra.mxu0 0
    %4959 = vmatprep.subr.bf16.mxu0 0
    %4960 = vmatpush1.bf16.msra.mxu0 0
    %4961 = vmatprep.subr.bf16.mxu0 0
    %4962 = vmatpush1.bf16.msra.mxu0 0
    %4963 = vmatprep.subr.bf16.mxu0 0
    %4964 = vmatpush1.bf16.msra.mxu0 0
    %4965 = vmatprep.subr.bf16.mxu0 0
    %4966 = vmatpush1.bf16.msra.mxu0 0
    %4967 = vmatprep.subr.bf16.mxu0 0
    %4968 = vmatpush1.bf16.msra.mxu0 0
    %4969 = vmatprep.subr.bf16.mxu0 0
    %4970 = vmatpush1.bf16.msra.mxu0 0
    %4971 = vmatprep.mubr.bf16.mxu0 0
    %4972 = vmatmul.mubr.bf16.gmra.mrb[0].mxu0 %v4896
    %v4973 = vpop.f32.mrb[0].mxu0
    %v4974 = vpop.f32.mrb[0].mxu0
    %v4975 = vpop.f32.mrb[0].mxu0
    %v4976 = vadd.f32 0.0, %v4975
    %v4977 = vpop.f32.mrb[0].mxu0
    %v4978 = vadd.f32 0.0, %v4977
    %4979 = vdwg.mxu0
    %v4980 = vld [vmem:[%s2233] sm:$0xff]
    %v4981 = vld [vmem:[%s2233 + $0x8] sm:$0xff]
    %v4982 = vadd.f32 %v4980, %v4933
    %v4983 = vadd.f32 %v4981, %v4935
    %v4984 = vld [vmem:[%s2228 + $0x10] sm:$0xff]
    %v4985 = vld [vmem:[%s2228 + $0x18] sm:$0xff]
    %v4986 = vadd.f32 %v4984, %v4976
    %v4987 = vadd.f32 %v4985, %v4978
    %v4988 = vxor.u32 %v4982, 2147483648
    %v4989 = vxor.u32 %v4983, 2147483648
    %v4990 = vxor.u32 %v4986, 2147483648
    %v4991 = vxor.u32 %v4987, 2147483648
    %v4992 = vmul.f32 %v4988, 1.442695
    %v4993 = vpow.pop %v4992
    %v4994 = vmul.f32 %v4989, 1.442695
    %v4995 = vpow.pop %v4994
    %v4996 = vmul.f32 %v4990, 1.442695
    %v4997 = vpow.pop %v4996
    %v4998 = vmul.f32 %v4991, 1.442695
    %v4999 = vpow.pop %v4998
    %v5000 = vadd.f32 %v4993, 1.0
    %v5001 = vadd.f32 %v4995, 1.0
    %v5002 = vadd.f32 %v4997, 1.0
    %v5003 = vadd.f32 %v4999, 1.0
    %v5004 = vrcp.pop %v5000
    %v5005 = vmul.f32 1.0, %v5004
    %v5006 = vrcp.pop %v5001
    %v5007 = vmul.f32 1.0, %v5006
    %v5008 = vrcp.pop %v5002
    %v5009 = vmul.f32 1.0, %v5008
    %v5010 = vrcp.pop %v5003
    %v5011 = vmul.f32 1.0, %v5010
    %v5012 = vtanh.pop %v4983
    %v5013 = vtanh.pop %v4987
    %v5014 = vmul.f32 %v5005, %v4878
    %v5015 = vmul.f32 %v5009, %v4879
    %5018 = vrot.lane.b32.xlu0 %v5012, 64
    %v5019 = vpop.permute.xlu0 %5018
    %5020 = vrot.lane.b32.xlu0 %v5013, 64
    %v5021 = vpop.permute.xlu0 %5020
    %v5024 = vmul.f32 %v5005, %v5019
    %v5025 = vmul.f32 %v5009, %v5021
    %5028 = vrot.lane.b32.xlu0 %v5024, 64
    %v5029 = vpop.permute.xlu0 %5028
    %5030 = vrot.lane.b32.xlu0 %v5025, 64
    %v5031 = vpop.permute.xlu0 %5030
    %v5034 = vadd.f32 %v5014, %v5029
    %v5035 = vadd.f32 %v5015, %v5031
    %v5036 = vtanh.pop %v5034
    %v5037 = vtanh.pop %v5035
    %5040 = vrot.lane.b32.xlu0 %v5036, 64
    %v5041 = vpop.permute.xlu0 %5040
    %5042 = vrot.lane.b32.xlu0 %v5037, 64
    %v5043 = vpop.permute.xlu0 %5042
    %v5046 = vmul.f32 %v5007, %v5041
    %v5047 = vmul.f32 %v5011, %v5043
    %v5048 = vadd.f32 %v4892, %v5046
    %v5049 = vadd.f32 %v4893, %v5047
    %v5050 = vpack.c.bf16 %v5047, %v5046
    %v5052 = vsel %vm1984, %v5050, 0
    %5054 = vmatprep.subr.bf16.mxu0 %v3931
    %5055 = vmatpush1.bf16.msra.mxu0 %v3930
    %5056 = vmatprep.subr.bf16.mxu0 %v3935
    %5057 = vmatpush1.bf16.msra.mxu0 %v3934
    %5058 = vmatprep.subr.bf16.mxu0 %v3939
    %5059 = vmatpush1.bf16.msra.mxu0 %v3938
    %5060 = vmatprep.subr.bf16.mxu0 %v3943
    %5061 = vmatpush1.bf16.msra.mxu0 %v3942
    %5062 = vmatprep.subr.bf16.mxu0 0
    %5063 = vmatpush1.bf16.msra.mxu0 0
    %5064 = vmatprep.subr.bf16.mxu0 0
    %5065 = vmatpush1.bf16.msra.mxu0 0
    %5066 = vmatprep.subr.bf16.mxu0 0
    %5067 = vmatpush1.bf16.msra.mxu0 0
    %5068 = vmatprep.subr.bf16.mxu0 0
    %5069 = vmatpush1.bf16.msra.mxu0 0
    %5070 = vmatprep.subr.bf16.mxu0 0
    %5071 = vmatpush1.bf16.msra.mxu0 0
    %5072 = vmatprep.subr.bf16.mxu0 0
    %5073 = vmatpush1.bf16.msra.mxu0 0
    %5074 = vmatprep.subr.bf16.mxu0 0
    %5075 = vmatpush1.bf16.msra.mxu0 0
    %5076 = vmatprep.subr.bf16.mxu0 0
    %5077 = vmatpush1.bf16.msra.mxu0 0
    %5078 = vmatprep.subr.bf16.mxu0 0
    %5079 = vmatpush1.bf16.msra.mxu0 0
    %5080 = vmatprep.subr.bf16.mxu0 0
    %5081 = vmatpush1.bf16.msra.mxu0 0
    %5082 = vmatprep.subr.bf16.mxu0 0
    %5083 = vmatpush1.bf16.msra.mxu0 0
    %5084 = vmatprep.subr.bf16.mxu0 0
    %5085 = vmatpush1.bf16.msra.mxu0 0
    %5086 = vmatprep.mubr.bf16.mxu0 0
    %5087 = vmatmul.mubr.bf16.gmra.mrb[0].mxu0 %v5052
    %v5088 = vpop.f32.mrb[0].mxu0
    %v5089 = vadd.f32 0.0, %v5088
    %v5090 = vpop.f32.mrb[0].mxu0
    %v5091 = vadd.f32 0.0, %v5090
    %v5092 = vpop.f32.mrb[0].mxu0
    %v5093 = vpop.f32.mrb[0].mxu0
    %5094 = vdwg.mxu0
    %5095 = vmatprep.subr.bf16.mxu0 %v3933
    %5096 = vmatpush1.bf16.msra.mxu0 %v3932
    %5097 = vmatprep.subr.bf16.mxu0 %v3937
    %5098 = vmatpush1.bf16.msra.mxu0 %v3936
    %5099 = vmatprep.subr.bf16.mxu0 %v3941
    %5100 = vmatpush1.bf16.msra.mxu0 %v3940
    %5101 = vmatprep.subr.bf16.mxu0 %v3945
    %5102 = vmatpush1.bf16.msra.mxu0 %v3944
    %5103 = vmatprep.subr.bf16.mxu0 0
    %5104 = vmatpush1.bf16.msra.mxu0 0
    %5105 = vmatprep.subr.bf16.mxu0 0
    %5106 = vmatpush1.bf16.msra.mxu0 0
    %5107 = vmatprep.subr.bf16.mxu0 0
    %5108 = vmatpush1.bf16.msra.mxu0 0
    %5109 = vmatprep.subr.bf16.mxu0 0
    %5110 = vmatpush1.bf16.msra.mxu0 0
    %5111 = vmatprep.subr.bf16.mxu0 0
    %5112 = vmatpush1.bf16.msra.mxu0 0
    %5113 = vmatprep.subr.bf16.mxu0 0
    %5114 = vmatpush1.bf16.msra.mxu0 0
    %5115 = vmatprep.subr.bf16.mxu0 0
    %5116 = vmatpush1.bf16.msra.mxu0 0
    %5117 = vmatprep.subr.bf16.mxu0 0
    %5118 = vmatpush1.bf16.msra.mxu0 0
    %5119 = vmatprep.subr.bf16.mxu0 0
    %5120 = vmatpush1.bf16.msra.mxu0 0
    %5121 = vmatprep.subr.bf16.mxu0 0
    %5122 = vmatpush1.bf16.msra.mxu0 0
    %5123 = vmatprep.subr.bf16.mxu0 0
    %5124 = vmatpush1.bf16.msra.mxu0 0
    %5125 = vmatprep.subr.bf16.mxu0 0
    %5126 = vmatpush1.bf16.msra.mxu0 0
    %5127 = vmatprep.mubr.bf16.mxu0 0
    %5128 = vmatmul.mubr.bf16.gmra.mrb[0].mxu0 %v5052
    %v5129 = vpop.f32.mrb[0].mxu0
    %v5130 = vpop.f32.mrb[0].mxu0
    %v5131 = vpop.f32.mrb[0].mxu0
    %v5132 = vadd.f32 0.0, %v5131
    %v5133 = vpop.f32.mrb[0].mxu0
    %v5134 = vadd.f32 0.0, %v5133
    %5135 = vdwg.mxu0
    %v5136 = vld [vmem:[%s2074] sm:$0xff]
    %v5137 = vld [vmem:[%s2074 + $0x8] sm:$0xff]
    %v5138 = vadd.f32 %v5136, %v5089
    %v5139 = vadd.f32 %v5137, %v5091
    %v5140 = vld [vmem:[#allocation2 + $0x10] sm:$0xff]
    %v5141 = vld [vmem:[#allocation2 + $0x18] sm:$0xff]
    %v5142 = vadd.f32 %v5140, %v5132
    %v5143 = vadd.f32 %v5141, %v5134
    %v5144 = vxor.u32 %v5138, 2147483648
    %v5145 = vxor.u32 %v5139, 2147483648
    %v5146 = vxor.u32 %v5142, 2147483648
    %v5147 = vxor.u32 %v5143, 2147483648
    %v5148 = vmul.f32 %v5144, 1.442695
    %v5149 = vpow.pop %v5148
    %v5150 = vmul.f32 %v5145, 1.442695
    %v5151 = vpow.pop %v5150
    %v5152 = vmul.f32 %v5146, 1.442695
    %v5153 = vpow.pop %v5152
    %v5154 = vmul.f32 %v5147, 1.442695
    %v5155 = vpow.pop %v5154
    %v5156 = vadd.f32 %v5149, 1.0
    %v5157 = vadd.f32 %v5151, 1.0
    %v5158 = vadd.f32 %v5153, 1.0
    %v5159 = vadd.f32 %v5155, 1.0
    %v5160 = vrcp.pop %v5156
    %v5161 = vmul.f32 1.0, %v5160
    %v5162 = vrcp.pop %v5157
    %v5163 = vmul.f32 1.0, %v5162
    %v5164 = vrcp.pop %v5158
    %v5165 = vmul.f32 1.0, %v5164
    %v5166 = vrcp.pop %v5159
    %v5167 = vmul.f32 1.0, %v5166
    %v5168 = vtanh.pop %v5139
    %v5169 = vtanh.pop %v5143
    %v5170 = vmul.f32 %v5161, %v5034
    %v5171 = vmul.f32 %v5165, %v5035
    %5174 = vrot.lane.b32.xlu0 %v5168, 64
    %v5175 = vpop.permute.xlu0 %5174
    %5176 = vrot.lane.b32.xlu0 %v5169, 64
    %v5177 = vpop.permute.xlu0 %5176
    %v5180 = vmul.f32 %v5161, %v5175
    %v5181 = vmul.f32 %v5165, %v5177
    %5184 = vrot.lane.b32.xlu0 %v5180, 64
    %v5185 = vpop.permute.xlu0 %5184
    %5186 = vrot.lane.b32.xlu0 %v5181, 64
    %v5187 = vpop.permute.xlu0 %5186
    %v5190 = vadd.f32 %v5170, %v5185
    %v5191 = vadd.f32 %v5171, %v5187
    %v5192 = vtanh.pop %v5190
    %v5193 = vtanh.pop %v5191
    %5196 = vrot.lane.b32.xlu0 %v5192, 64
    %v5197 = vpop.permute.xlu0 %5196
    %5198 = vrot.lane.b32.xlu0 %v5193, 64
    %v5199 = vpop.permute.xlu0 %5198
    %v5202 = vmul.f32 %v5163, %v5197
    %v5203 = vmul.f32 %v5167, %v5199
    %v5204 = vadd.f32 %v5048, %v5202
    %v5205 = vadd.f32 %v5049, %v5203
    %5207 = vrot.lane.b32.xlu0 %v5205, 64
    %v5208 = vpop.permute.xlu0 %5207
    %v5210 = vsel %vm1984, %v5204, %v5208
    %v5211 = vmul.f32 %v5210, 0.125
    %5212 = vadd.xlane.f32.xlu0 %v5211
    %v5213 = vpop.xlane.xlu0 %5212
    %v5214 = vrcp.pop 128.0
    %v5215 = vmul.f32 %v5213, %v5214
    %v5216 = vsub.f32 %v5211, %v5215
    %v5217 = vmul.f32 %v5216, %v5216
    %5218 = vadd.xlane.f32.xlu0 %v5217
    %v5219 = vpop.xlane.xlu0 %5218
    %v5220 = vmul.f32 %v5219, %v5214
    %v5221 = vadd.f32 %v5220, 1e-05
    %v5222 = vrsqrt.pop %v5221
    %v5223 = vmul.f32 %v5216, %v5222
    %v5224 = vld [vmem:[%s7] sm:$0x1]
    %v5226 = vlaneseq
    %v5227 = vshrl.u32 %v5226, 7
    %v5228 = vsub.s32 0, %v5227
    %v5229 = vrot.slane %v5224, %v5228
    %v5231 = vmul.f32 %v5223, %v5229
    %v5232 = vld [vmem:[%s8] sm:$0x1]
    %v5234 = vlaneseq
    %v5235 = vshrl.u32 %v5234, 7
    %v5236 = vsub.s32 0, %v5235
    %v5237 = vrot.slane %v5232, %v5236
    %v5239 = vadd.f32 %v5231, %v5237
    %v5240 = vld [vmem:[%s9] sm:$0xff]
    %v5241 = vld [vmem:[%s9 + $0x8] sm:$0xff]
    %v5242 = vld [vmem:[%s9 + $0x10] sm:$0xff]
    %v5243 = vld [vmem:[%s9 + $0x18] sm:$0xff]
    %v5244 = vld [vmem:[%s9 + $0x20] sm:$0xff]
    %v5245 = vld [vmem:[%s9 + $0x28] sm:$0xff]
    %v5246 = vld [vmem:[%s9 + $0x30] sm:$0xff]
    %v5247 = vld [vmem:[%s9 + $0x38] sm:$0xff]
    %v5248 = vld [vmem:[%s9 + $0x40] sm:$0xff]
    %v5249 = vld [vmem:[%s9 + $0x48] sm:$0xff]
    %v5250 = vld [vmem:[%s9 + $0x50] sm:$0xff]
    %v5251 = vld [vmem:[%s9 + $0x58] sm:$0xff]
    %v5252 = vld [vmem:[%s9 + $0x60] sm:$0xff]
    %v5253 = vld [vmem:[%s9 + $0x68] sm:$0xff]
    %v5254 = vld [vmem:[%s9 + $0x70] sm:$0xff]
    %v5255 = vld [vmem:[%s9 + $0x78] sm:$0xff]
    %v5256 = vld [vmem:[%s10] sm:$0x1]
    %v5258 = vlaneseq
    %v5259 = vshrl.u32 %v5258, 7
    %v5260 = vsub.s32 0, %v5259
    %v5261 = vrot.slane %v5256, %v5260
    %5263 = vmatprep.subr.mxu0 0.0
    %5264 = vmatpush1.msra.mxu0 %v5240
    %5265 = vmatprep.subr.mxu0 0.0
    %5266 = vmatpush1.msra.mxu0 %v5241
    %5267 = vmatprep.subr.mxu0 0.0
    %5268 = vmatpush1.msra.mxu0 %v5242
    %5269 = vmatprep.subr.mxu0 0.0
    %5270 = vmatpush1.msra.mxu0 %v5243
    %5271 = vmatprep.subr.mxu0 0.0
    %5272 = vmatpush1.msra.mxu0 %v5244
    %5273 = vmatprep.subr.mxu0 0.0
    %5274 = vmatpush1.msra.mxu0 %v5245
    %5275 = vmatprep.subr.mxu0 0.0
    %5276 = vmatpush1.msra.mxu0 %v5246
    %5277 = vmatprep.subr.mxu0 0.0
    %5278 = vmatpush1.msra.mxu0 %v5247
    %5279 = vmatprep.subr.mxu0 0.0
    %5280 = vmatpush1.msra.mxu0 %v5248
    %5281 = vmatprep.subr.mxu0 0.0
    %5282 = vmatpush1.msra.mxu0 %v5249
    %5283 = vmatprep.subr.mxu0 0.0
    %5284 = vmatpush1.msra.mxu0 %v5250
    %5285 = vmatprep.subr.mxu0 0.0
    %5286 = vmatpush1.msra.mxu0 %v5251
    %5287 = vmatprep.subr.mxu0 0.0
    %5288 = vmatpush1.msra.mxu0 %v5252
    %5289 = vmatprep.subr.mxu0 0.0
    %5290 = vmatpush1.msra.mxu0 %v5253
    %5291 = vmatprep.subr.mxu0 0.0
    %5292 = vmatpush1.msra.mxu0 %v5254
    %5293 = vmatprep.subr.mxu0 0.0
    %5294 = vmatpush1.msra.mxu0 %v5255
    %5295 = vmatprep.subr.mxu0 0.0
    %5296 = vmatpush1.msra.mxu0 0.0
    %5297 = vmatprep.subr.mxu0 0.0
    %5298 = vmatpush1.msra.mxu0 0.0
    %5299 = vmatprep.subr.mxu0 0.0
    %5300 = vmatpush1.msra.mxu0 0.0
    %5301 = vmatprep.subr.mxu0 0.0
    %5302 = vmatpush1.msra.mxu0 0.0
    %5303 = vmatprep.subr.mxu0 0.0
    %5304 = vmatpush1.msra.mxu0 0.0
    %5305 = vmatprep.subr.mxu0 0.0
    %5306 = vmatpush1.msra.mxu0 0.0
    %5307 = vmatprep.subr.mxu0 0.0
    %5308 = vmatpush1.msra.mxu0 0.0
    %5309 = vmatprep.subr.mxu0 0.0
    %5310 = vmatpush1.msra.mxu0 0.0
    %5311 = vmatprep.subr.mxu0 0.0
    %5312 = vmatpush1.msra.mxu0 0.0
    %5313 = vmatprep.subr.mxu0 0.0
    %5314 = vmatpush1.msra.mxu0 0.0
    %5315 = vmatprep.subr.mxu0 0.0
    %5316 = vmatpush1.msra.mxu0 0.0
    %5317 = vmatprep.subr.mxu0 0.0
    %5318 = vmatpush1.msra.mxu0 0.0
    %5319 = vmatprep.subr.mxu0 0.0
    %5320 = vmatpush1.msra.mxu0 0.0
    %5321 = vmatprep.subr.mxu0 0.0
    %5322 = vmatpush1.msra.mxu0 0.0
    %5323 = vmatprep.subr.mxu0 0.0
    %5324 = vmatpush1.msra.mxu0 0.0
    %5325 = vmatprep.subr.mxu0 0.0
    %5326 = vmatpush1.msra.mxu0 0.0
    %5327 = vmatprep.mubr.f32.mxu0 0.0
    %5328 = vmatmul.mubr.f32.gmra.mrb[0].mxu0 %v5239
    %v5329 = vpop.f32.mrb[0].mxu0
    %v5330 = vadd.f32 %v5261, %v5329
    %v5331 = vpop.f32.mrb[0].mxu0
    %5332 = vdwg.mxu0
    %vm5333 = vcmask 15360
    %5334 = vst.msk [vmem:[%s11] sm:$0xff] %vm5333, %v5330
    // Predicated region
    $region62: #{tpu_custom_call.1} parent=1 // pred_check
      _
    $region63: #{tpu_custom_call.1} parent=1 // pred_check_branch
      %5336 = sbr.rel (0) target = $region65
    $region64: #{tpu_custom_call.1} parent=1 // pred_region
      _
    $region65: #{tpu_custom_call.1} parent=1 // pred_fallthru
      _
    // Predicated region
    $region66: #{tpu_custom_call.1} parent=1 // pred_check
      _
    $region67: #{tpu_custom_call.1} parent=1 // pred_check_branch
      %5338 = sbr.rel (0) target = $region69
    $region68: #{tpu_custom_call.1} parent=1 // pred_region
      _
    $region69: #{tpu_custom_call.1} parent=1 // pred_fallthru
      _
    %5339 = vsyncpa [#allocation5], 1
    %5340 = vsyncpa [#allocation7], 1
    %5341 = vsyncpa [#allocation10], 1

</llo_original>
